<compile_context>
chip_gen: v7x
topology: tpu7x:2x2x1
jax: 0.10.0
libtpu: 0.0.40
codegen_flags: <defaults>
</compile_context>

<pallas_src>
import functools

import jax
import jax.numpy as jnp
from jax.experimental import pallas as pl
from jax.experimental.pallas import tpu as pltpu


# ------------------------------ Pallas kernel ------------------------------ #

def _layer_norm(x, gamma, beta, eps=1e-5):
    mu = jnp.mean(x, axis=-1, keepdims=True)
    var = jnp.mean((x - mu) ** 2, axis=-1, keepdims=True)
    return (x - mu) * jax.lax.rsqrt(var + eps) * gamma + beta


def encoder_layers_kernel(
    x_ref,                                    # (B*S, D) f32 activations
    wq_ref, wk_ref, wv_ref,                   # (L, D, D) bf16 block-diag W^T (Q pre-scaled)
    wo_ref,                                   # (L, D, D) bf16 fc_out W^T
    w1_ref, w2_ref,                           # (L, D, Dff), (L, Dff, D) bf16
    pd_ref,                                   # (L, 6, D)  f32 rows: bo,g1,be1,g2,be2,bf2
    pf_ref,                                   # (L, 1, Dff) f32 row: bf1
    o_ref,                                    # (B*S, D)
    *, num_layers, heads, head_dim, batch, seq):
    BS, D = x_ref.shape
    B, S = batch, seq
    h = x_ref[...].astype(jnp.float32)        # residual stream, kept in f32

    for l in range(num_layers):               # static unroll: fine at L=2
        # ---- QKV projections on the flattened (B*S, D) activation ----------
        hb = h.astype(jnp.bfloat16)
        q = jnp.dot(hb, wq_ref[l], preferred_element_type=jnp.float32)
        k = jnp.dot(hb, wk_ref[l], preferred_element_type=jnp.float32)
        v = jnp.dot(hb, wv_ref[l], preferred_element_type=jnp.float32)
        q3 = q.reshape(B, S, D).astype(jnp.bfloat16)
        k3 = k.reshape(B, S, D).astype(jnp.bfloat16)
        v3 = v.reshape(B, S, D).astype(jnp.bfloat16)

        # ---- attention: per-head scores/PV, concat heads, ONE fc_out matmul -
        head_outs = []
        for hh in range(heads):               # static loop over heads (4)
            sl = slice(hh * head_dim, (hh + 1) * head_dim)
            qs, ks, vs = q3[:, :, sl], k3[:, :, sl], v3[:, :, sl]   # (B,S,hd)
            # 1/sqrt(patch_size) scale is pre-folded into wq
            e = jnp.einsum('bqd,bkd->bqk', qs, ks,
                           preferred_element_type=jnp.float32)      # (B,S,S)
            e = e - jnp.max(e, axis=-1, keepdims=True)
            p = jnp.exp(e)
            p = p * pl.reciprocal(jnp.sum(p, axis=-1, keepdims=True),
                                  approx=True)
            head_outs.append(
                jnp.einsum('bqk,bkd->bqd', p.astype(jnp.bfloat16), vs,
                           preferred_element_type=jnp.float32))      # (B,S,hd)
        oc = jnp.concatenate(head_outs, axis=-1).reshape(BS, D)      # (BS, D)
        fc = jnp.dot(oc.astype(jnp.bfloat16), wo_ref[l],
                     preferred_element_type=jnp.float32)             # (BS, D)

        # ---- biases / LayerNorm params (packed slabs) -----------------------
        pd_l = pd_ref[l]                      # (6, D)
        bo, g1, be1 = pd_l[0:1, :], pd_l[1:2, :], pd_l[2:3, :]
        g2, be2, bf2 = pd_l[3:4, :], pd_l[4:5, :], pd_l[5:6, :]
        bf1 = pf_ref[l]                       # (1, Dff)

        # residual + LayerNorm 1 (Dropout = identity in eval mode)
        h1 = _layer_norm(fc + bo + h, g1, be1)

        # feed-forward: Linear -> ReLU -> Linear
        ff = jnp.dot(h1.astype(jnp.bfloat16), w1_ref[l],
                     preferred_element_type=jnp.float32) + bf1
        ff = jnp.maximum(ff, 0.0)
        ff = jnp.dot(ff.astype(jnp.bfloat16), w2_ref[l],
                     preferred_element_type=jnp.float32) + bf2

        # residual + LayerNorm 2
        h = _layer_norm(ff + h1, g2, be2)

    o_ref[...] = h.astype(o_ref.dtype)


def encoder_pallas(x_flat, stacked, *, heads, batch, seq):
    """x_flat: (N*S, D) activations after patch embedding + pos embedding."""
    BS, D = x_flat.shape
    L, _, Dff = stacked["w1"].shape
    head_dim = D // heads
    N, S = batch, seq

    def full(shape):
        return pl.BlockSpec(shape, lambda i: (0,) * len(shape))

    kernel = functools.partial(
        encoder_layers_kernel,
        num_layers=L, heads=heads, head_dim=head_dim, batch=N, seq=S)

    # Rough cost estimate so XLA can overlap the surrounding ops / weight fetch.
    matmul_flops = L * (3 * 2 * BS * D * D          # QKV
                        + 2 * 2 * N * heads * S * S * head_dim   # scores + PV
                        + 2 * BS * D * D            # fc_out
                        + 2 * 2 * BS * D * Dff)     # feed-forward
    ew_flops = L * BS * (10 * D + 2 * Dff)          # softmax/LN/bias/ReLU (approx)
    transcend = L * (N * heads * S * S              # exp
                     + N * heads * S                # approx reciprocal
                     + 2 * BS)                      # rsqrt in the two LayerNorms
    bytes_acc = (2 * BS * D * 4                     # activation in + out (f32)
                 + L * (4 * D * D + 2 * D * Dff) * 2    # bf16 weights
                 + L * (6 * D + Dff) * 4)               # packed bias/LN slabs
    cost = pl.CostEstimate(flops=int(matmul_flops + ew_flops),
                           transcendentals=int(transcend),
                           bytes_accessed=int(bytes_acc))

    return pl.pallas_call(
        kernel,
        out_shape=jax.ShapeDtypeStruct((BS, D), x_flat.dtype),
        grid=(1,),                             # single step: whole batch at once
        in_specs=[
            pl.BlockSpec((BS, D), lambda i: (0, 0)),
            full((L, D, D)), full((L, D, D)), full((L, D, D)),
            full((L, D, D)),
            full((L, D, Dff)), full((L, Dff, D)),
            full((L, 6, D)), full((L, 1, Dff)),
        ],
        out_specs=pl.BlockSpec((BS, D), lambda i: (0, 0)),
        compiler_params=pltpu.CompilerParams(dimension_semantics=("arbitrary",)),
        cost_estimate=cost,
    )(x_flat, stacked["wq"], stacked["wk"], stacked["wv"], stacked["wo"],
      stacked["w1"], stacked["w2"], stacked["pd"], stacked["pf"])


# --------------------------- parameters & wrapper --------------------------- #

def init_params(key, *, patch_size, heads, forward_expansion, num_layers, num_block):
    head_dim = patch_size // heads
    Dff = forward_expansion * patch_size
    keys = jax.random.split(key, 1 + 8 * num_layers)
    pos_emb = 0.02 * jax.random.normal(keys[0], (num_block, patch_size), jnp.float32)

    def bdiag(W):  # block-diagonal with H copies of W^T  -> (D, D)
        return jax.scipy.linalg.block_diag(*([W.T] * heads))

    scale = patch_size ** -0.5  # PyTorch divides energy by patch_size**0.5
    bf16 = jnp.bfloat16

    layers = []
    wq_s, wk_s, wv_s, wo_s, w1_s, w2_s, pd_s, pf_s = ([] for _ in range(8))
    for l in range(num_layers):
        k = keys[1 + 8 * l: 1 + 8 * (l + 1)]
        wq = jax.random.normal(k[0], (head_dim, head_dim), jnp.float32) * head_dim ** -0.5
        wk = jax.random.normal(k[1], (head_dim, head_dim), jnp.float32) * head_dim ** -0.5
        wv = jax.random.normal(k[2], (head_dim, head_dim), jnp.float32) * head_dim ** -0.5
        wo = jax.random.normal(k[3], (patch_size, patch_size), jnp.float32) * patch_size ** -0.5
        bo = 0.01 * jax.random.normal(k[4], (patch_size,), jnp.float32)
        w1 = jax.random.normal(k[5], (Dff, patch_size), jnp.float32) * patch_size ** -0.5
        b1 = 0.01 * jax.random.normal(k[6], (Dff,), jnp.float32)
        w2 = jax.random.normal(k[7], (patch_size, Dff), jnp.float32) * Dff ** -0.5
        b2 = jnp.zeros((patch_size,), jnp.float32)
        g1 = jnp.ones((patch_size,), jnp.float32)
        be1 = jnp.zeros((patch_size,), jnp.float32)
        g2 = jnp.ones((patch_size,), jnp.float32)
        be2 = jnp.zeros((patch_size,), jnp.float32)
        # raw (PyTorch-convention) f32 weights for the pure-JAX reference
        layers.append(dict(wq=wq, wk=wk, wv=wv, wo=wo, bo=bo,
                           w1=w1, b1=b1, w2=w2, b2=b2,
                           g1=g1, be1=be1, g2=g2, be2=be2))
        # kernel-form weights: bf16 MXU operands, softmax scale folded into Q
        wq_s.append((bdiag(wq) * scale).astype(bf16))
        wk_s.append(bdiag(wk).astype(bf16))
        wv_s.append(bdiag(wv).astype(bf16))
        wo_s.append(wo.T.astype(bf16))
        w1_s.append(w1.T.astype(bf16))
        w2_s.append(w2.T.astype(bf16))
        pd_s.append(jnp.stack([bo, g1, be1, g2, be2, b2], axis=0))   # (6, D) f32
        pf_s.append(b1[None, :])                                     # (1, Dff) f32

    stacked = dict(
        wq=jnp.stack(wq_s), wk=jnp.stack(wk_s), wv=jnp.stack(wv_s),
        wo=jnp.stack(wo_s), w1=jnp.stack(w1_s), w2=jnp.stack(w2_s),
        pd=jnp.stack(pd_s), pf=jnp.stack(pf_s))
    return dict(pos_emb=pos_emb, layers=layers, stacked=stacked)


def encoder_forward(x, params, *, patch_size, heads):
    """Pallas-backed Encoder forward (eval mode: dropout = identity)."""
    N = x.shape[0]
    # PatchEmbedding (reshape) + position embedding: trivial glue, plain JAX.
    out = x.reshape(N, -1, patch_size) + params["pos_emb"][None]
    S, D = out.shape[1], out.shape[2]
    # TODO(synk): nn.Dropout is treated as identity (inference); training-mode
    # dropout masks are not implemented.
    flat = out.reshape(N * S, D)              # layout plumbing in the wrapper
    y = encoder_pallas(flat, params["stacked"], heads=heads, batch=N, seq=S)
    return y.reshape(N, S, D)


# ----------------------------- pure-JAX reference --------------------------- #

def encoder_reference(x, params, *, patch_size, heads):
    N = x.shape[0]
    head_dim = patch_size // heads
    out = x.reshape(N, -1, patch_size) + params["pos_emb"][None]
    S = out.shape[1]
    for p in params["layers"]:
        q_in = out
        r = out.reshape(N, S, heads, head_dim)
        vv = jnp.einsum('nshd,ed->nshe', r, p["wv"])
        kk = jnp.einsum('nshd,ed->nshe', r, p["wk"])
        qq = jnp.einsum('nshd,ed->nshe', r, p["wq"])
        energy = jnp.einsum('nqhd,nkhd->nhqk', qq, kk)
        attn = jax.nn.softmax(energy / patch_size ** 0.5, axis=3)
        o = jnp.einsum('nhql,nlhd->nqhd', attn, vv).reshape(N, S, heads * head_dim)
        o = o @ p["wo"].T + p["bo"]
        h1 = _layer_norm(o + q_in, p["g1"], p["be1"])
        ff = jnp.maximum(h1 @ p["w1"].T + p["b1"], 0.0)
        ff = ff @ p["w2"].T + p["b2"]
        out = _layer_norm(ff + h1, p["g2"], p["be2"])
    return out


# ------------------------------------ main ---------------------------------- #

if __name__ == "__main__":
    patch_size = 32
    heads = 4
    num_layers = 2
    forward_expansion = 2
    num_block = 8
    N = 2

    key = jax.random.PRNGKey(0)
    kx, kp = jax.random.split(key)
    # x flattens to (N, num_block, patch_size): 16*16 = num_block * patch_size
    x = jax.random.normal(kx, (N, 16, 16), jnp.float32)

    params = init_params(kp, patch_size=patch_size, heads=heads,
                         forward_expansion=forward_expansion,
                         num_layers=num_layers, num_block=num_block)

    out = encoder_forward(x, params, patch_size=patch_size, heads=heads)
    out = jax.block_until_ready(out)

    ref = encoder_reference(x, params, patch_size=patch_size, heads=heads)
    assert out.shape == (N, num_block, patch_size), out.shape
    # bf16 MXU operands + approx-reciprocal softmax -> bf16-appropriate tolerance
    rel = float(jnp.linalg.norm(out - ref) / jnp.linalg.norm(ref))
    assert rel < 2e-2, rel
    assert jnp.allclose(out, ref, rtol=5e-2, atol=5e-2), (
        float(jnp.max(jnp.abs(out - ref))), rel)

    print("KERNEL_OK")
</pallas_src>

<mosaic_0001>
module attributes {stable_mosaic.version = 11 : i64} {
  func.func @encoder_layers_kernel(%arg0: i32, %arg1: memref<16x32xf32, #tpu.memory_space<vmem>>, %arg2: memref<2x32x32xbf16, #tpu.memory_space<vmem>>, %arg3: memref<2x32x32xbf16, #tpu.memory_space<vmem>>, %arg4: memref<2x32x32xbf16, #tpu.memory_space<vmem>>, %arg5: memref<2x32x32xbf16, #tpu.memory_space<vmem>>, %arg6: memref<2x32x64xbf16, #tpu.memory_space<vmem>>, %arg7: memref<2x64x32xbf16, #tpu.memory_space<vmem>>, %arg8: memref<2x6x32xf32, #tpu.memory_space<vmem>>, %arg9: memref<2x1x64xf32, #tpu.memory_space<vmem>>, %arg10: memref<16x32xf32, #tpu.memory_space<vmem>>) attributes {dimension_semantics = [#tpu.dimension_semantics<arbitrary>], iteration_bounds = array<i64: 1>, scalar_prefetch = 0 : i64, scratch_operands = 0 : i64, tpu.core_type = #tpu.core_type<tc>, window_params = [{pipeline_mode = #tpu.pipeline_mode<synchronous>, transform_indices = @transform_0, window_bounds = array<i64: 16, 32>}, {pipeline_mode = #tpu.pipeline_mode<synchronous>, transform_indices = @transform_1, window_bounds = array<i64: 2, 32, 32>}, {pipeline_mode = #tpu.pipeline_mode<synchronous>, transform_indices = @transform_2, window_bounds = array<i64: 2, 32, 32>}, {pipeline_mode = #tpu.pipeline_mode<synchronous>, transform_indices = @transform_3, window_bounds = array<i64: 2, 32, 32>}, {pipeline_mode = #tpu.pipeline_mode<synchronous>, transform_indices = @transform_4, window_bounds = array<i64: 2, 32, 32>}, {pipeline_mode = #tpu.pipeline_mode<synchronous>, transform_indices = @transform_5, window_bounds = array<i64: 2, 32, 64>}, {pipeline_mode = #tpu.pipeline_mode<synchronous>, transform_indices = @transform_6, window_bounds = array<i64: 2, 64, 32>}, {pipeline_mode = #tpu.pipeline_mode<synchronous>, transform_indices = @transform_7, window_bounds = array<i64: 2, 6, 32>}, {pipeline_mode = #tpu.pipeline_mode<synchronous>, transform_indices = @transform_8, window_bounds = array<i64: 2, 1, 64>}, {pipeline_mode = #tpu.pipeline_mode<synchronous>, transform_indices = @transform_9, window_bounds = array<i64: 16, 32>}]} {
    %c0 = arith.constant 0 : index
    %c0_0 = arith.constant 0 : index
    %0 = vector.load %arg1[%c0, %c0_0] : memref<16x32xf32, #tpu.memory_space<vmem>>, vector<16x32xf32>
    %1 = arith.truncf %0 : vector<16x32xf32> to vector<16x32xbf16>
    %c0_1 = arith.constant 0 : index
    %c0_2 = arith.constant 0 : index
    %c0_3 = arith.constant 0 : index
    %2 = vector.load %arg2[%c0_1, %c0_2, %c0_3] : memref<2x32x32xbf16, #tpu.memory_space<vmem>>, vector<1x32x32xbf16>
    %3 = vector.shape_cast %2 : vector<1x32x32xbf16> to vector<32x32xbf16>
    %cst = arith.constant dense<0.000000e+00> : vector<16x32xf32>
    %4 = tpu.matmul %1, %3, %cst {dimension_numbers = #tpu.dot_dimension_numbers<[1], [0], [0], [1], [0, 0, 1, 1], [], []>} : vector<16x32xbf16>, vector<32x32xbf16>, vector<16x32xf32> -> vector<16x32xf32>
    %c0_4 = arith.constant 0 : index
    %c0_5 = arith.constant 0 : index
    %c0_6 = arith.constant 0 : index
    %5 = vector.load %arg3[%c0_4, %c0_5, %c0_6] : memref<2x32x32xbf16, #tpu.memory_space<vmem>>, vector<1x32x32xbf16>
    %6 = vector.shape_cast %5 : vector<1x32x32xbf16> to vector<32x32xbf16>
    %cst_7 = arith.constant dense<0.000000e+00> : vector<16x32xf32>
    %7 = tpu.matmul %1, %6, %cst_7 {dimension_numbers = #tpu.dot_dimension_numbers<[1], [0], [0], [1], [0, 0, 1, 1], [], []>} : vector<16x32xbf16>, vector<32x32xbf16>, vector<16x32xf32> -> vector<16x32xf32>
    %c0_8 = arith.constant 0 : index
    %c0_9 = arith.constant 0 : index
    %c0_10 = arith.constant 0 : index
    %8 = vector.load %arg4[%c0_8, %c0_9, %c0_10] : memref<2x32x32xbf16, #tpu.memory_space<vmem>>, vector<1x32x32xbf16>
    %9 = vector.shape_cast %8 : vector<1x32x32xbf16> to vector<32x32xbf16>
    %cst_11 = arith.constant dense<0.000000e+00> : vector<16x32xf32>
    %10 = tpu.matmul %1, %9, %cst_11 {dimension_numbers = #tpu.dot_dimension_numbers<[1], [0], [0], [1], [0, 0, 1, 1], [], []>} : vector<16x32xbf16>, vector<32x32xbf16>, vector<16x32xf32> -> vector<16x32xf32>
    %11 = vector.shape_cast %4 : vector<16x32xf32> to vector<2x8x32xf32>
    %12 = arith.truncf %11 : vector<2x8x32xf32> to vector<2x8x32xbf16>
    %13 = vector.shape_cast %7 : vector<16x32xf32> to vector<2x8x32xf32>
    %14 = arith.truncf %13 : vector<2x8x32xf32> to vector<2x8x32xbf16>
    %15 = vector.shape_cast %10 : vector<16x32xf32> to vector<2x8x32xf32>
    %16 = arith.truncf %15 : vector<2x8x32xf32> to vector<2x8x32xbf16>
    %17 = vector.extract_strided_slice %12 {offsets = [0, 0, 0], sizes = [2, 8, 8], strides = [1, 1, 1]} : vector<2x8x32xbf16> to vector<2x8x8xbf16>
    %18 = vector.extract_strided_slice %14 {offsets = [0, 0, 0], sizes = [2, 8, 8], strides = [1, 1, 1]} : vector<2x8x32xbf16> to vector<2x8x8xbf16>
    %19 = vector.extract_strided_slice %16 {offsets = [0, 0, 0], sizes = [2, 8, 8], strides = [1, 1, 1]} : vector<2x8x32xbf16> to vector<2x8x8xbf16>
    "tpu.trace_start"() <{level = 10 : i32, message = "bqd,bkd->bqk"}> : () -> ()
    %cst_12 = arith.constant dense<0.000000e+00> : vector<2x8x8xf32>
    %20 = tpu.matmul %17, %18, %cst_12 {dimension_numbers = #tpu.dot_dimension_numbers<[2], [2], [1], [1], [0, 0, 0, 1, 1, 1], [0], [0]>} : vector<2x8x8xbf16>, vector<2x8x8xbf16>, vector<2x8x8xf32> -> vector<2x8x8xf32>
    "tpu.trace_stop"() : () -> ()
    %cst_13 = arith.constant dense<0xFF800000> : vector<2x8xf32>
    %21 = vector.multi_reduction <maximumf>, %20, %cst_13 [2] : vector<2x8x8xf32> to vector<2x8xf32>
    %22 = vector.shape_cast %21 : vector<2x8xf32> to vector<2x8x1xf32>
    %23 = vector.broadcast %22 : vector<2x8x1xf32> to vector<2x8x8xf32>
    %24 = arith.subf %20, %23 : vector<2x8x8xf32>
    %25 = math.exp %24 : vector<2x8x8xf32>
    %cst_14 = arith.constant dense<0.000000e+00> : vector<2x8xf32>
    %26 = vector.multi_reduction <add>, %25, %cst_14 [2] : vector<2x8x8xf32> to vector<2x8xf32>
    %27 = vector.shape_cast %26 : vector<2x8xf32> to vector<2x8x1xf32>
    %28 = tpu.reciprocal %27 {approx = true} : vector<2x8x1xf32> -> vector<2x8x1xf32>
    %29 = vector.broadcast %28 : vector<2x8x1xf32> to vector<2x8x8xf32>
    %30 = arith.mulf %25, %29 : vector<2x8x8xf32>
    %31 = arith.truncf %30 : vector<2x8x8xf32> to vector<2x8x8xbf16>
    "tpu.trace_start"() <{level = 10 : i32, message = "bqk,bkd->bqd"}> : () -> ()
    %cst_15 = arith.constant dense<0.000000e+00> : vector<2x8x8xf32>
    %32 = tpu.matmul %31, %19, %cst_15 {dimension_numbers = #tpu.dot_dimension_numbers<[2], [1], [1], [2], [0, 0, 0, 1, 1, 2], [0], [0]>} : vector<2x8x8xbf16>, vector<2x8x8xbf16>, vector<2x8x8xf32> -> vector<2x8x8xf32>
    "tpu.trace_stop"() : () -> ()
    %33 = vector.extract_strided_slice %12 {offsets = [0, 0, 8], sizes = [2, 8, 8], strides = [1, 1, 1]} : vector<2x8x32xbf16> to vector<2x8x8xbf16>
    %34 = vector.extract_strided_slice %14 {offsets = [0, 0, 8], sizes = [2, 8, 8], strides = [1, 1, 1]} : vector<2x8x32xbf16> to vector<2x8x8xbf16>
    %35 = vector.extract_strided_slice %16 {offsets = [0, 0, 8], sizes = [2, 8, 8], strides = [1, 1, 1]} : vector<2x8x32xbf16> to vector<2x8x8xbf16>
    "tpu.trace_start"() <{level = 10 : i32, message = "bqd,bkd->bqk"}> : () -> ()
    %cst_16 = arith.constant dense<0.000000e+00> : vector<2x8x8xf32>
    %36 = tpu.matmul %33, %34, %cst_16 {dimension_numbers = #tpu.dot_dimension_numbers<[2], [2], [1], [1], [0, 0, 0, 1, 1, 1], [0], [0]>} : vector<2x8x8xbf16>, vector<2x8x8xbf16>, vector<2x8x8xf32> -> vector<2x8x8xf32>
    "tpu.trace_stop"() : () -> ()
    %cst_17 = arith.constant dense<0xFF800000> : vector<2x8xf32>
    %37 = vector.multi_reduction <maximumf>, %36, %cst_17 [2] : vector<2x8x8xf32> to vector<2x8xf32>
    %38 = vector.shape_cast %37 : vector<2x8xf32> to vector<2x8x1xf32>
    %39 = vector.broadcast %38 : vector<2x8x1xf32> to vector<2x8x8xf32>
    %40 = arith.subf %36, %39 : vector<2x8x8xf32>
    %41 = math.exp %40 : vector<2x8x8xf32>
    %cst_18 = arith.constant dense<0.000000e+00> : vector<2x8xf32>
    %42 = vector.multi_reduction <add>, %41, %cst_18 [2] : vector<2x8x8xf32> to vector<2x8xf32>
    %43 = vector.shape_cast %42 : vector<2x8xf32> to vector<2x8x1xf32>
    %44 = tpu.reciprocal %43 {approx = true} : vector<2x8x1xf32> -> vector<2x8x1xf32>
    %45 = vector.broadcast %44 : vector<2x8x1xf32> to vector<2x8x8xf32>
    %46 = arith.mulf %41, %45 : vector<2x8x8xf32>
    %47 = arith.truncf %46 : vector<2x8x8xf32> to vector<2x8x8xbf16>
    "tpu.trace_start"() <{level = 10 : i32, message = "bqk,bkd->bqd"}> : () -> ()
    %cst_19 = arith.constant dense<0.000000e+00> : vector<2x8x8xf32>
    %48 = tpu.matmul %47, %35, %cst_19 {dimension_numbers = #tpu.dot_dimension_numbers<[2], [1], [1], [2], [0, 0, 0, 1, 1, 2], [0], [0]>} : vector<2x8x8xbf16>, vector<2x8x8xbf16>, vector<2x8x8xf32> -> vector<2x8x8xf32>
    "tpu.trace_stop"() : () -> ()
    %49 = vector.extract_strided_slice %12 {offsets = [0, 0, 16], sizes = [2, 8, 8], strides = [1, 1, 1]} : vector<2x8x32xbf16> to vector<2x8x8xbf16>
    %50 = vector.extract_strided_slice %14 {offsets = [0, 0, 16], sizes = [2, 8, 8], strides = [1, 1, 1]} : vector<2x8x32xbf16> to vector<2x8x8xbf16>
    %51 = vector.extract_strided_slice %16 {offsets = [0, 0, 16], sizes = [2, 8, 8], strides = [1, 1, 1]} : vector<2x8x32xbf16> to vector<2x8x8xbf16>
    "tpu.trace_start"() <{level = 10 : i32, message = "bqd,bkd->bqk"}> : () -> ()
    %cst_20 = arith.constant dense<0.000000e+00> : vector<2x8x8xf32>
    %52 = tpu.matmul %49, %50, %cst_20 {dimension_numbers = #tpu.dot_dimension_numbers<[2], [2], [1], [1], [0, 0, 0, 1, 1, 1], [0], [0]>} : vector<2x8x8xbf16>, vector<2x8x8xbf16>, vector<2x8x8xf32> -> vector<2x8x8xf32>
    "tpu.trace_stop"() : () -> ()
    %cst_21 = arith.constant dense<0xFF800000> : vector<2x8xf32>
    %53 = vector.multi_reduction <maximumf>, %52, %cst_21 [2] : vector<2x8x8xf32> to vector<2x8xf32>
    %54 = vector.shape_cast %53 : vector<2x8xf32> to vector<2x8x1xf32>
    %55 = vector.broadcast %54 : vector<2x8x1xf32> to vector<2x8x8xf32>
    %56 = arith.subf %52, %55 : vector<2x8x8xf32>
    %57 = math.exp %56 : vector<2x8x8xf32>
    %cst_22 = arith.constant dense<0.000000e+00> : vector<2x8xf32>
    %58 = vector.multi_reduction <add>, %57, %cst_22 [2] : vector<2x8x8xf32> to vector<2x8xf32>
    %59 = vector.shape_cast %58 : vector<2x8xf32> to vector<2x8x1xf32>
    %60 = tpu.reciprocal %59 {approx = true} : vector<2x8x1xf32> -> vector<2x8x1xf32>
    %61 = vector.broadcast %60 : vector<2x8x1xf32> to vector<2x8x8xf32>
    %62 = arith.mulf %57, %61 : vector<2x8x8xf32>
    %63 = arith.truncf %62 : vector<2x8x8xf32> to vector<2x8x8xbf16>
    "tpu.trace_start"() <{level = 10 : i32, message = "bqk,bkd->bqd"}> : () -> ()
    %cst_23 = arith.constant dense<0.000000e+00> : vector<2x8x8xf32>
    %64 = tpu.matmul %63, %51, %cst_23 {dimension_numbers = #tpu.dot_dimension_numbers<[2], [1], [1], [2], [0, 0, 0, 1, 1, 2], [0], [0]>} : vector<2x8x8xbf16>, vector<2x8x8xbf16>, vector<2x8x8xf32> -> vector<2x8x8xf32>
    "tpu.trace_stop"() : () -> ()
    %65 = vector.extract_strided_slice %12 {offsets = [0, 0, 24], sizes = [2, 8, 8], strides = [1, 1, 1]} : vector<2x8x32xbf16> to vector<2x8x8xbf16>
    %66 = vector.extract_strided_slice %14 {offsets = [0, 0, 24], sizes = [2, 8, 8], strides = [1, 1, 1]} : vector<2x8x32xbf16> to vector<2x8x8xbf16>
    %67 = vector.extract_strided_slice %16 {offsets = [0, 0, 24], sizes = [2, 8, 8], strides = [1, 1, 1]} : vector<2x8x32xbf16> to vector<2x8x8xbf16>
    "tpu.trace_start"() <{level = 10 : i32, message = "bqd,bkd->bqk"}> : () -> ()
    %cst_24 = arith.constant dense<0.000000e+00> : vector<2x8x8xf32>
    %68 = tpu.matmul %65, %66, %cst_24 {dimension_numbers = #tpu.dot_dimension_numbers<[2], [2], [1], [1], [0, 0, 0, 1, 1, 1], [0], [0]>} : vector<2x8x8xbf16>, vector<2x8x8xbf16>, vector<2x8x8xf32> -> vector<2x8x8xf32>
    "tpu.trace_stop"() : () -> ()
    %cst_25 = arith.constant dense<0xFF800000> : vector<2x8xf32>
    %69 = vector.multi_reduction <maximumf>, %68, %cst_25 [2] : vector<2x8x8xf32> to vector<2x8xf32>
    %70 = vector.shape_cast %69 : vector<2x8xf32> to vector<2x8x1xf32>
    %71 = vector.broadcast %70 : vector<2x8x1xf32> to vector<2x8x8xf32>
    %72 = arith.subf %68, %71 : vector<2x8x8xf32>
    %73 = math.exp %72 : vector<2x8x8xf32>
    %cst_26 = arith.constant dense<0.000000e+00> : vector<2x8xf32>
    %74 = vector.multi_reduction <add>, %73, %cst_26 [2] : vector<2x8x8xf32> to vector<2x8xf32>
    %75 = vector.shape_cast %74 : vector<2x8xf32> to vector<2x8x1xf32>
    %76 = tpu.reciprocal %75 {approx = true} : vector<2x8x1xf32> -> vector<2x8x1xf32>
    %77 = vector.broadcast %76 : vector<2x8x1xf32> to vector<2x8x8xf32>
    %78 = arith.mulf %73, %77 : vector<2x8x8xf32>
    %79 = arith.truncf %78 : vector<2x8x8xf32> to vector<2x8x8xbf16>
    "tpu.trace_start"() <{level = 10 : i32, message = "bqk,bkd->bqd"}> : () -> ()
    %cst_27 = arith.constant dense<0.000000e+00> : vector<2x8x8xf32>
    %80 = tpu.matmul %79, %67, %cst_27 {dimension_numbers = #tpu.dot_dimension_numbers<[2], [1], [1], [2], [0, 0, 0, 1, 1, 2], [0], [0]>} : vector<2x8x8xbf16>, vector<2x8x8xbf16>, vector<2x8x8xf32> -> vector<2x8x8xf32>
    "tpu.trace_stop"() : () -> ()
    %81 = tpu.concatenate %32, %48, %64, %80 in 2 : vector<2x8x8xf32>, vector<2x8x8xf32>, vector<2x8x8xf32>, vector<2x8x8xf32> -> vector<2x8x32xf32>
    %82 = vector.shape_cast %81 : vector<2x8x32xf32> to vector<16x32xf32>
    %83 = arith.truncf %82 : vector<16x32xf32> to vector<16x32xbf16>
    %c0_28 = arith.constant 0 : index
    %c0_29 = arith.constant 0 : index
    %c0_30 = arith.constant 0 : index
    %84 = vector.load %arg5[%c0_28, %c0_29, %c0_30] : memref<2x32x32xbf16, #tpu.memory_space<vmem>>, vector<1x32x32xbf16>
    %85 = vector.shape_cast %84 : vector<1x32x32xbf16> to vector<32x32xbf16>
    %cst_31 = arith.constant dense<0.000000e+00> : vector<16x32xf32>
    %86 = tpu.matmul %83, %85, %cst_31 {dimension_numbers = #tpu.dot_dimension_numbers<[1], [0], [0], [1], [0, 0, 1, 1], [], []>} : vector<16x32xbf16>, vector<32x32xbf16>, vector<16x32xf32> -> vector<16x32xf32>
    %c0_32 = arith.constant 0 : index
    %c0_33 = arith.constant 0 : index
    %c0_34 = arith.constant 0 : index
    %87 = vector.load %arg8[%c0_32, %c0_33, %c0_34] : memref<2x6x32xf32, #tpu.memory_space<vmem>>, vector<1x6x32xf32>
    %88 = vector.shape_cast %87 : vector<1x6x32xf32> to vector<6x32xf32>
    %89 = vector.extract_strided_slice %88 {offsets = [0, 0], sizes = [1, 32], strides = [1, 1]} : vector<6x32xf32> to vector<1x32xf32>
    %90 = vector.extract_strided_slice %88 {offsets = [1, 0], sizes = [1, 32], strides = [1, 1]} : vector<6x32xf32> to vector<1x32xf32>
    %91 = vector.extract_strided_slice %88 {offsets = [2, 0], sizes = [1, 32], strides = [1, 1]} : vector<6x32xf32> to vector<1x32xf32>
    %92 = vector.extract_strided_slice %88 {offsets = [3, 0], sizes = [1, 32], strides = [1, 1]} : vector<6x32xf32> to vector<1x32xf32>
    %93 = vector.extract_strided_slice %88 {offsets = [4, 0], sizes = [1, 32], strides = [1, 1]} : vector<6x32xf32> to vector<1x32xf32>
    %94 = vector.extract_strided_slice %88 {offsets = [5, 0], sizes = [1, 32], strides = [1, 1]} : vector<6x32xf32> to vector<1x32xf32>
    %c0_35 = arith.constant 0 : index
    %c0_36 = arith.constant 0 : index
    %c0_37 = arith.constant 0 : index
    %95 = vector.load %arg9[%c0_35, %c0_36, %c0_37] : memref<2x1x64xf32, #tpu.memory_space<vmem>>, vector<1x1x64xf32>
    %96 = vector.shape_cast %95 : vector<1x1x64xf32> to vector<1x64xf32>
    %97 = vector.broadcast %89 : vector<1x32xf32> to vector<16x32xf32>
    %98 = arith.addf %86, %97 : vector<16x32xf32>
    %99 = arith.addf %98, %0 : vector<16x32xf32>
    %cst_38 = arith.constant dense<0.000000e+00> : vector<16xf32>
    %100 = vector.multi_reduction <add>, %99, %cst_38 [1] : vector<16x32xf32> to vector<16xf32>
    %101 = vector.shape_cast %100 : vector<16xf32> to vector<16x1xf32>
    %cst_39 = arith.constant 3.200000e+01 : f32
    %102 = vector.broadcast %cst_39 : f32 to vector<16x1xf32>
    %103 = arith.divf %101, %102 : vector<16x1xf32>
    %104 = vector.broadcast %103 : vector<16x1xf32> to vector<16x32xf32>
    %105 = arith.subf %99, %104 : vector<16x32xf32>
    %106 = arith.mulf %105, %105 : vector<16x32xf32>
    %cst_40 = arith.constant dense<0.000000e+00> : vector<16xf32>
    %107 = vector.multi_reduction <add>, %106, %cst_40 [1] : vector<16x32xf32> to vector<16xf32>
    %108 = vector.shape_cast %107 : vector<16xf32> to vector<16x1xf32>
    %cst_41 = arith.constant 3.200000e+01 : f32
    %109 = vector.broadcast %cst_41 : f32 to vector<16x1xf32>
    %110 = arith.divf %108, %109 : vector<16x1xf32>
    %111 = vector.broadcast %103 : vector<16x1xf32> to vector<16x32xf32>
    %112 = arith.subf %99, %111 : vector<16x32xf32>
    %cst_42 = arith.constant 9.99999974E-6 : f32
    %113 = vector.broadcast %cst_42 : f32 to vector<16x1xf32>
    %114 = arith.addf %110, %113 : vector<16x1xf32>
    %115 = math.rsqrt %114 : vector<16x1xf32>
    %116 = vector.broadcast %115 : vector<16x1xf32> to vector<16x32xf32>
    %117 = arith.mulf %112, %116 : vector<16x32xf32>
    %118 = vector.broadcast %90 : vector<1x32xf32> to vector<16x32xf32>
    %119 = arith.mulf %117, %118 : vector<16x32xf32>
    %120 = vector.broadcast %91 : vector<1x32xf32> to vector<16x32xf32>
    %121 = arith.addf %119, %120 : vector<16x32xf32>
    %122 = arith.truncf %121 : vector<16x32xf32> to vector<16x32xbf16>
    %c0_43 = arith.constant 0 : index
    %c0_44 = arith.constant 0 : index
    %c0_45 = arith.constant 0 : index
    %123 = vector.load %arg6[%c0_43, %c0_44, %c0_45] : memref<2x32x64xbf16, #tpu.memory_space<vmem>>, vector<1x32x64xbf16>
    %124 = vector.shape_cast %123 : vector<1x32x64xbf16> to vector<32x64xbf16>
    %cst_46 = arith.constant dense<0.000000e+00> : vector<16x64xf32>
    %125 = tpu.matmul %122, %124, %cst_46 {dimension_numbers = #tpu.dot_dimension_numbers<[1], [0], [0], [1], [0, 0, 1, 1], [], []>} : vector<16x32xbf16>, vector<32x64xbf16>, vector<16x64xf32> -> vector<16x64xf32>
    %126 = vector.broadcast %96 : vector<1x64xf32> to vector<16x64xf32>
    %127 = arith.addf %125, %126 : vector<16x64xf32>
    %cst_47 = arith.constant 0.000000e+00 : f32
    %128 = vector.broadcast %cst_47 : f32 to vector<16x64xf32>
    %129 = arith.maximumf %127, %128 : vector<16x64xf32>
    %130 = arith.truncf %129 : vector<16x64xf32> to vector<16x64xbf16>
    %c0_48 = arith.constant 0 : index
    %c0_49 = arith.constant 0 : index
    %c0_50 = arith.constant 0 : index
    %131 = vector.load %arg7[%c0_48, %c0_49, %c0_50] : memref<2x64x32xbf16, #tpu.memory_space<vmem>>, vector<1x64x32xbf16>
    %132 = vector.shape_cast %131 : vector<1x64x32xbf16> to vector<64x32xbf16>
    %cst_51 = arith.constant dense<0.000000e+00> : vector<16x32xf32>
    %133 = tpu.matmul %130, %132, %cst_51 {dimension_numbers = #tpu.dot_dimension_numbers<[1], [0], [0], [1], [0, 0, 1, 1], [], []>} : vector<16x64xbf16>, vector<64x32xbf16>, vector<16x32xf32> -> vector<16x32xf32>
    %134 = vector.broadcast %94 : vector<1x32xf32> to vector<16x32xf32>
    %135 = arith.addf %133, %134 : vector<16x32xf32>
    %136 = arith.addf %135, %121 : vector<16x32xf32>
    %cst_52 = arith.constant dense<0.000000e+00> : vector<16xf32>
    %137 = vector.multi_reduction <add>, %136, %cst_52 [1] : vector<16x32xf32> to vector<16xf32>
    %138 = vector.shape_cast %137 : vector<16xf32> to vector<16x1xf32>
    %cst_53 = arith.constant 3.200000e+01 : f32
    %139 = vector.broadcast %cst_53 : f32 to vector<16x1xf32>
    %140 = arith.divf %138, %139 : vector<16x1xf32>
    %141 = vector.broadcast %140 : vector<16x1xf32> to vector<16x32xf32>
    %142 = arith.subf %136, %141 : vector<16x32xf32>
    %143 = arith.mulf %142, %142 : vector<16x32xf32>
    %cst_54 = arith.constant dense<0.000000e+00> : vector<16xf32>
    %144 = vector.multi_reduction <add>, %143, %cst_54 [1] : vector<16x32xf32> to vector<16xf32>
    %145 = vector.shape_cast %144 : vector<16xf32> to vector<16x1xf32>
    %cst_55 = arith.constant 3.200000e+01 : f32
    %146 = vector.broadcast %cst_55 : f32 to vector<16x1xf32>
    %147 = arith.divf %145, %146 : vector<16x1xf32>
    %148 = vector.broadcast %140 : vector<16x1xf32> to vector<16x32xf32>
    %149 = arith.subf %136, %148 : vector<16x32xf32>
    %cst_56 = arith.constant 9.99999974E-6 : f32
    %150 = vector.broadcast %cst_56 : f32 to vector<16x1xf32>
    %151 = arith.addf %147, %150 : vector<16x1xf32>
    %152 = math.rsqrt %151 : vector<16x1xf32>
    %153 = vector.broadcast %152 : vector<16x1xf32> to vector<16x32xf32>
    %154 = arith.mulf %149, %153 : vector<16x32xf32>
    %155 = vector.broadcast %92 : vector<1x32xf32> to vector<16x32xf32>
    %156 = arith.mulf %154, %155 : vector<16x32xf32>
    %157 = vector.broadcast %93 : vector<1x32xf32> to vector<16x32xf32>
    %158 = arith.addf %156, %157 : vector<16x32xf32>
    %159 = arith.truncf %158 : vector<16x32xf32> to vector<16x32xbf16>
    %c1 = arith.constant 1 : index
    %c0_57 = arith.constant 0 : index
    %c0_58 = arith.constant 0 : index
    %160 = vector.load %arg2[%c1, %c0_57, %c0_58] : memref<2x32x32xbf16, #tpu.memory_space<vmem>>, vector<1x32x32xbf16>
    %161 = vector.shape_cast %160 : vector<1x32x32xbf16> to vector<32x32xbf16>
    %cst_59 = arith.constant dense<0.000000e+00> : vector<16x32xf32>
    %162 = tpu.matmul %159, %161, %cst_59 {dimension_numbers = #tpu.dot_dimension_numbers<[1], [0], [0], [1], [0, 0, 1, 1], [], []>} : vector<16x32xbf16>, vector<32x32xbf16>, vector<16x32xf32> -> vector<16x32xf32>
    %c1_60 = arith.constant 1 : index
    %c0_61 = arith.constant 0 : index
    %c0_62 = arith.constant 0 : index
    %163 = vector.load %arg3[%c1_60, %c0_61, %c0_62] : memref<2x32x32xbf16, #tpu.memory_space<vmem>>, vector<1x32x32xbf16>
    %164 = vector.shape_cast %163 : vector<1x32x32xbf16> to vector<32x32xbf16>
    %cst_63 = arith.constant dense<0.000000e+00> : vector<16x32xf32>
    %165 = tpu.matmul %159, %164, %cst_63 {dimension_numbers = #tpu.dot_dimension_numbers<[1], [0], [0], [1], [0, 0, 1, 1], [], []>} : vector<16x32xbf16>, vector<32x32xbf16>, vector<16x32xf32> -> vector<16x32xf32>
    %c1_64 = arith.constant 1 : index
    %c0_65 = arith.constant 0 : index
    %c0_66 = arith.constant 0 : index
    %166 = vector.load %arg4[%c1_64, %c0_65, %c0_66] : memref<2x32x32xbf16, #tpu.memory_space<vmem>>, vector<1x32x32xbf16>
    %167 = vector.shape_cast %166 : vector<1x32x32xbf16> to vector<32x32xbf16>
    %cst_67 = arith.constant dense<0.000000e+00> : vector<16x32xf32>
    %168 = tpu.matmul %159, %167, %cst_67 {dimension_numbers = #tpu.dot_dimension_numbers<[1], [0], [0], [1], [0, 0, 1, 1], [], []>} : vector<16x32xbf16>, vector<32x32xbf16>, vector<16x32xf32> -> vector<16x32xf32>
    %169 = vector.shape_cast %162 : vector<16x32xf32> to vector<2x8x32xf32>
    %170 = arith.truncf %169 : vector<2x8x32xf32> to vector<2x8x32xbf16>
    %171 = vector.shape_cast %165 : vector<16x32xf32> to vector<2x8x32xf32>
    %172 = arith.truncf %171 : vector<2x8x32xf32> to vector<2x8x32xbf16>
    %173 = vector.shape_cast %168 : vector<16x32xf32> to vector<2x8x32xf32>
    %174 = arith.truncf %173 : vector<2x8x32xf32> to vector<2x8x32xbf16>
    %175 = vector.extract_strided_slice %170 {offsets = [0, 0, 0], sizes = [2, 8, 8], strides = [1, 1, 1]} : vector<2x8x32xbf16> to vector<2x8x8xbf16>
    %176 = vector.extract_strided_slice %172 {offsets = [0, 0, 0], sizes = [2, 8, 8], strides = [1, 1, 1]} : vector<2x8x32xbf16> to vector<2x8x8xbf16>
    %177 = vector.extract_strided_slice %174 {offsets = [0, 0, 0], sizes = [2, 8, 8], strides = [1, 1, 1]} : vector<2x8x32xbf16> to vector<2x8x8xbf16>
    "tpu.trace_start"() <{level = 10 : i32, message = "bqd,bkd->bqk"}> : () -> ()
    %cst_68 = arith.constant dense<0.000000e+00> : vector<2x8x8xf32>
    %178 = tpu.matmul %175, %176, %cst_68 {dimension_numbers = #tpu.dot_dimension_numbers<[2], [2], [1], [1], [0, 0, 0, 1, 1, 1], [0], [0]>} : vector<2x8x8xbf16>, vector<2x8x8xbf16>, vector<2x8x8xf32> -> vector<2x8x8xf32>
    "tpu.trace_stop"() : () -> ()
    %cst_69 = arith.constant dense<0xFF800000> : vector<2x8xf32>
    %179 = vector.multi_reduction <maximumf>, %178, %cst_69 [2] : vector<2x8x8xf32> to vector<2x8xf32>
    %180 = vector.shape_cast %179 : vector<2x8xf32> to vector<2x8x1xf32>
    %181 = vector.broadcast %180 : vector<2x8x1xf32> to vector<2x8x8xf32>
    %182 = arith.subf %178, %181 : vector<2x8x8xf32>
    %183 = math.exp %182 : vector<2x8x8xf32>
    %cst_70 = arith.constant dense<0.000000e+00> : vector<2x8xf32>
    %184 = vector.multi_reduction <add>, %183, %cst_70 [2] : vector<2x8x8xf32> to vector<2x8xf32>
    %185 = vector.shape_cast %184 : vector<2x8xf32> to vector<2x8x1xf32>
    %186 = tpu.reciprocal %185 {approx = true} : vector<2x8x1xf32> -> vector<2x8x1xf32>
    %187 = vector.broadcast %186 : vector<2x8x1xf32> to vector<2x8x8xf32>
    %188 = arith.mulf %183, %187 : vector<2x8x8xf32>
    %189 = arith.truncf %188 : vector<2x8x8xf32> to vector<2x8x8xbf16>
    "tpu.trace_start"() <{level = 10 : i32, message = "bqk,bkd->bqd"}> : () -> ()
    %cst_71 = arith.constant dense<0.000000e+00> : vector<2x8x8xf32>
    %190 = tpu.matmul %189, %177, %cst_71 {dimension_numbers = #tpu.dot_dimension_numbers<[2], [1], [1], [2], [0, 0, 0, 1, 1, 2], [0], [0]>} : vector<2x8x8xbf16>, vector<2x8x8xbf16>, vector<2x8x8xf32> -> vector<2x8x8xf32>
    "tpu.trace_stop"() : () -> ()
    %191 = vector.extract_strided_slice %170 {offsets = [0, 0, 8], sizes = [2, 8, 8], strides = [1, 1, 1]} : vector<2x8x32xbf16> to vector<2x8x8xbf16>
    %192 = vector.extract_strided_slice %172 {offsets = [0, 0, 8], sizes = [2, 8, 8], strides = [1, 1, 1]} : vector<2x8x32xbf16> to vector<2x8x8xbf16>
    %193 = vector.extract_strided_slice %174 {offsets = [0, 0, 8], sizes = [2, 8, 8], strides = [1, 1, 1]} : vector<2x8x32xbf16> to vector<2x8x8xbf16>
    "tpu.trace_start"() <{level = 10 : i32, message = "bqd,bkd->bqk"}> : () -> ()
    %cst_72 = arith.constant dense<0.000000e+00> : vector<2x8x8xf32>
    %194 = tpu.matmul %191, %192, %cst_72 {dimension_numbers = #tpu.dot_dimension_numbers<[2], [2], [1], [1], [0, 0, 0, 1, 1, 1], [0], [0]>} : vector<2x8x8xbf16>, vector<2x8x8xbf16>, vector<2x8x8xf32> -> vector<2x8x8xf32>
    "tpu.trace_stop"() : () -> ()
    %cst_73 = arith.constant dense<0xFF800000> : vector<2x8xf32>
    %195 = vector.multi_reduction <maximumf>, %194, %cst_73 [2] : vector<2x8x8xf32> to vector<2x8xf32>
    %196 = vector.shape_cast %195 : vector<2x8xf32> to vector<2x8x1xf32>
    %197 = vector.broadcast %196 : vector<2x8x1xf32> to vector<2x8x8xf32>
    %198 = arith.subf %194, %197 : vector<2x8x8xf32>
    %199 = math.exp %198 : vector<2x8x8xf32>
    %cst_74 = arith.constant dense<0.000000e+00> : vector<2x8xf32>
    %200 = vector.multi_reduction <add>, %199, %cst_74 [2] : vector<2x8x8xf32> to vector<2x8xf32>
    %201 = vector.shape_cast %200 : vector<2x8xf32> to vector<2x8x1xf32>
    %202 = tpu.reciprocal %201 {approx = true} : vector<2x8x1xf32> -> vector<2x8x1xf32>
    %203 = vector.broadcast %202 : vector<2x8x1xf32> to vector<2x8x8xf32>
    %204 = arith.mulf %199, %203 : vector<2x8x8xf32>
    %205 = arith.truncf %204 : vector<2x8x8xf32> to vector<2x8x8xbf16>
    "tpu.trace_start"() <{level = 10 : i32, message = "bqk,bkd->bqd"}> : () -> ()
    %cst_75 = arith.constant dense<0.000000e+00> : vector<2x8x8xf32>
    %206 = tpu.matmul %205, %193, %cst_75 {dimension_numbers = #tpu.dot_dimension_numbers<[2], [1], [1], [2], [0, 0, 0, 1, 1, 2], [0], [0]>} : vector<2x8x8xbf16>, vector<2x8x8xbf16>, vector<2x8x8xf32> -> vector<2x8x8xf32>
    "tpu.trace_stop"() : () -> ()
    %207 = vector.extract_strided_slice %170 {offsets = [0, 0, 16], sizes = [2, 8, 8], strides = [1, 1, 1]} : vector<2x8x32xbf16> to vector<2x8x8xbf16>
    %208 = vector.extract_strided_slice %172 {offsets = [0, 0, 16], sizes = [2, 8, 8], strides = [1, 1, 1]} : vector<2x8x32xbf16> to vector<2x8x8xbf16>
    %209 = vector.extract_strided_slice %174 {offsets = [0, 0, 16], sizes = [2, 8, 8], strides = [1, 1, 1]} : vector<2x8x32xbf16> to vector<2x8x8xbf16>
    "tpu.trace_start"() <{level = 10 : i32, message = "bqd,bkd->bqk"}> : () -> ()
    %cst_76 = arith.constant dense<0.000000e+00> : vector<2x8x8xf32>
    %210 = tpu.matmul %207, %208, %cst_76 {dimension_numbers = #tpu.dot_dimension_numbers<[2], [2], [1], [1], [0, 0, 0, 1, 1, 1], [0], [0]>} : vector<2x8x8xbf16>, vector<2x8x8xbf16>, vector<2x8x8xf32> -> vector<2x8x8xf32>
    "tpu.trace_stop"() : () -> ()
    %cst_77 = arith.constant dense<0xFF800000> : vector<2x8xf32>
    %211 = vector.multi_reduction <maximumf>, %210, %cst_77 [2] : vector<2x8x8xf32> to vector<2x8xf32>
    %212 = vector.shape_cast %211 : vector<2x8xf32> to vector<2x8x1xf32>
    %213 = vector.broadcast %212 : vector<2x8x1xf32> to vector<2x8x8xf32>
    %214 = arith.subf %210, %213 : vector<2x8x8xf32>
    %215 = math.exp %214 : vector<2x8x8xf32>
    %cst_78 = arith.constant dense<0.000000e+00> : vector<2x8xf32>
    %216 = vector.multi_reduction <add>, %215, %cst_78 [2] : vector<2x8x8xf32> to vector<2x8xf32>
    %217 = vector.shape_cast %216 : vector<2x8xf32> to vector<2x8x1xf32>
    %218 = tpu.reciprocal %217 {approx = true} : vector<2x8x1xf32> -> vector<2x8x1xf32>
    %219 = vector.broadcast %218 : vector<2x8x1xf32> to vector<2x8x8xf32>
    %220 = arith.mulf %215, %219 : vector<2x8x8xf32>
    %221 = arith.truncf %220 : vector<2x8x8xf32> to vector<2x8x8xbf16>
    "tpu.trace_start"() <{level = 10 : i32, message = "bqk,bkd->bqd"}> : () -> ()
    %cst_79 = arith.constant dense<0.000000e+00> : vector<2x8x8xf32>
    %222 = tpu.matmul %221, %209, %cst_79 {dimension_numbers = #tpu.dot_dimension_numbers<[2], [1], [1], [2], [0, 0, 0, 1, 1, 2], [0], [0]>} : vector<2x8x8xbf16>, vector<2x8x8xbf16>, vector<2x8x8xf32> -> vector<2x8x8xf32>
    "tpu.trace_stop"() : () -> ()
    %223 = vector.extract_strided_slice %170 {offsets = [0, 0, 24], sizes = [2, 8, 8], strides = [1, 1, 1]} : vector<2x8x32xbf16> to vector<2x8x8xbf16>
    %224 = vector.extract_strided_slice %172 {offsets = [0, 0, 24], sizes = [2, 8, 8], strides = [1, 1, 1]} : vector<2x8x32xbf16> to vector<2x8x8xbf16>
    %225 = vector.extract_strided_slice %174 {offsets = [0, 0, 24], sizes = [2, 8, 8], strides = [1, 1, 1]} : vector<2x8x32xbf16> to vector<2x8x8xbf16>
    "tpu.trace_start"() <{level = 10 : i32, message = "bqd,bkd->bqk"}> : () -> ()
    %cst_80 = arith.constant dense<0.000000e+00> : vector<2x8x8xf32>
    %226 = tpu.matmul %223, %224, %cst_80 {dimension_numbers = #tpu.dot_dimension_numbers<[2], [2], [1], [1], [0, 0, 0, 1, 1, 1], [0], [0]>} : vector<2x8x8xbf16>, vector<2x8x8xbf16>, vector<2x8x8xf32> -> vector<2x8x8xf32>
    "tpu.trace_stop"() : () -> ()
    %cst_81 = arith.constant dense<0xFF800000> : vector<2x8xf32>
    %227 = vector.multi_reduction <maximumf>, %226, %cst_81 [2] : vector<2x8x8xf32> to vector<2x8xf32>
    %228 = vector.shape_cast %227 : vector<2x8xf32> to vector<2x8x1xf32>
    %229 = vector.broadcast %228 : vector<2x8x1xf32> to vector<2x8x8xf32>
    %230 = arith.subf %226, %229 : vector<2x8x8xf32>
    %231 = math.exp %230 : vector<2x8x8xf32>
    %cst_82 = arith.constant dense<0.000000e+00> : vector<2x8xf32>
    %232 = vector.multi_reduction <add>, %231, %cst_82 [2] : vector<2x8x8xf32> to vector<2x8xf32>
    %233 = vector.shape_cast %232 : vector<2x8xf32> to vector<2x8x1xf32>
    %234 = tpu.reciprocal %233 {approx = true} : vector<2x8x1xf32> -> vector<2x8x1xf32>
    %235 = vector.broadcast %234 : vector<2x8x1xf32> to vector<2x8x8xf32>
    %236 = arith.mulf %231, %235 : vector<2x8x8xf32>
    %237 = arith.truncf %236 : vector<2x8x8xf32> to vector<2x8x8xbf16>
    "tpu.trace_start"() <{level = 10 : i32, message = "bqk,bkd->bqd"}> : () -> ()
    %cst_83 = arith.constant dense<0.000000e+00> : vector<2x8x8xf32>
    %238 = tpu.matmul %237, %225, %cst_83 {dimension_numbers = #tpu.dot_dimension_numbers<[2], [1], [1], [2], [0, 0, 0, 1, 1, 2], [0], [0]>} : vector<2x8x8xbf16>, vector<2x8x8xbf16>, vector<2x8x8xf32> -> vector<2x8x8xf32>
    "tpu.trace_stop"() : () -> ()
    %239 = tpu.concatenate %190, %206, %222, %238 in 2 : vector<2x8x8xf32>, vector<2x8x8xf32>, vector<2x8x8xf32>, vector<2x8x8xf32> -> vector<2x8x32xf32>
    %240 = vector.shape_cast %239 : vector<2x8x32xf32> to vector<16x32xf32>
    %241 = arith.truncf %240 : vector<16x32xf32> to vector<16x32xbf16>
    %c1_84 = arith.constant 1 : index
    %c0_85 = arith.constant 0 : index
    %c0_86 = arith.constant 0 : index
    %242 = vector.load %arg5[%c1_84, %c0_85, %c0_86] : memref<2x32x32xbf16, #tpu.memory_space<vmem>>, vector<1x32x32xbf16>
    %243 = vector.shape_cast %242 : vector<1x32x32xbf16> to vector<32x32xbf16>
    %cst_87 = arith.constant dense<0.000000e+00> : vector<16x32xf32>
    %244 = tpu.matmul %241, %243, %cst_87 {dimension_numbers = #tpu.dot_dimension_numbers<[1], [0], [0], [1], [0, 0, 1, 1], [], []>} : vector<16x32xbf16>, vector<32x32xbf16>, vector<16x32xf32> -> vector<16x32xf32>
    %c1_88 = arith.constant 1 : index
    %c0_89 = arith.constant 0 : index
    %c0_90 = arith.constant 0 : index
    %245 = vector.load %arg8[%c1_88, %c0_89, %c0_90] : memref<2x6x32xf32, #tpu.memory_space<vmem>>, vector<1x6x32xf32>
    %246 = vector.shape_cast %245 : vector<1x6x32xf32> to vector<6x32xf32>
    %247 = vector.extract_strided_slice %246 {offsets = [0, 0], sizes = [1, 32], strides = [1, 1]} : vector<6x32xf32> to vector<1x32xf32>
    %248 = vector.extract_strided_slice %246 {offsets = [1, 0], sizes = [1, 32], strides = [1, 1]} : vector<6x32xf32> to vector<1x32xf32>
    %249 = vector.extract_strided_slice %246 {offsets = [2, 0], sizes = [1, 32], strides = [1, 1]} : vector<6x32xf32> to vector<1x32xf32>
    %250 = vector.extract_strided_slice %246 {offsets = [3, 0], sizes = [1, 32], strides = [1, 1]} : vector<6x32xf32> to vector<1x32xf32>
    %251 = vector.extract_strided_slice %246 {offsets = [4, 0], sizes = [1, 32], strides = [1, 1]} : vector<6x32xf32> to vector<1x32xf32>
    %252 = vector.extract_strided_slice %246 {offsets = [5, 0], sizes = [1, 32], strides = [1, 1]} : vector<6x32xf32> to vector<1x32xf32>
    %c1_91 = arith.constant 1 : index
    %c0_92 = arith.constant 0 : index
    %c0_93 = arith.constant 0 : index
    %253 = vector.load %arg9[%c1_91, %c0_92, %c0_93] : memref<2x1x64xf32, #tpu.memory_space<vmem>>, vector<1x1x64xf32>
    %254 = vector.shape_cast %253 : vector<1x1x64xf32> to vector<1x64xf32>
    %255 = vector.broadcast %247 : vector<1x32xf32> to vector<16x32xf32>
    %256 = arith.addf %244, %255 : vector<16x32xf32>
    %257 = arith.addf %256, %158 : vector<16x32xf32>
    %cst_94 = arith.constant dense<0.000000e+00> : vector<16xf32>
    %258 = vector.multi_reduction <add>, %257, %cst_94 [1] : vector<16x32xf32> to vector<16xf32>
    %259 = vector.shape_cast %258 : vector<16xf32> to vector<16x1xf32>
    %cst_95 = arith.constant 3.200000e+01 : f32
    %260 = vector.broadcast %cst_95 : f32 to vector<16x1xf32>
    %261 = arith.divf %259, %260 : vector<16x1xf32>
    %262 = vector.broadcast %261 : vector<16x1xf32> to vector<16x32xf32>
    %263 = arith.subf %257, %262 : vector<16x32xf32>
    %264 = arith.mulf %263, %263 : vector<16x32xf32>
    %cst_96 = arith.constant dense<0.000000e+00> : vector<16xf32>
    %265 = vector.multi_reduction <add>, %264, %cst_96 [1] : vector<16x32xf32> to vector<16xf32>
    %266 = vector.shape_cast %265 : vector<16xf32> to vector<16x1xf32>
    %cst_97 = arith.constant 3.200000e+01 : f32
    %267 = vector.broadcast %cst_97 : f32 to vector<16x1xf32>
    %268 = arith.divf %266, %267 : vector<16x1xf32>
    %269 = vector.broadcast %261 : vector<16x1xf32> to vector<16x32xf32>
    %270 = arith.subf %257, %269 : vector<16x32xf32>
    %cst_98 = arith.constant 9.99999974E-6 : f32
    %271 = vector.broadcast %cst_98 : f32 to vector<16x1xf32>
    %272 = arith.addf %268, %271 : vector<16x1xf32>
    %273 = math.rsqrt %272 : vector<16x1xf32>
    %274 = vector.broadcast %273 : vector<16x1xf32> to vector<16x32xf32>
    %275 = arith.mulf %270, %274 : vector<16x32xf32>
    %276 = vector.broadcast %248 : vector<1x32xf32> to vector<16x32xf32>
    %277 = arith.mulf %275, %276 : vector<16x32xf32>
    %278 = vector.broadcast %249 : vector<1x32xf32> to vector<16x32xf32>
    %279 = arith.addf %277, %278 : vector<16x32xf32>
    %280 = arith.truncf %279 : vector<16x32xf32> to vector<16x32xbf16>
    %c1_99 = arith.constant 1 : index
    %c0_100 = arith.constant 0 : index
    %c0_101 = arith.constant 0 : index
    %281 = vector.load %arg6[%c1_99, %c0_100, %c0_101] : memref<2x32x64xbf16, #tpu.memory_space<vmem>>, vector<1x32x64xbf16>
    %282 = vector.shape_cast %281 : vector<1x32x64xbf16> to vector<32x64xbf16>
    %cst_102 = arith.constant dense<0.000000e+00> : vector<16x64xf32>
    %283 = tpu.matmul %280, %282, %cst_102 {dimension_numbers = #tpu.dot_dimension_numbers<[1], [0], [0], [1], [0, 0, 1, 1], [], []>} : vector<16x32xbf16>, vector<32x64xbf16>, vector<16x64xf32> -> vector<16x64xf32>
    %284 = vector.broadcast %254 : vector<1x64xf32> to vector<16x64xf32>
    %285 = arith.addf %283, %284 : vector<16x64xf32>
    %cst_103 = arith.constant 0.000000e+00 : f32
    %286 = vector.broadcast %cst_103 : f32 to vector<16x64xf32>
    %287 = arith.maximumf %285, %286 : vector<16x64xf32>
    %288 = arith.truncf %287 : vector<16x64xf32> to vector<16x64xbf16>
    %c1_104 = arith.constant 1 : index
    %c0_105 = arith.constant 0 : index
    %c0_106 = arith.constant 0 : index
    %289 = vector.load %arg7[%c1_104, %c0_105, %c0_106] : memref<2x64x32xbf16, #tpu.memory_space<vmem>>, vector<1x64x32xbf16>
    %290 = vector.shape_cast %289 : vector<1x64x32xbf16> to vector<64x32xbf16>
    %cst_107 = arith.constant dense<0.000000e+00> : vector<16x32xf32>
    %291 = tpu.matmul %288, %290, %cst_107 {dimension_numbers = #tpu.dot_dimension_numbers<[1], [0], [0], [1], [0, 0, 1, 1], [], []>} : vector<16x64xbf16>, vector<64x32xbf16>, vector<16x32xf32> -> vector<16x32xf32>
    %292 = vector.broadcast %252 : vector<1x32xf32> to vector<16x32xf32>
    %293 = arith.addf %291, %292 : vector<16x32xf32>
    %294 = arith.addf %293, %279 : vector<16x32xf32>
    %cst_108 = arith.constant dense<0.000000e+00> : vector<16xf32>
    %295 = vector.multi_reduction <add>, %294, %cst_108 [1] : vector<16x32xf32> to vector<16xf32>
    %296 = vector.shape_cast %295 : vector<16xf32> to vector<16x1xf32>
    %cst_109 = arith.constant 3.200000e+01 : f32
    %297 = vector.broadcast %cst_109 : f32 to vector<16x1xf32>
    %298 = arith.divf %296, %297 : vector<16x1xf32>
    %299 = vector.broadcast %298 : vector<16x1xf32> to vector<16x32xf32>
    %300 = arith.subf %294, %299 : vector<16x32xf32>
    %301 = arith.mulf %300, %300 : vector<16x32xf32>
    %cst_110 = arith.constant dense<0.000000e+00> : vector<16xf32>
    %302 = vector.multi_reduction <add>, %301, %cst_110 [1] : vector<16x32xf32> to vector<16xf32>
    %303 = vector.shape_cast %302 : vector<16xf32> to vector<16x1xf32>
    %cst_111 = arith.constant 3.200000e+01 : f32
    %304 = vector.broadcast %cst_111 : f32 to vector<16x1xf32>
    %305 = arith.divf %303, %304 : vector<16x1xf32>
    %306 = vector.broadcast %298 : vector<16x1xf32> to vector<16x32xf32>
    %307 = arith.subf %294, %306 : vector<16x32xf32>
    %cst_112 = arith.constant 9.99999974E-6 : f32
    %308 = vector.broadcast %cst_112 : f32 to vector<16x1xf32>
    %309 = arith.addf %305, %308 : vector<16x1xf32>
    %310 = math.rsqrt %309 : vector<16x1xf32>
    %311 = vector.broadcast %310 : vector<16x1xf32> to vector<16x32xf32>
    %312 = arith.mulf %307, %311 : vector<16x32xf32>
    %313 = vector.broadcast %250 : vector<1x32xf32> to vector<16x32xf32>
    %314 = arith.mulf %312, %313 : vector<16x32xf32>
    %315 = vector.broadcast %251 : vector<1x32xf32> to vector<16x32xf32>
    %316 = arith.addf %314, %315 : vector<16x32xf32>
    %c0_113 = arith.constant 0 : index
    %c0_114 = arith.constant 0 : index
    %317 = vector.load %arg10[%c0_113, %c0_114] : memref<16x32xf32, #tpu.memory_space<vmem>>, vector<16x32xf32>
    tpu.vector_store %arg10[%c0_113, %c0_114], %316 {strides = array<i32>} : memref<16x32xf32, #tpu.memory_space<vmem>>, vector<16x32xf32>,
    return
  }
  func.func @transform_0(%arg0: i32) -> (i32, i32) {
    %c0_i32 = arith.constant 0 : i32
    %c0_i32_0 = arith.constant 0 : i32
    %c0_i32_1 = arith.constant 0 : i32
    return %c0_i32, %c0_i32_0 : i32, i32
  }
  func.func @transform_1(%arg0: i32) -> (i32, i32, i32) {
    %c0_i32 = arith.constant 0 : i32
    %c0_i32_0 = arith.constant 0 : i32
    %c0_i32_1 = arith.constant 0 : i32
    %c0_i32_2 = arith.constant 0 : i32
    return %c0_i32, %c0_i32_0, %c0_i32_1 : i32, i32, i32
  }
  func.func @transform_2(%arg0: i32) -> (i32, i32, i32) {
    %c0_i32 = arith.constant 0 : i32
    %c0_i32_0 = arith.constant 0 : i32
    %c0_i32_1 = arith.constant 0 : i32
    %c0_i32_2 = arith.constant 0 : i32
    return %c0_i32, %c0_i32_0, %c0_i32_1 : i32, i32, i32
  }
  func.func @transform_3(%arg0: i32) -> (i32, i32, i32) {
    %c0_i32 = arith.constant 0 : i32
    %c0_i32_0 = arith.constant 0 : i32
    %c0_i32_1 = arith.constant 0 : i32
    %c0_i32_2 = arith.constant 0 : i32
    return %c0_i32, %c0_i32_0, %c0_i32_1 : i32, i32, i32
  }
  func.func @transform_4(%arg0: i32) -> (i32, i32, i32) {
    %c0_i32 = arith.constant 0 : i32
    %c0_i32_0 = arith.constant 0 : i32
    %c0_i32_1 = arith.constant 0 : i32
    %c0_i32_2 = arith.constant 0 : i32
    return %c0_i32, %c0_i32_0, %c0_i32_1 : i32, i32, i32
  }
  func.func @transform_5(%arg0: i32) -> (i32, i32, i32) {
    %c0_i32 = arith.constant 0 : i32
    %c0_i32_0 = arith.constant 0 : i32
    %c0_i32_1 = arith.constant 0 : i32
    %c0_i32_2 = arith.constant 0 : i32
    return %c0_i32, %c0_i32_0, %c0_i32_1 : i32, i32, i32
  }
  func.func @transform_6(%arg0: i32) -> (i32, i32, i32) {
    %c0_i32 = arith.constant 0 : i32
    %c0_i32_0 = arith.constant 0 : i32
    %c0_i32_1 = arith.constant 0 : i32
    %c0_i32_2 = arith.constant 0 : i32
    return %c0_i32, %c0_i32_0, %c0_i32_1 : i32, i32, i32
  }
  func.func @transform_7(%arg0: i32) -> (i32, i32, i32) {
    %c0_i32 = arith.constant 0 : i32
    %c0_i32_0 = arith.constant 0 : i32
    %c0_i32_1 = arith.constant 0 : i32
    %c0_i32_2 = arith.constant 0 : i32
    return %c0_i32, %c0_i32_0, %c0_i32_1 : i32, i32, i32
  }
  func.func @transform_8(%arg0: i32) -> (i32, i32, i32) {
    %c0_i32 = arith.constant 0 : i32
    %c0_i32_0 = arith.constant 0 : i32
    %c0_i32_1 = arith.constant 0 : i32
    %c0_i32_2 = arith.constant 0 : i32
    return %c0_i32, %c0_i32_0, %c0_i32_1 : i32, i32, i32
  }
  func.func @transform_9(%arg0: i32) -> (i32, i32) {
    %c0_i32 = arith.constant 0 : i32
    %c0_i32_0 = arith.constant 0 : i32
    %c0_i32_1 = arith.constant 0 : i32
    return %c0_i32, %c0_i32_0 : i32, i32
  }
}

</mosaic_0001>

<llo_original>
// kernel: tpu_custom_call.1
$region0: #{tpu_custom_call.1}
  #allocation0 [shape = 'u32[]', space=smem, size = 0x4, offset = 0x4, fixed_abs, tag = 'smem constant byte address 0x4 - core index']
  #allocation1 [shape = 'u32[144,128]{1,0:T(1,128)}', space=vmem, size = 0x12000, scoped, tag = 'internal scratch']
  %s0 = inlined_call_operand.vmem [shape: f32[16,32], index: 0, kind: input, shape index: {}]
  %s1 = inlined_call_operand.vmem [shape: bf16[2,32,32], index: 1, kind: input, shape index: {}]
  %s2 = inlined_call_operand.vmem [shape: bf16[2,32,32], index: 2, kind: input, shape index: {}]
  %s3 = inlined_call_operand.vmem [shape: bf16[2,32,32], index: 3, kind: input, shape index: {}]
  %s4 = inlined_call_operand.hbm [shape: bf16[2,32,32], index: 4, kind: input, shape index: {}]
  %s5 = inlined_call_operand.hbm [shape: bf16[2,32,64], index: 5, kind: input, shape index: {}]
  %s6 = inlined_call_operand.vmem [shape: bf16[2,64,32], index: 6, kind: input, shape index: {}]
  %s7 = inlined_call_operand.vmem [shape: f32[2,6,32], index: 7, kind: input, shape index: {}]
  %s8 = inlined_call_operand.vmem [shape: f32[2,1,64], index: 8, kind: input, shape index: {}]
  %s9 = inlined_call_operand.hbm [shape: f32[16,32], index: 9, kind: output, shape index: {}]
  %s10 = sld [smem:[#allocation0]]
  $region54: #{tpu_custom_call.1} parent=0
    _
  %s12 = ssub.s32 1, %s10
  %s13 = scalar_select 0, %s12, %s10
  $region1: #{tpu_custom_call.1} parent=0
    #allocation2 [shape = 'u8[16384]{0}', space=vmem, size = 0x4000, scoped, tag = 'input window, operand 4, single buffered']
    #allocation3 [shape = 's32[1]{0}', space=sflag, size = 0x4, scoped, tag = 'scoped memory for tpu_custom_call.1']
    #allocation4 [shape = 's32[1]{0}', space=sflag, size = 0x4, scoped, tag = 'scoped memory for tpu_custom_call.1']
    #allocation5 [shape = 'u8[16384]{0}', space=vmem, size = 0x4000, scoped, tag = 'input window, operand 5, single buffered']
    #allocation6 [shape = 's32[1]{0}', space=sflag, size = 0x4, scoped, tag = 'scoped memory for tpu_custom_call.1']
    #allocation7 [shape = 'u8[8192]{0}', space=vmem, size = 0x2000, scoped, tag = 'output window, operand 0, single buffered']
    %14 = vsyncpa [#allocation3], 0
    %15 = vsyncpa [#allocation6], 0
    %16 = vsyncpa [#allocation4], 0
    // Predicated region
    $region2: #{tpu_custom_call.1} parent=1 // pred_check
      _
    $region3: #{tpu_custom_call.1} parent=1 // pred_check_branch
      %18 = sbr.rel (0) target = $region5
    $region4: #{tpu_custom_call.1} parent=1 // pred_region
      _
    $region5: #{tpu_custom_call.1} parent=1 // pred_fallthru
      _
    // Predicated region
    $region6: #{tpu_custom_call.1} parent=1 // pred_check
      _
    $region7: #{tpu_custom_call.1} parent=1 // pred_check_branch
      %20 = sbr.rel (0) target = $region9
    $region8: #{tpu_custom_call.1} parent=1 // pred_region
      _
    $region9: #{tpu_custom_call.1} parent=1 // pred_fallthru
      _
    // Predicated region
    $region10: #{tpu_custom_call.1} parent=1 // pred_check
      _
    $region11: #{tpu_custom_call.1} parent=1 // pred_check_branch
      %22 = sbr.rel (0) target = $region13
    $region12: #{tpu_custom_call.1} parent=1 // pred_region
      _
    $region13: #{tpu_custom_call.1} parent=1 // pred_fallthru
      _
    // Predicated region
    $region14: #{tpu_custom_call.1} parent=1 // pred_check
      _
    $region15: #{tpu_custom_call.1} parent=1 // pred_check_branch
      %24 = sbr.rel (0) target = $region17
    $region16: #{tpu_custom_call.1} parent=1 // pred_region
      _
    $region17: #{tpu_custom_call.1} parent=1 // pred_fallthru
      _
    // Predicated region
    $region18: #{tpu_custom_call.1} parent=1 // pred_check
      _
    $region19: #{tpu_custom_call.1} parent=1 // pred_check_branch
      %26 = sbr.rel (0) target = $region21
    $region20: #{tpu_custom_call.1} parent=1 // pred_region
      %s28 = ssub.s32 512, 512
      %29 = vsyncadd [#allocation3], %s28
      %s30 = sshll.u32 [#allocation2], 4
      %s31 = int_to_ptr.vmem [resolvable:$true] %s30
      %36 = dma.hbm_to_vmem [thread:$0]  %s4, 512, %s31, [#allocation3], 64, 64, 4
    $region21: #{tpu_custom_call.1} parent=1 // pred_fallthru
      _
    // Predicated region
    $region22: #{tpu_custom_call.1} parent=1 // pred_check
      _
    $region23: #{tpu_custom_call.1} parent=1 // pred_check_branch
      %38 = sbr.rel (0) target = $region25
    $region24: #{tpu_custom_call.1} parent=1 // pred_region
      %s40 = ssub.s32 512, 512
      %41 = vsyncadd [#allocation6], %s40
      %s42 = sshll.u32 [#allocation5], 4
      %s43 = int_to_ptr.vmem [resolvable:$true] %s42
      %48 = dma.hbm_to_vmem [thread:$0]  %s5, 512, %s43, [#allocation6], 64, 64, 4
    $region25: #{tpu_custom_call.1} parent=1 // pred_fallthru
      _
    // Predicated region
    $region26: #{tpu_custom_call.1} parent=1 // pred_check
      _
    $region27: #{tpu_custom_call.1} parent=1 // pred_check_branch
      %50 = sbr.rel (0) target = $region29
    $region28: #{tpu_custom_call.1} parent=1 // pred_region
      _
    $region29: #{tpu_custom_call.1} parent=1 // pred_fallthru
      _
    // Predicated region
    $region30: #{tpu_custom_call.1} parent=1 // pred_check
      _
    $region31: #{tpu_custom_call.1} parent=1 // pred_check_branch
      %52 = sbr.rel (0) target = $region33
    $region32: #{tpu_custom_call.1} parent=1 // pred_region
      _
    $region33: #{tpu_custom_call.1} parent=1 // pred_fallthru
      _
    // Predicated region
    $region34: #{tpu_custom_call.1} parent=1 // pred_check
      _
    $region35: #{tpu_custom_call.1} parent=1 // pred_check_branch
      %54 = sbr.rel (0) target = $region37
    $region36: #{tpu_custom_call.1} parent=1 // pred_region
      _
    $region37: #{tpu_custom_call.1} parent=1 // pred_fallthru
      _
    // Predicated region
    $region38: #{tpu_custom_call.1} parent=1 // pred_check
      _
    $region39: #{tpu_custom_call.1} parent=1 // pred_check_branch
      %56 = sbr.rel (0) target = $region41
    $region40: #{tpu_custom_call.1} parent=1 // pred_region
      %57 = dma.done [#allocation3], 512
    $region41: #{tpu_custom_call.1} parent=1 // pred_fallthru
      _
    // Predicated region
    $region42: #{tpu_custom_call.1} parent=1 // pred_check
      _
    $region43: #{tpu_custom_call.1} parent=1 // pred_check_branch
      %59 = sbr.rel (0) target = $region45
    $region44: #{tpu_custom_call.1} parent=1 // pred_region
      %60 = dma.done [#allocation6], 512
    $region45: #{tpu_custom_call.1} parent=1 // pred_fallthru
      _
    %v62 = vld [vmem:[%s0] sm:$0xff]
    %v63 = vld [vmem:[%s0 + $0x8] sm:$0xff]
    %v64 = vpack.c.bf16 %v63, %v62
    %v65 = vld [vmem:[%s1] sm:$0xf]
    %v66 = vld [vmem:[%s1 + $0x4] sm:$0xf]
    %v67 = vld [vmem:[%s1 + $0x8] sm:$0xf]
    %v68 = vld [vmem:[%s1 + $0xc] sm:$0xf]
    %v73 = vunpack.c.l.b16 %v65
    %v74 = vunpack.c.l.b16 %v66
    %v75 = vunpack.c.l.b16 %v67
    %v76 = vunpack.c.l.b16 %v68
    %v77 = vpack.c.b16 %v74, %v73
    %v78 = vpack.c.b16 %v76, %v75
    %vm81 = vcmask 261120
    %v83 = vsel %vm81, %v64, 0
    %85 = vmatprep.subr.bf16.mxu0 0
    %86 = vmatpush1.bf16.msra.mxu0 %v77
    %87 = vmatprep.subr.bf16.mxu0 0
    %88 = vmatpush1.bf16.msra.mxu0 %v78
    %89 = vmatprep.subr.bf16.mxu0 0
    %90 = vmatpush1.bf16.msra.mxu0 0
    %91 = vmatprep.subr.bf16.mxu0 0
    %92 = vmatpush1.bf16.msra.mxu0 0
    %93 = vmatprep.subr.bf16.mxu0 0
    %94 = vmatpush1.bf16.msra.mxu0 0
    %95 = vmatprep.subr.bf16.mxu0 0
    %96 = vmatpush1.bf16.msra.mxu0 0
    %97 = vmatprep.subr.bf16.mxu0 0
    %98 = vmatpush1.bf16.msra.mxu0 0
    %99 = vmatprep.subr.bf16.mxu0 0
    %100 = vmatpush1.bf16.msra.mxu0 0
    %101 = vmatprep.subr.bf16.mxu0 0
    %102 = vmatpush1.bf16.msra.mxu0 0
    %103 = vmatprep.subr.bf16.mxu0 0
    %104 = vmatpush1.bf16.msra.mxu0 0
    %105 = vmatprep.subr.bf16.mxu0 0
    %106 = vmatpush1.bf16.msra.mxu0 0
    %107 = vmatprep.subr.bf16.mxu0 0
    %108 = vmatpush1.bf16.msra.mxu0 0
    %109 = vmatprep.subr.bf16.mxu0 0
    %110 = vmatpush1.bf16.msra.mxu0 0
    %111 = vmatprep.subr.bf16.mxu0 0
    %112 = vmatpush1.bf16.msra.mxu0 0
    %113 = vmatprep.subr.bf16.mxu0 0
    %114 = vmatpush1.bf16.msra.mxu0 0
    %115 = vmatprep.subr.bf16.mxu0 0
    %116 = vmatpush1.bf16.msra.mxu0 0
    %117 = vmatprep.mubr.bf16.mxu0 0
    %118 = vmatmul.mubr.bf16.gmra.mrb[0].mxu0 %v83
    %v119 = vpop.f32.mrb[0].mxu0
    %v120 = vadd.f32 0.0, %v119
    %v121 = vpop.f32.mrb[0].mxu0
    %v122 = vpop.f32.mrb[0].mxu0
    %v123 = vadd.f32 0.0, %v122
    %v124 = vpop.f32.mrb[0].mxu0
    %125 = vdwg.mxu0
    %v126 = vld [vmem:[%s2] sm:$0xf]
    %v127 = vld [vmem:[%s2 + $0x4] sm:$0xf]
    %v128 = vld [vmem:[%s2 + $0x8] sm:$0xf]
    %v129 = vld [vmem:[%s2 + $0xc] sm:$0xf]
    %v134 = vunpack.c.l.b16 %v126
    %v135 = vunpack.c.l.b16 %v127
    %v136 = vunpack.c.l.b16 %v128
    %v137 = vunpack.c.l.b16 %v129
    %v138 = vpack.c.b16 %v135, %v134
    %v139 = vpack.c.b16 %v137, %v136
    %142 = vmatprep.subr.bf16.mxu0 0
    %143 = vmatpush1.bf16.msra.mxu0 %v138
    %144 = vmatprep.subr.bf16.mxu0 0
    %145 = vmatpush1.bf16.msra.mxu0 %v139
    %146 = vmatprep.subr.bf16.mxu0 0
    %147 = vmatpush1.bf16.msra.mxu0 0
    %148 = vmatprep.subr.bf16.mxu0 0
    %149 = vmatpush1.bf16.msra.mxu0 0
    %150 = vmatprep.subr.bf16.mxu0 0
    %151 = vmatpush1.bf16.msra.mxu0 0
    %152 = vmatprep.subr.bf16.mxu0 0
    %153 = vmatpush1.bf16.msra.mxu0 0
    %154 = vmatprep.subr.bf16.mxu0 0
    %155 = vmatpush1.bf16.msra.mxu0 0
    %156 = vmatprep.subr.bf16.mxu0 0
    %157 = vmatpush1.bf16.msra.mxu0 0
    %158 = vmatprep.subr.bf16.mxu0 0
    %159 = vmatpush1.bf16.msra.mxu0 0
    %160 = vmatprep.subr.bf16.mxu0 0
    %161 = vmatpush1.bf16.msra.mxu0 0
    %162 = vmatprep.subr.bf16.mxu0 0
    %163 = vmatpush1.bf16.msra.mxu0 0
    %164 = vmatprep.subr.bf16.mxu0 0
    %165 = vmatpush1.bf16.msra.mxu0 0
    %166 = vmatprep.subr.bf16.mxu0 0
    %167 = vmatpush1.bf16.msra.mxu0 0
    %168 = vmatprep.subr.bf16.mxu0 0
    %169 = vmatpush1.bf16.msra.mxu0 0
    %170 = vmatprep.subr.bf16.mxu0 0
    %171 = vmatpush1.bf16.msra.mxu0 0
    %172 = vmatprep.subr.bf16.mxu0 0
    %173 = vmatpush1.bf16.msra.mxu0 0
    %174 = vmatprep.mubr.bf16.mxu0 0
    %175 = vmatmul.mubr.bf16.gmra.mrb[0].mxu0 %v83
    %v176 = vpop.f32.mrb[0].mxu0
    %v177 = vadd.f32 0.0, %v176
    %v178 = vpop.f32.mrb[0].mxu0
    %v179 = vpop.f32.mrb[0].mxu0
    %v180 = vadd.f32 0.0, %v179
    %v181 = vpop.f32.mrb[0].mxu0
    %182 = vdwg.mxu0
    %v183 = vld [vmem:[%s3] sm:$0xf]
    %v184 = vld [vmem:[%s3 + $0x4] sm:$0xf]
    %v185 = vld [vmem:[%s3 + $0x8] sm:$0xf]
    %v186 = vld [vmem:[%s3 + $0xc] sm:$0xf]
    %v191 = vunpack.c.l.b16 %v183
    %v192 = vunpack.c.l.b16 %v184
    %v193 = vunpack.c.l.b16 %v185
    %v194 = vunpack.c.l.b16 %v186
    %v195 = vpack.c.b16 %v192, %v191
    %v196 = vpack.c.b16 %v194, %v193
    %199 = vmatprep.subr.bf16.mxu0 0
    %200 = vmatpush1.bf16.msra.mxu0 %v195
    %201 = vmatprep.subr.bf16.mxu0 0
    %202 = vmatpush1.bf16.msra.mxu0 %v196
    %203 = vmatprep.subr.bf16.mxu0 0
    %204 = vmatpush1.bf16.msra.mxu0 0
    %205 = vmatprep.subr.bf16.mxu0 0
    %206 = vmatpush1.bf16.msra.mxu0 0
    %207 = vmatprep.subr.bf16.mxu0 0
    %208 = vmatpush1.bf16.msra.mxu0 0
    %209 = vmatprep.subr.bf16.mxu0 0
    %210 = vmatpush1.bf16.msra.mxu0 0
    %211 = vmatprep.subr.bf16.mxu0 0
    %212 = vmatpush1.bf16.msra.mxu0 0
    %213 = vmatprep.subr.bf16.mxu0 0
    %214 = vmatpush1.bf16.msra.mxu0 0
    %215 = vmatprep.subr.bf16.mxu0 0
    %216 = vmatpush1.bf16.msra.mxu0 0
    %217 = vmatprep.subr.bf16.mxu0 0
    %218 = vmatpush1.bf16.msra.mxu0 0
    %219 = vmatprep.subr.bf16.mxu0 0
    %220 = vmatpush1.bf16.msra.mxu0 0
    %221 = vmatprep.subr.bf16.mxu0 0
    %222 = vmatpush1.bf16.msra.mxu0 0
    %223 = vmatprep.subr.bf16.mxu0 0
    %224 = vmatpush1.bf16.msra.mxu0 0
    %225 = vmatprep.subr.bf16.mxu0 0
    %226 = vmatpush1.bf16.msra.mxu0 0
    %227 = vmatprep.subr.bf16.mxu0 0
    %228 = vmatpush1.bf16.msra.mxu0 0
    %229 = vmatprep.subr.bf16.mxu0 0
    %230 = vmatpush1.bf16.msra.mxu0 0
    %231 = vmatprep.mubr.bf16.mxu0 0
    %232 = vmatmul.mubr.bf16.gmra.mrb[0].mxu0 %v83
    %v233 = vpop.f32.mrb[0].mxu0
    %v234 = vadd.f32 0.0, %v233
    %v235 = vpop.f32.mrb[0].mxu0
    %v236 = vpop.f32.mrb[0].mxu0
    %v237 = vadd.f32 0.0, %v236
    %v238 = vpop.f32.mrb[0].mxu0
    %239 = vdwg.mxu0
    %v240 = vpack.c.bf16 %v120, %v120
    %v241 = vpack.c.bf16 %v123, %v123
    %v242 = vpack.c.bf16 %v177, %v177
    %v243 = vpack.c.bf16 %v180, %v180
    %v244 = vpack.c.bf16 %v234, %v234
    %v245 = vpack.c.bf16 %v237, %v237
    %vm246 = vcmask 64512
    %v248 = vsel %vm246, %v240, 0
    %v251 = vsel %vm246, %v242, 0
    %253 = vmatprep.subr.bf16.mxu0 0
    %254 = vmatpush1.bf16.xpose.msra.mxu0 %v251
    %255 = vmatprep.subr.bf16.mxu0 0
    %256 = vmatpush1.bf16.xpose.msra.mxu0 0
    %257 = vmatprep.subr.bf16.mxu0 0
    %258 = vmatpush1.bf16.xpose.msra.mxu0 0
    %259 = vmatprep.subr.bf16.mxu0 0
    %260 = vmatpush1.bf16.xpose.msra.mxu0 0
    %261 = vmatprep.subr.bf16.mxu0 0
    %262 = vmatpush1.bf16.xpose.msra.mxu0 0
    %263 = vmatprep.subr.bf16.mxu0 0
    %264 = vmatpush1.bf16.xpose.msra.mxu0 0
    %265 = vmatprep.subr.bf16.mxu0 0
    %266 = vmatpush1.bf16.xpose.msra.mxu0 0
    %267 = vmatprep.subr.bf16.mxu0 0
    %268 = vmatpush1.bf16.xpose.msra.mxu0 0
    %269 = vmatprep.subr.bf16.mxu0 0
    %270 = vmatpush1.bf16.xpose.msra.mxu0 0
    %271 = vmatprep.subr.bf16.mxu0 0
    %272 = vmatpush1.bf16.xpose.msra.mxu0 0
    %273 = vmatprep.subr.bf16.mxu0 0
    %274 = vmatpush1.bf16.xpose.msra.mxu0 0
    %275 = vmatprep.subr.bf16.mxu0 0
    %276 = vmatpush1.bf16.xpose.msra.mxu0 0
    %277 = vmatprep.subr.bf16.mxu0 0
    %278 = vmatpush1.bf16.xpose.msra.mxu0 0
    %279 = vmatprep.subr.bf16.mxu0 0
    %280 = vmatpush1.bf16.xpose.msra.mxu0 0
    %281 = vmatprep.subr.bf16.mxu0 0
    %282 = vmatpush1.bf16.xpose.msra.mxu0 0
    %283 = vmatprep.subr.bf16.mxu0 0
    %284 = vmatpush1.bf16.xpose.msra.mxu0 0
    %285 = vmatprep.mubr.bf16.mxu0 0
    %286 = vmatmul.mubr.bf16.gmra.mrb[0].mxu0 %v248
    %v287 = vpop.f32.mrb[0].mxu0
    %v288 = vadd.f32 0.0, %v287
    %v289 = vpop.f32.mrb[0].mxu0
    %v290 = vpop.f32.mrb[0].mxu0
    %v291 = vpop.f32.mrb[0].mxu0
    %292 = vdwg.mxu0
    %v294 = vsel %vm246, %v241, 0
    %v297 = vsel %vm246, %v243, 0
    %299 = vmatprep.subr.bf16.mxu0 0
    %300 = vmatpush1.bf16.xpose.msra.mxu0 %v297
    %301 = vmatprep.subr.bf16.mxu0 0
    %302 = vmatpush1.bf16.xpose.msra.mxu0 0
    %303 = vmatprep.subr.bf16.mxu0 0
    %304 = vmatpush1.bf16.xpose.msra.mxu0 0
    %305 = vmatprep.subr.bf16.mxu0 0
    %306 = vmatpush1.bf16.xpose.msra.mxu0 0
    %307 = vmatprep.subr.bf16.mxu0 0
    %308 = vmatpush1.bf16.xpose.msra.mxu0 0
    %309 = vmatprep.subr.bf16.mxu0 0
    %310 = vmatpush1.bf16.xpose.msra.mxu0 0
    %311 = vmatprep.subr.bf16.mxu0 0
    %312 = vmatpush1.bf16.xpose.msra.mxu0 0
    %313 = vmatprep.subr.bf16.mxu0 0
    %314 = vmatpush1.bf16.xpose.msra.mxu0 0
    %315 = vmatprep.subr.bf16.mxu0 0
    %316 = vmatpush1.bf16.xpose.msra.mxu0 0
    %317 = vmatprep.subr.bf16.mxu0 0
    %318 = vmatpush1.bf16.xpose.msra.mxu0 0
    %319 = vmatprep.subr.bf16.mxu0 0
    %320 = vmatpush1.bf16.xpose.msra.mxu0 0
    %321 = vmatprep.subr.bf16.mxu0 0
    %322 = vmatpush1.bf16.xpose.msra.mxu0 0
    %323 = vmatprep.subr.bf16.mxu0 0
    %324 = vmatpush1.bf16.xpose.msra.mxu0 0
    %325 = vmatprep.subr.bf16.mxu0 0
    %326 = vmatpush1.bf16.xpose.msra.mxu0 0
    %327 = vmatprep.subr.bf16.mxu0 0
    %328 = vmatpush1.bf16.xpose.msra.mxu0 0
    %329 = vmatprep.subr.bf16.mxu0 0
    %330 = vmatpush1.bf16.xpose.msra.mxu0 0
    %331 = vmatprep.mubr.bf16.mxu0 0
    %332 = vmatmul.mubr.bf16.gmra.mrb[0].mxu0 %v294
    %v333 = vpop.f32.mrb[0].mxu0
    %v334 = vadd.f32 0.0, %v333
    %v335 = vpop.f32.mrb[0].mxu0
    %v336 = vpop.f32.mrb[0].mxu0
    %v337 = vpop.f32.mrb[0].mxu0
    %338 = vdwg.mxu0
    %v339 = vsel %vm246, %v288, -inf
    %340 = vmax.xlane.f32.xlu0 %v339
    %v341 = vpop.xlane.xlu0 %340
    %v342 = vsel %vm246, %v334, -inf
    %343 = vmax.xlane.f32.xlu0 %v342
    %v344 = vpop.xlane.xlu0 %343
    %v345 = vsub.f32 %v288, %v341
    %v346 = vsub.f32 %v334, %v344
    %v347 = vmul.f32 %v345, 1.442695
    %v348 = vpow.pop %v347
    %v349 = vmul.f32 %v346, 1.442695
    %v350 = vpow.pop %v349
    %v351 = vsel %vm246, %v348, 0.0
    %352 = vadd.xlane.f32.xlu0 %v351
    %v353 = vpop.xlane.xlu0 %352
    %v354 = vsel %vm246, %v350, 0.0
    %355 = vadd.xlane.f32.xlu0 %v354
    %v356 = vpop.xlane.xlu0 %355
    %v357 = vrcp.pop %v353
    %v358 = vrcp.pop %v356
    %v359 = vmul.f32 %v348, %v357
    %v360 = vmul.f32 %v350, %v358
    %v361 = vpack.c.bf16 %v359, %v359
    %v362 = vpack.c.bf16 %v360, %v360
    %v364 = vsel %vm246, %v361, 0
    %vm366 = vcmask 1043456
    %v368 = vsel %vm366, %v244, 0
    %370 = vmatprep.subr.bf16.mxu0 0
    %371 = vmatpush1.bf16.msra.mxu0 %v368
    %372 = vmatprep.subr.bf16.mxu0 0
    %373 = vmatpush1.bf16.msra.mxu0 0
    %374 = vmatprep.subr.bf16.mxu0 0
    %375 = vmatpush1.bf16.msra.mxu0 0
    %376 = vmatprep.subr.bf16.mxu0 0
    %377 = vmatpush1.bf16.msra.mxu0 0
    %378 = vmatprep.subr.bf16.mxu0 0
    %379 = vmatpush1.bf16.msra.mxu0 0
    %380 = vmatprep.subr.bf16.mxu0 0
    %381 = vmatpush1.bf16.msra.mxu0 0
    %382 = vmatprep.subr.bf16.mxu0 0
    %383 = vmatpush1.bf16.msra.mxu0 0
    %384 = vmatprep.subr.bf16.mxu0 0
    %385 = vmatpush1.bf16.msra.mxu0 0
    %386 = vmatprep.subr.bf16.mxu0 0
    %387 = vmatpush1.bf16.msra.mxu0 0
    %388 = vmatprep.subr.bf16.mxu0 0
    %389 = vmatpush1.bf16.msra.mxu0 0
    %390 = vmatprep.subr.bf16.mxu0 0
    %391 = vmatpush1.bf16.msra.mxu0 0
    %392 = vmatprep.subr.bf16.mxu0 0
    %393 = vmatpush1.bf16.msra.mxu0 0
    %394 = vmatprep.subr.bf16.mxu0 0
    %395 = vmatpush1.bf16.msra.mxu0 0
    %396 = vmatprep.subr.bf16.mxu0 0
    %397 = vmatpush1.bf16.msra.mxu0 0
    %398 = vmatprep.subr.bf16.mxu0 0
    %399 = vmatpush1.bf16.msra.mxu0 0
    %400 = vmatprep.subr.bf16.mxu0 0
    %401 = vmatpush1.bf16.msra.mxu0 0
    %402 = vmatprep.mubr.bf16.mxu0 0
    %403 = vmatmul.mubr.bf16.gmra.mrb[0].mxu0 %v364
    %v404 = vpop.f32.mrb[0].mxu0
    %v405 = vadd.f32 0.0, %v404
    %v406 = vpop.f32.mrb[0].mxu0
    %v407 = vpop.f32.mrb[0].mxu0
    %v408 = vpop.f32.mrb[0].mxu0
    %409 = vdwg.mxu0
    %v411 = vsel %vm246, %v362, 0
    %v414 = vsel %vm366, %v245, 0
    %416 = vmatprep.subr.bf16.mxu0 0
    %417 = vmatpush1.bf16.msra.mxu0 %v414
    %418 = vmatprep.subr.bf16.mxu0 0
    %419 = vmatpush1.bf16.msra.mxu0 0
    %420 = vmatprep.subr.bf16.mxu0 0
    %421 = vmatpush1.bf16.msra.mxu0 0
    %422 = vmatprep.subr.bf16.mxu0 0
    %423 = vmatpush1.bf16.msra.mxu0 0
    %424 = vmatprep.subr.bf16.mxu0 0
    %425 = vmatpush1.bf16.msra.mxu0 0
    %426 = vmatprep.subr.bf16.mxu0 0
    %427 = vmatpush1.bf16.msra.mxu0 0
    %428 = vmatprep.subr.bf16.mxu0 0
    %429 = vmatpush1.bf16.msra.mxu0 0
    %430 = vmatprep.subr.bf16.mxu0 0
    %431 = vmatpush1.bf16.msra.mxu0 0
    %432 = vmatprep.subr.bf16.mxu0 0
    %433 = vmatpush1.bf16.msra.mxu0 0
    %434 = vmatprep.subr.bf16.mxu0 0
    %435 = vmatpush1.bf16.msra.mxu0 0
    %436 = vmatprep.subr.bf16.mxu0 0
    %437 = vmatpush1.bf16.msra.mxu0 0
    %438 = vmatprep.subr.bf16.mxu0 0
    %439 = vmatpush1.bf16.msra.mxu0 0
    %440 = vmatprep.subr.bf16.mxu0 0
    %441 = vmatpush1.bf16.msra.mxu0 0
    %442 = vmatprep.subr.bf16.mxu0 0
    %443 = vmatpush1.bf16.msra.mxu0 0
    %444 = vmatprep.subr.bf16.mxu0 0
    %445 = vmatpush1.bf16.msra.mxu0 0
    %446 = vmatprep.subr.bf16.mxu0 0
    %447 = vmatpush1.bf16.msra.mxu0 0
    %448 = vmatprep.mubr.bf16.mxu0 0
    %449 = vmatmul.mubr.bf16.gmra.mrb[0].mxu0 %v411
    %v450 = vpop.f32.mrb[0].mxu0
    %v451 = vadd.f32 0.0, %v450
    %v452 = vpop.f32.mrb[0].mxu0
    %v453 = vpop.f32.mrb[0].mxu0
    %v454 = vpop.f32.mrb[0].mxu0
    %455 = vdwg.mxu0
    %457 = vrot.lane.b32.xlu0 %v240, 120
    %v458 = vpop.permute.xlu0 %457
    %460 = vrot.lane.b32.xlu0 %v242, 120
    %v461 = vpop.permute.xlu0 %460
    %v463 = vsel %vm246, %v458, 0
    %v466 = vsel %vm246, %v461, 0
    %468 = vmatprep.subr.bf16.mxu0 0
    %469 = vmatpush1.bf16.xpose.msra.mxu0 %v466
    %470 = vmatprep.subr.bf16.mxu0 0
    %471 = vmatpush1.bf16.xpose.msra.mxu0 0
    %472 = vmatprep.subr.bf16.mxu0 0
    %473 = vmatpush1.bf16.xpose.msra.mxu0 0
    %474 = vmatprep.subr.bf16.mxu0 0
    %475 = vmatpush1.bf16.xpose.msra.mxu0 0
    %476 = vmatprep.subr.bf16.mxu0 0
    %477 = vmatpush1.bf16.xpose.msra.mxu0 0
    %478 = vmatprep.subr.bf16.mxu0 0
    %479 = vmatpush1.bf16.xpose.msra.mxu0 0
    %480 = vmatprep.subr.bf16.mxu0 0
    %481 = vmatpush1.bf16.xpose.msra.mxu0 0
    %482 = vmatprep.subr.bf16.mxu0 0
    %483 = vmatpush1.bf16.xpose.msra.mxu0 0
    %484 = vmatprep.subr.bf16.mxu0 0
    %485 = vmatpush1.bf16.xpose.msra.mxu0 0
    %486 = vmatprep.subr.bf16.mxu0 0
    %487 = vmatpush1.bf16.xpose.msra.mxu0 0
    %488 = vmatprep.subr.bf16.mxu0 0
    %489 = vmatpush1.bf16.xpose.msra.mxu0 0
    %490 = vmatprep.subr.bf16.mxu0 0
    %491 = vmatpush1.bf16.xpose.msra.mxu0 0
    %492 = vmatprep.subr.bf16.mxu0 0
    %493 = vmatpush1.bf16.xpose.msra.mxu0 0
    %494 = vmatprep.subr.bf16.mxu0 0
    %495 = vmatpush1.bf16.xpose.msra.mxu0 0
    %496 = vmatprep.subr.bf16.mxu0 0
    %497 = vmatpush1.bf16.xpose.msra.mxu0 0
    %498 = vmatprep.subr.bf16.mxu0 0
    %499 = vmatpush1.bf16.xpose.msra.mxu0 0
    %500 = vmatprep.mubr.bf16.mxu0 0
    %501 = vmatmul.mubr.bf16.gmra.mrb[0].mxu0 %v463
    %v502 = vpop.f32.mrb[0].mxu0
    %v503 = vadd.f32 0.0, %v502
    %v504 = vpop.f32.mrb[0].mxu0
    %v505 = vpop.f32.mrb[0].mxu0
    %v506 = vpop.f32.mrb[0].mxu0
    %507 = vdwg.mxu0
    %509 = vrot.lane.b32.xlu0 %v241, 120
    %v510 = vpop.permute.xlu0 %509
    %512 = vrot.lane.b32.xlu0 %v243, 120
    %v513 = vpop.permute.xlu0 %512
    %v515 = vsel %vm246, %v510, 0
    %v518 = vsel %vm246, %v513, 0
    %520 = vmatprep.subr.bf16.mxu0 0
    %521 = vmatpush1.bf16.xpose.msra.mxu0 %v518
    %522 = vmatprep.subr.bf16.mxu0 0
    %523 = vmatpush1.bf16.xpose.msra.mxu0 0
    %524 = vmatprep.subr.bf16.mxu0 0
    %525 = vmatpush1.bf16.xpose.msra.mxu0 0
    %526 = vmatprep.subr.bf16.mxu0 0
    %527 = vmatpush1.bf16.xpose.msra.mxu0 0
    %528 = vmatprep.subr.bf16.mxu0 0
    %529 = vmatpush1.bf16.xpose.msra.mxu0 0
    %530 = vmatprep.subr.bf16.mxu0 0
    %531 = vmatpush1.bf16.xpose.msra.mxu0 0
    %532 = vmatprep.subr.bf16.mxu0 0
    %533 = vmatpush1.bf16.xpose.msra.mxu0 0
    %534 = vmatprep.subr.bf16.mxu0 0
    %535 = vmatpush1.bf16.xpose.msra.mxu0 0
    %536 = vmatprep.subr.bf16.mxu0 0
    %537 = vmatpush1.bf16.xpose.msra.mxu0 0
    %538 = vmatprep.subr.bf16.mxu0 0
    %539 = vmatpush1.bf16.xpose.msra.mxu0 0
    %540 = vmatprep.subr.bf16.mxu0 0
    %541 = vmatpush1.bf16.xpose.msra.mxu0 0
    %542 = vmatprep.subr.bf16.mxu0 0
    %543 = vmatpush1.bf16.xpose.msra.mxu0 0
    %544 = vmatprep.subr.bf16.mxu0 0
    %545 = vmatpush1.bf16.xpose.msra.mxu0 0
    %546 = vmatprep.subr.bf16.mxu0 0
    %547 = vmatpush1.bf16.xpose.msra.mxu0 0
    %548 = vmatprep.subr.bf16.mxu0 0
    %549 = vmatpush1.bf16.xpose.msra.mxu0 0
    %550 = vmatprep.subr.bf16.mxu0 0
    %551 = vmatpush1.bf16.xpose.msra.mxu0 0
    %552 = vmatprep.mubr.bf16.mxu0 0
    %553 = vmatmul.mubr.bf16.gmra.mrb[0].mxu0 %v515
    %v554 = vpop.f32.mrb[0].mxu0
    %v555 = vadd.f32 0.0, %v554
    %v556 = vpop.f32.mrb[0].mxu0
    %v557 = vpop.f32.mrb[0].mxu0
    %v558 = vpop.f32.mrb[0].mxu0
    %559 = vdwg.mxu0
    %v560 = vsel %vm246, %v503, -inf
    %561 = vmax.xlane.f32.xlu0 %v560
    %v562 = vpop.xlane.xlu0 %561
    %v563 = vsel %vm246, %v555, -inf
    %564 = vmax.xlane.f32.xlu0 %v563
    %v565 = vpop.xlane.xlu0 %564
    %v566 = vsub.f32 %v503, %v562
    %v567 = vsub.f32 %v555, %v565
    %v568 = vmul.f32 %v566, 1.442695
    %v569 = vpow.pop %v568
    %v570 = vmul.f32 %v567, 1.442695
    %v571 = vpow.pop %v570
    %v572 = vsel %vm246, %v569, 0.0
    %573 = vadd.xlane.f32.xlu0 %v572
    %v574 = vpop.xlane.xlu0 %573
    %v575 = vsel %vm246, %v571, 0.0
    %576 = vadd.xlane.f32.xlu0 %v575
    %v577 = vpop.xlane.xlu0 %576
    %v578 = vrcp.pop %v574
    %v579 = vrcp.pop %v577
    %v580 = vmul.f32 %v569, %v578
    %v581 = vmul.f32 %v571, %v579
    %v582 = vpack.c.bf16 %v580, %v580
    %v583 = vpack.c.bf16 %v581, %v581
    %585 = vrot.lane.b32.xlu0 %v244, 120
    %v586 = vpop.permute.xlu0 %585
    %v588 = vsel %vm246, %v582, 0
    %v591 = vsel %vm366, %v586, 0
    %593 = vmatprep.subr.bf16.mxu0 0
    %594 = vmatpush1.bf16.msra.mxu0 %v591
    %595 = vmatprep.subr.bf16.mxu0 0
    %596 = vmatpush1.bf16.msra.mxu0 0
    %597 = vmatprep.subr.bf16.mxu0 0
    %598 = vmatpush1.bf16.msra.mxu0 0
    %599 = vmatprep.subr.bf16.mxu0 0
    %600 = vmatpush1.bf16.msra.mxu0 0
    %601 = vmatprep.subr.bf16.mxu0 0
    %602 = vmatpush1.bf16.msra.mxu0 0
    %603 = vmatprep.subr.bf16.mxu0 0
    %604 = vmatpush1.bf16.msra.mxu0 0
    %605 = vmatprep.subr.bf16.mxu0 0
    %606 = vmatpush1.bf16.msra.mxu0 0
    %607 = vmatprep.subr.bf16.mxu0 0
    %608 = vmatpush1.bf16.msra.mxu0 0
    %609 = vmatprep.subr.bf16.mxu0 0
    %610 = vmatpush1.bf16.msra.mxu0 0
    %611 = vmatprep.subr.bf16.mxu0 0
    %612 = vmatpush1.bf16.msra.mxu0 0
    %613 = vmatprep.subr.bf16.mxu0 0
    %614 = vmatpush1.bf16.msra.mxu0 0
    %615 = vmatprep.subr.bf16.mxu0 0
    %616 = vmatpush1.bf16.msra.mxu0 0
    %617 = vmatprep.subr.bf16.mxu0 0
    %618 = vmatpush1.bf16.msra.mxu0 0
    %619 = vmatprep.subr.bf16.mxu0 0
    %620 = vmatpush1.bf16.msra.mxu0 0
    %621 = vmatprep.subr.bf16.mxu0 0
    %622 = vmatpush1.bf16.msra.mxu0 0
    %623 = vmatprep.subr.bf16.mxu0 0
    %624 = vmatpush1.bf16.msra.mxu0 0
    %625 = vmatprep.mubr.bf16.mxu0 0
    %626 = vmatmul.mubr.bf16.gmra.mrb[0].mxu0 %v588
    %v627 = vpop.f32.mrb[0].mxu0
    %v628 = vadd.f32 0.0, %v627
    %v629 = vpop.f32.mrb[0].mxu0
    %v630 = vpop.f32.mrb[0].mxu0
    %v631 = vpop.f32.mrb[0].mxu0
    %632 = vdwg.mxu0
    %634 = vrot.lane.b32.xlu0 %v245, 120
    %v635 = vpop.permute.xlu0 %634
    %v637 = vsel %vm246, %v583, 0
    %v640 = vsel %vm366, %v635, 0
    %642 = vmatprep.subr.bf16.mxu0 0
    %643 = vmatpush1.bf16.msra.mxu0 %v640
    %644 = vmatprep.subr.bf16.mxu0 0
    %645 = vmatpush1.bf16.msra.mxu0 0
    %646 = vmatprep.subr.bf16.mxu0 0
    %647 = vmatpush1.bf16.msra.mxu0 0
    %648 = vmatprep.subr.bf16.mxu0 0
    %649 = vmatpush1.bf16.msra.mxu0 0
    %650 = vmatprep.subr.bf16.mxu0 0
    %651 = vmatpush1.bf16.msra.mxu0 0
    %652 = vmatprep.subr.bf16.mxu0 0
    %653 = vmatpush1.bf16.msra.mxu0 0
    %654 = vmatprep.subr.bf16.mxu0 0
    %655 = vmatpush1.bf16.msra.mxu0 0
    %656 = vmatprep.subr.bf16.mxu0 0
    %657 = vmatpush1.bf16.msra.mxu0 0
    %658 = vmatprep.subr.bf16.mxu0 0
    %659 = vmatpush1.bf16.msra.mxu0 0
    %660 = vmatprep.subr.bf16.mxu0 0
    %661 = vmatpush1.bf16.msra.mxu0 0
    %662 = vmatprep.subr.bf16.mxu0 0
    %663 = vmatpush1.bf16.msra.mxu0 0
    %664 = vmatprep.subr.bf16.mxu0 0
    %665 = vmatpush1.bf16.msra.mxu0 0
    %666 = vmatprep.subr.bf16.mxu0 0
    %667 = vmatpush1.bf16.msra.mxu0 0
    %668 = vmatprep.subr.bf16.mxu0 0
    %669 = vmatpush1.bf16.msra.mxu0 0
    %670 = vmatprep.subr.bf16.mxu0 0
    %671 = vmatpush1.bf16.msra.mxu0 0
    %672 = vmatprep.subr.bf16.mxu0 0
    %673 = vmatpush1.bf16.msra.mxu0 0
    %674 = vmatprep.mubr.bf16.mxu0 0
    %675 = vmatmul.mubr.bf16.gmra.mrb[0].mxu0 %v637
    %v676 = vpop.f32.mrb[0].mxu0
    %v677 = vadd.f32 0.0, %v676
    %v678 = vpop.f32.mrb[0].mxu0
    %v679 = vpop.f32.mrb[0].mxu0
    %v680 = vpop.f32.mrb[0].mxu0
    %681 = vdwg.mxu0
    %682 = vrot.lane.b32.xlu0 %v240, 112
    %v683 = vpop.permute.xlu0 %682
    %684 = vrot.lane.b32.xlu0 %v242, 112
    %v685 = vpop.permute.xlu0 %684
    %v687 = vsel %vm246, %v683, 0
    %v690 = vsel %vm246, %v685, 0
    %692 = vmatprep.subr.bf16.mxu0 0
    %693 = vmatpush1.bf16.xpose.msra.mxu0 %v690
    %694 = vmatprep.subr.bf16.mxu0 0
    %695 = vmatpush1.bf16.xpose.msra.mxu0 0
    %696 = vmatprep.subr.bf16.mxu0 0
    %697 = vmatpush1.bf16.xpose.msra.mxu0 0
    %698 = vmatprep.subr.bf16.mxu0 0
    %699 = vmatpush1.bf16.xpose.msra.mxu0 0
    %700 = vmatprep.subr.bf16.mxu0 0
    %701 = vmatpush1.bf16.xpose.msra.mxu0 0
    %702 = vmatprep.subr.bf16.mxu0 0
    %703 = vmatpush1.bf16.xpose.msra.mxu0 0
    %704 = vmatprep.subr.bf16.mxu0 0
    %705 = vmatpush1.bf16.xpose.msra.mxu0 0
    %706 = vmatprep.subr.bf16.mxu0 0
    %707 = vmatpush1.bf16.xpose.msra.mxu0 0
    %708 = vmatprep.subr.bf16.mxu0 0
    %709 = vmatpush1.bf16.xpose.msra.mxu0 0
    %710 = vmatprep.subr.bf16.mxu0 0
    %711 = vmatpush1.bf16.xpose.msra.mxu0 0
    %712 = vmatprep.subr.bf16.mxu0 0
    %713 = vmatpush1.bf16.xpose.msra.mxu0 0
    %714 = vmatprep.subr.bf16.mxu0 0
    %715 = vmatpush1.bf16.xpose.msra.mxu0 0
    %716 = vmatprep.subr.bf16.mxu0 0
    %717 = vmatpush1.bf16.xpose.msra.mxu0 0
    %718 = vmatprep.subr.bf16.mxu0 0
    %719 = vmatpush1.bf16.xpose.msra.mxu0 0
    %720 = vmatprep.subr.bf16.mxu0 0
    %721 = vmatpush1.bf16.xpose.msra.mxu0 0
    %722 = vmatprep.subr.bf16.mxu0 0
    %723 = vmatpush1.bf16.xpose.msra.mxu0 0
    %724 = vmatprep.mubr.bf16.mxu0 0
    %725 = vmatmul.mubr.bf16.gmra.mrb[0].mxu0 %v687
    %v726 = vpop.f32.mrb[0].mxu0
    %v727 = vadd.f32 0.0, %v726
    %v728 = vpop.f32.mrb[0].mxu0
    %v729 = vpop.f32.mrb[0].mxu0
    %v730 = vpop.f32.mrb[0].mxu0
    %731 = vdwg.mxu0
    %732 = vrot.lane.b32.xlu0 %v241, 112
    %v733 = vpop.permute.xlu0 %732
    %734 = vrot.lane.b32.xlu0 %v243, 112
    %v735 = vpop.permute.xlu0 %734
    %v737 = vsel %vm246, %v733, 0
    %v740 = vsel %vm246, %v735, 0
    %742 = vmatprep.subr.bf16.mxu0 0
    %743 = vmatpush1.bf16.xpose.msra.mxu0 %v740
    %744 = vmatprep.subr.bf16.mxu0 0
    %745 = vmatpush1.bf16.xpose.msra.mxu0 0
    %746 = vmatprep.subr.bf16.mxu0 0
    %747 = vmatpush1.bf16.xpose.msra.mxu0 0
    %748 = vmatprep.subr.bf16.mxu0 0
    %749 = vmatpush1.bf16.xpose.msra.mxu0 0
    %750 = vmatprep.subr.bf16.mxu0 0
    %751 = vmatpush1.bf16.xpose.msra.mxu0 0
    %752 = vmatprep.subr.bf16.mxu0 0
    %753 = vmatpush1.bf16.xpose.msra.mxu0 0
    %754 = vmatprep.subr.bf16.mxu0 0
    %755 = vmatpush1.bf16.xpose.msra.mxu0 0
    %756 = vmatprep.subr.bf16.mxu0 0
    %757 = vmatpush1.bf16.xpose.msra.mxu0 0
    %758 = vmatprep.subr.bf16.mxu0 0
    %759 = vmatpush1.bf16.xpose.msra.mxu0 0
    %760 = vmatprep.subr.bf16.mxu0 0
    %761 = vmatpush1.bf16.xpose.msra.mxu0 0
    %762 = vmatprep.subr.bf16.mxu0 0
    %763 = vmatpush1.bf16.xpose.msra.mxu0 0
    %764 = vmatprep.subr.bf16.mxu0 0
    %765 = vmatpush1.bf16.xpose.msra.mxu0 0
    %766 = vmatprep.subr.bf16.mxu0 0
    %767 = vmatpush1.bf16.xpose.msra.mxu0 0
    %768 = vmatprep.subr.bf16.mxu0 0
    %769 = vmatpush1.bf16.xpose.msra.mxu0 0
    %770 = vmatprep.subr.bf16.mxu0 0
    %771 = vmatpush1.bf16.xpose.msra.mxu0 0
    %772 = vmatprep.subr.bf16.mxu0 0
    %773 = vmatpush1.bf16.xpose.msra.mxu0 0
    %774 = vmatprep.mubr.bf16.mxu0 0
    %775 = vmatmul.mubr.bf16.gmra.mrb[0].mxu0 %v737
    %v776 = vpop.f32.mrb[0].mxu0
    %v777 = vadd.f32 0.0, %v776
    %v778 = vpop.f32.mrb[0].mxu0
    %v779 = vpop.f32.mrb[0].mxu0
    %v780 = vpop.f32.mrb[0].mxu0
    %781 = vdwg.mxu0
    %v782 = vsel %vm246, %v727, -inf
    %783 = vmax.xlane.f32.xlu0 %v782
    %v784 = vpop.xlane.xlu0 %783
    %v785 = vsel %vm246, %v777, -inf
    %786 = vmax.xlane.f32.xlu0 %v785
    %v787 = vpop.xlane.xlu0 %786
    %v788 = vsub.f32 %v727, %v784
    %v789 = vsub.f32 %v777, %v787
    %v790 = vmul.f32 %v788, 1.442695
    %v791 = vpow.pop %v790
    %v792 = vmul.f32 %v789, 1.442695
    %v793 = vpow.pop %v792
    %v794 = vsel %vm246, %v791, 0.0
    %795 = vadd.xlane.f32.xlu0 %v794
    %v796 = vpop.xlane.xlu0 %795
    %v797 = vsel %vm246, %v793, 0.0
    %798 = vadd.xlane.f32.xlu0 %v797
    %v799 = vpop.xlane.xlu0 %798
    %v800 = vrcp.pop %v796
    %v801 = vrcp.pop %v799
    %v802 = vmul.f32 %v791, %v800
    %v803 = vmul.f32 %v793, %v801
    %v804 = vpack.c.bf16 %v802, %v802
    %v805 = vpack.c.bf16 %v803, %v803
    %806 = vrot.lane.b32.xlu0 %v244, 112
    %v807 = vpop.permute.xlu0 %806
    %v809 = vsel %vm246, %v804, 0
    %v812 = vsel %vm366, %v807, 0
    %814 = vmatprep.subr.bf16.mxu0 0
    %815 = vmatpush1.bf16.msra.mxu0 %v812
    %816 = vmatprep.subr.bf16.mxu0 0
    %817 = vmatpush1.bf16.msra.mxu0 0
    %818 = vmatprep.subr.bf16.mxu0 0
    %819 = vmatpush1.bf16.msra.mxu0 0
    %820 = vmatprep.subr.bf16.mxu0 0
    %821 = vmatpush1.bf16.msra.mxu0 0
    %822 = vmatprep.subr.bf16.mxu0 0
    %823 = vmatpush1.bf16.msra.mxu0 0
    %824 = vmatprep.subr.bf16.mxu0 0
    %825 = vmatpush1.bf16.msra.mxu0 0
    %826 = vmatprep.subr.bf16.mxu0 0
    %827 = vmatpush1.bf16.msra.mxu0 0
    %828 = vmatprep.subr.bf16.mxu0 0
    %829 = vmatpush1.bf16.msra.mxu0 0
    %830 = vmatprep.subr.bf16.mxu0 0
    %831 = vmatpush1.bf16.msra.mxu0 0
    %832 = vmatprep.subr.bf16.mxu0 0
    %833 = vmatpush1.bf16.msra.mxu0 0
    %834 = vmatprep.subr.bf16.mxu0 0
    %835 = vmatpush1.bf16.msra.mxu0 0
    %836 = vmatprep.subr.bf16.mxu0 0
    %837 = vmatpush1.bf16.msra.mxu0 0
    %838 = vmatprep.subr.bf16.mxu0 0
    %839 = vmatpush1.bf16.msra.mxu0 0
    %840 = vmatprep.subr.bf16.mxu0 0
    %841 = vmatpush1.bf16.msra.mxu0 0
    %842 = vmatprep.subr.bf16.mxu0 0
    %843 = vmatpush1.bf16.msra.mxu0 0
    %844 = vmatprep.subr.bf16.mxu0 0
    %845 = vmatpush1.bf16.msra.mxu0 0
    %846 = vmatprep.mubr.bf16.mxu0 0
    %847 = vmatmul.mubr.bf16.gmra.mrb[0].mxu0 %v809
    %v848 = vpop.f32.mrb[0].mxu0
    %v849 = vadd.f32 0.0, %v848
    %v850 = vpop.f32.mrb[0].mxu0
    %v851 = vpop.f32.mrb[0].mxu0
    %v852 = vpop.f32.mrb[0].mxu0
    %853 = vdwg.mxu0
    %854 = vrot.lane.b32.xlu0 %v245, 112
    %v855 = vpop.permute.xlu0 %854
    %v857 = vsel %vm246, %v805, 0
    %v860 = vsel %vm366, %v855, 0
    %862 = vmatprep.subr.bf16.mxu0 0
    %863 = vmatpush1.bf16.msra.mxu0 %v860
    %864 = vmatprep.subr.bf16.mxu0 0
    %865 = vmatpush1.bf16.msra.mxu0 0
    %866 = vmatprep.subr.bf16.mxu0 0
    %867 = vmatpush1.bf16.msra.mxu0 0
    %868 = vmatprep.subr.bf16.mxu0 0
    %869 = vmatpush1.bf16.msra.mxu0 0
    %870 = vmatprep.subr.bf16.mxu0 0
    %871 = vmatpush1.bf16.msra.mxu0 0
    %872 = vmatprep.subr.bf16.mxu0 0
    %873 = vmatpush1.bf16.msra.mxu0 0
    %874 = vmatprep.subr.bf16.mxu0 0
    %875 = vmatpush1.bf16.msra.mxu0 0
    %876 = vmatprep.subr.bf16.mxu0 0
    %877 = vmatpush1.bf16.msra.mxu0 0
    %878 = vmatprep.subr.bf16.mxu0 0
    %879 = vmatpush1.bf16.msra.mxu0 0
    %880 = vmatprep.subr.bf16.mxu0 0
    %881 = vmatpush1.bf16.msra.mxu0 0
    %882 = vmatprep.subr.bf16.mxu0 0
    %883 = vmatpush1.bf16.msra.mxu0 0
    %884 = vmatprep.subr.bf16.mxu0 0
    %885 = vmatpush1.bf16.msra.mxu0 0
    %886 = vmatprep.subr.bf16.mxu0 0
    %887 = vmatpush1.bf16.msra.mxu0 0
    %888 = vmatprep.subr.bf16.mxu0 0
    %889 = vmatpush1.bf16.msra.mxu0 0
    %890 = vmatprep.subr.bf16.mxu0 0
    %891 = vmatpush1.bf16.msra.mxu0 0
    %892 = vmatprep.subr.bf16.mxu0 0
    %893 = vmatpush1.bf16.msra.mxu0 0
    %894 = vmatprep.mubr.bf16.mxu0 0
    %895 = vmatmul.mubr.bf16.gmra.mrb[0].mxu0 %v857
    %v896 = vpop.f32.mrb[0].mxu0
    %v897 = vadd.f32 0.0, %v896
    %v898 = vpop.f32.mrb[0].mxu0
    %v899 = vpop.f32.mrb[0].mxu0
    %v900 = vpop.f32.mrb[0].mxu0
    %901 = vdwg.mxu0
    %902 = vrot.lane.b32.xlu0 %v240, 104
    %v903 = vpop.permute.xlu0 %902
    %904 = vrot.lane.b32.xlu0 %v242, 104
    %v905 = vpop.permute.xlu0 %904
    %v907 = vsel %vm246, %v903, 0
    %v910 = vsel %vm246, %v905, 0
    %912 = vmatprep.subr.bf16.mxu0 0
    %913 = vmatpush1.bf16.xpose.msra.mxu0 %v910
    %914 = vmatprep.subr.bf16.mxu0 0
    %915 = vmatpush1.bf16.xpose.msra.mxu0 0
    %916 = vmatprep.subr.bf16.mxu0 0
    %917 = vmatpush1.bf16.xpose.msra.mxu0 0
    %918 = vmatprep.subr.bf16.mxu0 0
    %919 = vmatpush1.bf16.xpose.msra.mxu0 0
    %920 = vmatprep.subr.bf16.mxu0 0
    %921 = vmatpush1.bf16.xpose.msra.mxu0 0
    %922 = vmatprep.subr.bf16.mxu0 0
    %923 = vmatpush1.bf16.xpose.msra.mxu0 0
    %924 = vmatprep.subr.bf16.mxu0 0
    %925 = vmatpush1.bf16.xpose.msra.mxu0 0
    %926 = vmatprep.subr.bf16.mxu0 0
    %927 = vmatpush1.bf16.xpose.msra.mxu0 0
    %928 = vmatprep.subr.bf16.mxu0 0
    %929 = vmatpush1.bf16.xpose.msra.mxu0 0
    %930 = vmatprep.subr.bf16.mxu0 0
    %931 = vmatpush1.bf16.xpose.msra.mxu0 0
    %932 = vmatprep.subr.bf16.mxu0 0
    %933 = vmatpush1.bf16.xpose.msra.mxu0 0
    %934 = vmatprep.subr.bf16.mxu0 0
    %935 = vmatpush1.bf16.xpose.msra.mxu0 0
    %936 = vmatprep.subr.bf16.mxu0 0
    %937 = vmatpush1.bf16.xpose.msra.mxu0 0
    %938 = vmatprep.subr.bf16.mxu0 0
    %939 = vmatpush1.bf16.xpose.msra.mxu0 0
    %940 = vmatprep.subr.bf16.mxu0 0
    %941 = vmatpush1.bf16.xpose.msra.mxu0 0
    %942 = vmatprep.subr.bf16.mxu0 0
    %943 = vmatpush1.bf16.xpose.msra.mxu0 0
    %944 = vmatprep.mubr.bf16.mxu0 0
    %945 = vmatmul.mubr.bf16.gmra.mrb[0].mxu0 %v907
    %v946 = vpop.f32.mrb[0].mxu0
    %v947 = vadd.f32 0.0, %v946
    %v948 = vpop.f32.mrb[0].mxu0
    %v949 = vpop.f32.mrb[0].mxu0
    %v950 = vpop.f32.mrb[0].mxu0
    %951 = vdwg.mxu0
    %952 = vrot.lane.b32.xlu0 %v241, 104
    %v953 = vpop.permute.xlu0 %952
    %954 = vrot.lane.b32.xlu0 %v243, 104
    %v955 = vpop.permute.xlu0 %954
    %v957 = vsel %vm246, %v953, 0
    %v960 = vsel %vm246, %v955, 0
    %962 = vmatprep.subr.bf16.mxu0 0
    %963 = vmatpush1.bf16.xpose.msra.mxu0 %v960
    %964 = vmatprep.subr.bf16.mxu0 0
    %965 = vmatpush1.bf16.xpose.msra.mxu0 0
    %966 = vmatprep.subr.bf16.mxu0 0
    %967 = vmatpush1.bf16.xpose.msra.mxu0 0
    %968 = vmatprep.subr.bf16.mxu0 0
    %969 = vmatpush1.bf16.xpose.msra.mxu0 0
    %970 = vmatprep.subr.bf16.mxu0 0
    %971 = vmatpush1.bf16.xpose.msra.mxu0 0
    %972 = vmatprep.subr.bf16.mxu0 0
    %973 = vmatpush1.bf16.xpose.msra.mxu0 0
    %974 = vmatprep.subr.bf16.mxu0 0
    %975 = vmatpush1.bf16.xpose.msra.mxu0 0
    %976 = vmatprep.subr.bf16.mxu0 0
    %977 = vmatpush1.bf16.xpose.msra.mxu0 0
    %978 = vmatprep.subr.bf16.mxu0 0
    %979 = vmatpush1.bf16.xpose.msra.mxu0 0
    %980 = vmatprep.subr.bf16.mxu0 0
    %981 = vmatpush1.bf16.xpose.msra.mxu0 0
    %982 = vmatprep.subr.bf16.mxu0 0
    %983 = vmatpush1.bf16.xpose.msra.mxu0 0
    %984 = vmatprep.subr.bf16.mxu0 0
    %985 = vmatpush1.bf16.xpose.msra.mxu0 0
    %986 = vmatprep.subr.bf16.mxu0 0
    %987 = vmatpush1.bf16.xpose.msra.mxu0 0
    %988 = vmatprep.subr.bf16.mxu0 0
    %989 = vmatpush1.bf16.xpose.msra.mxu0 0
    %990 = vmatprep.subr.bf16.mxu0 0
    %991 = vmatpush1.bf16.xpose.msra.mxu0 0
    %992 = vmatprep.subr.bf16.mxu0 0
    %993 = vmatpush1.bf16.xpose.msra.mxu0 0
    %994 = vmatprep.mubr.bf16.mxu0 0
    %995 = vmatmul.mubr.bf16.gmra.mrb[0].mxu0 %v957
    %v996 = vpop.f32.mrb[0].mxu0
    %v997 = vadd.f32 0.0, %v996
    %v998 = vpop.f32.mrb[0].mxu0
    %v999 = vpop.f32.mrb[0].mxu0
    %v1000 = vpop.f32.mrb[0].mxu0
    %1001 = vdwg.mxu0
    %v1002 = vsel %vm246, %v947, -inf
    %1003 = vmax.xlane.f32.xlu0 %v1002
    %v1004 = vpop.xlane.xlu0 %1003
    %v1005 = vsel %vm246, %v997, -inf
    %1006 = vmax.xlane.f32.xlu0 %v1005
    %v1007 = vpop.xlane.xlu0 %1006
    %v1008 = vsub.f32 %v947, %v1004
    %v1009 = vsub.f32 %v997, %v1007
    %v1010 = vmul.f32 %v1008, 1.442695
    %v1011 = vpow.pop %v1010
    %v1012 = vmul.f32 %v1009, 1.442695
    %v1013 = vpow.pop %v1012
    %v1014 = vsel %vm246, %v1011, 0.0
    %1015 = vadd.xlane.f32.xlu0 %v1014
    %v1016 = vpop.xlane.xlu0 %1015
    %v1017 = vsel %vm246, %v1013, 0.0
    %1018 = vadd.xlane.f32.xlu0 %v1017
    %v1019 = vpop.xlane.xlu0 %1018
    %v1020 = vrcp.pop %v1016
    %v1021 = vrcp.pop %v1019
    %v1022 = vmul.f32 %v1011, %v1020
    %v1023 = vmul.f32 %v1013, %v1021
    %v1024 = vpack.c.bf16 %v1022, %v1022
    %v1025 = vpack.c.bf16 %v1023, %v1023
    %1026 = vrot.lane.b32.xlu0 %v244, 104
    %v1027 = vpop.permute.xlu0 %1026
    %v1029 = vsel %vm246, %v1024, 0
    %v1032 = vsel %vm366, %v1027, 0
    %1034 = vmatprep.subr.bf16.mxu0 0
    %1035 = vmatpush1.bf16.msra.mxu0 %v1032
    %1036 = vmatprep.subr.bf16.mxu0 0
    %1037 = vmatpush1.bf16.msra.mxu0 0
    %1038 = vmatprep.subr.bf16.mxu0 0
    %1039 = vmatpush1.bf16.msra.mxu0 0
    %1040 = vmatprep.subr.bf16.mxu0 0
    %1041 = vmatpush1.bf16.msra.mxu0 0
    %1042 = vmatprep.subr.bf16.mxu0 0
    %1043 = vmatpush1.bf16.msra.mxu0 0
    %1044 = vmatprep.subr.bf16.mxu0 0
    %1045 = vmatpush1.bf16.msra.mxu0 0
    %1046 = vmatprep.subr.bf16.mxu0 0
    %1047 = vmatpush1.bf16.msra.mxu0 0
    %1048 = vmatprep.subr.bf16.mxu0 0
    %1049 = vmatpush1.bf16.msra.mxu0 0
    %1050 = vmatprep.subr.bf16.mxu0 0
    %1051 = vmatpush1.bf16.msra.mxu0 0
    %1052 = vmatprep.subr.bf16.mxu0 0
    %1053 = vmatpush1.bf16.msra.mxu0 0
    %1054 = vmatprep.subr.bf16.mxu0 0
    %1055 = vmatpush1.bf16.msra.mxu0 0
    %1056 = vmatprep.subr.bf16.mxu0 0
    %1057 = vmatpush1.bf16.msra.mxu0 0
    %1058 = vmatprep.subr.bf16.mxu0 0
    %1059 = vmatpush1.bf16.msra.mxu0 0
    %1060 = vmatprep.subr.bf16.mxu0 0
    %1061 = vmatpush1.bf16.msra.mxu0 0
    %1062 = vmatprep.subr.bf16.mxu0 0
    %1063 = vmatpush1.bf16.msra.mxu0 0
    %1064 = vmatprep.subr.bf16.mxu0 0
    %1065 = vmatpush1.bf16.msra.mxu0 0
    %1066 = vmatprep.mubr.bf16.mxu0 0
    %1067 = vmatmul.mubr.bf16.gmra.mrb[0].mxu0 %v1029
    %v1068 = vpop.f32.mrb[0].mxu0
    %v1069 = vadd.f32 0.0, %v1068
    %v1070 = vpop.f32.mrb[0].mxu0
    %v1071 = vpop.f32.mrb[0].mxu0
    %v1072 = vpop.f32.mrb[0].mxu0
    %1073 = vdwg.mxu0
    %1074 = vrot.lane.b32.xlu0 %v245, 104
    %v1075 = vpop.permute.xlu0 %1074
    %v1077 = vsel %vm246, %v1025, 0
    %v1080 = vsel %vm366, %v1075, 0
    %1082 = vmatprep.subr.bf16.mxu0 0
    %1083 = vmatpush1.bf16.msra.mxu0 %v1080
    %1084 = vmatprep.subr.bf16.mxu0 0
    %1085 = vmatpush1.bf16.msra.mxu0 0
    %1086 = vmatprep.subr.bf16.mxu0 0
    %1087 = vmatpush1.bf16.msra.mxu0 0
    %1088 = vmatprep.subr.bf16.mxu0 0
    %1089 = vmatpush1.bf16.msra.mxu0 0
    %1090 = vmatprep.subr.bf16.mxu0 0
    %1091 = vmatpush1.bf16.msra.mxu0 0
    %1092 = vmatprep.subr.bf16.mxu0 0
    %1093 = vmatpush1.bf16.msra.mxu0 0
    %1094 = vmatprep.subr.bf16.mxu0 0
    %1095 = vmatpush1.bf16.msra.mxu0 0
    %1096 = vmatprep.subr.bf16.mxu0 0
    %1097 = vmatpush1.bf16.msra.mxu0 0
    %1098 = vmatprep.subr.bf16.mxu0 0
    %1099 = vmatpush1.bf16.msra.mxu0 0
    %1100 = vmatprep.subr.bf16.mxu0 0
    %1101 = vmatpush1.bf16.msra.mxu0 0
    %1102 = vmatprep.subr.bf16.mxu0 0
    %1103 = vmatpush1.bf16.msra.mxu0 0
    %1104 = vmatprep.subr.bf16.mxu0 0
    %1105 = vmatpush1.bf16.msra.mxu0 0
    %1106 = vmatprep.subr.bf16.mxu0 0
    %1107 = vmatpush1.bf16.msra.mxu0 0
    %1108 = vmatprep.subr.bf16.mxu0 0
    %1109 = vmatpush1.bf16.msra.mxu0 0
    %1110 = vmatprep.subr.bf16.mxu0 0
    %1111 = vmatpush1.bf16.msra.mxu0 0
    %1112 = vmatprep.subr.bf16.mxu0 0
    %1113 = vmatpush1.bf16.msra.mxu0 0
    %1114 = vmatprep.mubr.bf16.mxu0 0
    %1115 = vmatmul.mubr.bf16.gmra.mrb[0].mxu0 %v1077
    %v1116 = vpop.f32.mrb[0].mxu0
    %v1117 = vadd.f32 0.0, %v1116
    %v1118 = vpop.f32.mrb[0].mxu0
    %v1119 = vpop.f32.mrb[0].mxu0
    %v1120 = vpop.f32.mrb[0].mxu0
    %1121 = vdwg.mxu0
    %1124 = vrot.lane.b32.xlu0 %v628, 8
    %v1125 = vpop.permute.xlu0 %1124
    %1126 = vrot.lane.b32.xlu0 %v677, 8
    %v1127 = vpop.permute.xlu0 %1126
    %1132 = vrot.lane.b32.xlu0 %v849, 16
    %v1133 = vpop.permute.xlu0 %1132
    %1134 = vrot.lane.b32.xlu0 %v897, 16
    %v1135 = vpop.permute.xlu0 %1134
    %1140 = vrot.lane.b32.xlu0 %v1069, 24
    %v1141 = vpop.permute.xlu0 %1140
    %1142 = vrot.lane.b32.xlu0 %v1117, 24
    %v1143 = vpop.permute.xlu0 %1142
    %v1146 = vsel %vm246, %v405, %v1125
    %v1147 = vsel %vm246, %v451, %v1127
    %vm1148 = vcmask 130048
    %v1149 = vsel %vm1148, %v1146, %v1133
    %v1150 = vsel %vm1148, %v1147, %v1135
    %vm1151 = vcmask 195584
    %v1152 = vsel %vm1151, %v1149, %v1141
    %v1153 = vsel %vm1151, %v1150, %v1143
    %v1154 = vpack.c.bf16 %v1153, %v1152
    %v1155 = vld [vmem:[#allocation2] sm:$0xf]
    %v1156 = vld [vmem:[#allocation2 + $0x4] sm:$0xf]
    %v1157 = vld [vmem:[#allocation2 + $0x8] sm:$0xf]
    %v1158 = vld [vmem:[#allocation2 + $0xc] sm:$0xf]
    %v1159 = vld [vmem:[%s7] sm:$0x3f]
    %v1160 = vld [vmem:[%s8] sm:$0x1]
    %v1161 = vlaneseq
    %v1162 = vshrl.u32 %v1161, 7
    %v1163 = vsub.s32 0, %v1162
    %v1164 = vrot.slane %v1159, %v1163
    %v1169 = vunpack.c.l.b16 %v1155
    %v1170 = vunpack.c.l.b16 %v1156
    %v1171 = vunpack.c.l.b16 %v1157
    %v1172 = vunpack.c.l.b16 %v1158
    %v1173 = vpack.c.b16 %v1170, %v1169
    %v1174 = vpack.c.b16 %v1172, %v1171
    %v1178 = vsel %vm81, %v1154, 0
    %1180 = vmatprep.subr.bf16.mxu0 0
    %1181 = vmatpush1.bf16.msra.mxu0 %v1173
    %1182 = vmatprep.subr.bf16.mxu0 0
    %1183 = vmatpush1.bf16.msra.mxu0 %v1174
    %1184 = vmatprep.subr.bf16.mxu0 0
    %1185 = vmatpush1.bf16.msra.mxu0 0
    %1186 = vmatprep.subr.bf16.mxu0 0
    %1187 = vmatpush1.bf16.msra.mxu0 0
    %1188 = vmatprep.subr.bf16.mxu0 0
    %1189 = vmatpush1.bf16.msra.mxu0 0
    %1190 = vmatprep.subr.bf16.mxu0 0
    %1191 = vmatpush1.bf16.msra.mxu0 0
    %1192 = vmatprep.subr.bf16.mxu0 0
    %1193 = vmatpush1.bf16.msra.mxu0 0
    %1194 = vmatprep.subr.bf16.mxu0 0
    %1195 = vmatpush1.bf16.msra.mxu0 0
    %1196 = vmatprep.subr.bf16.mxu0 0
    %1197 = vmatpush1.bf16.msra.mxu0 0
    %1198 = vmatprep.subr.bf16.mxu0 0
    %1199 = vmatpush1.bf16.msra.mxu0 0
    %1200 = vmatprep.subr.bf16.mxu0 0
    %1201 = vmatpush1.bf16.msra.mxu0 0
    %1202 = vmatprep.subr.bf16.mxu0 0
    %1203 = vmatpush1.bf16.msra.mxu0 0
    %1204 = vmatprep.subr.bf16.mxu0 0
    %1205 = vmatpush1.bf16.msra.mxu0 0
    %1206 = vmatprep.subr.bf16.mxu0 0
    %1207 = vmatpush1.bf16.msra.mxu0 0
    %1208 = vmatprep.subr.bf16.mxu0 0
    %1209 = vmatpush1.bf16.msra.mxu0 0
    %1210 = vmatprep.subr.bf16.mxu0 0
    %1211 = vmatpush1.bf16.msra.mxu0 0
    %1212 = vmatprep.mubr.bf16.mxu0 0
    %1213 = vmatmul.mubr.bf16.gmra.mrb[0].mxu0 %v1178
    %v1214 = vpop.f32.mrb[0].mxu0
    %v1215 = vadd.f32 %v1164, %v1214
    %v1216 = vpop.f32.mrb[0].mxu0
    %v1217 = vpop.f32.mrb[0].mxu0
    %v1218 = vadd.f32 %v1164, %v1217
    %v1219 = vpop.f32.mrb[0].mxu0
    %1220 = vdwg.mxu0
    %v1221 = vadd.f32 %v1215, %v62
    %v1222 = vadd.f32 %v1218, %v63
    %v1223 = vsel %vm81, %v1221, 0.0
    %1224 = vadd.xlane.f32.xlu0 %v1223
    %v1225 = vpop.xlane.xlu0 %1224
    %v1226 = vsel %vm81, %v1222, 0.0
    %1227 = vadd.xlane.f32.xlu0 %v1226
    %v1228 = vpop.xlane.xlu0 %1227
    %v1229 = vrcp.pop 32.0
    %v1230 = vmul.f32 %v1225, %v1229
    %v1231 = vmul.f32 %v1228, %v1229
    %v1232 = vsub.f32 %v1221, %v1230
    %v1233 = vsub.f32 %v1222, %v1231
    %v1234 = vmul.f32 %v1232, %v1232
    %v1235 = vmul.f32 %v1233, %v1233
    %v1236 = vsel %vm81, %v1234, 0.0
    %1237 = vadd.xlane.f32.xlu0 %v1236
    %v1238 = vpop.xlane.xlu0 %1237
    %v1239 = vsel %vm81, %v1235, 0.0
    %1240 = vadd.xlane.f32.xlu0 %v1239
    %v1241 = vpop.xlane.xlu0 %1240
    %v1242 = vmul.f32 %v1238, %v1229
    %v1243 = vmul.f32 %v1241, %v1229
    %v1244 = vadd.f32 %v1242, 1e-05
    %v1245 = vadd.f32 %v1243, 1e-05
    %v1246 = vrsqrt.pop %v1244
    %v1247 = vrsqrt.pop %v1245
    %v1248 = vmul.f32 %v1232, %v1246
    %v1249 = vmul.f32 %v1233, %v1247
    %v1250 = vlaneseq
    %v1251 = vshrl.u32 %v1250, 7
    %v1252 = vsub.s32 1, %v1251
    %v1253 = vrot.slane %v1159, %v1252
    %v1254 = vmul.f32 %v1248, %v1253
    %v1255 = vmul.f32 %v1249, %v1253
    %v1256 = vlaneseq
    %v1257 = vshrl.u32 %v1256, 7
    %v1258 = vsub.s32 2, %v1257
    %v1259 = vrot.slane %v1159, %v1258
    %v1260 = vadd.f32 %v1254, %v1259
    %v1261 = vadd.f32 %v1255, %v1259
    %v1262 = vpack.c.bf16 %v1261, %v1260
    %v1263 = vld [vmem:[#allocation5] sm:$0xf]
    %v1264 = vld [vmem:[#allocation5 + $0x4] sm:$0xf]
    %v1265 = vld [vmem:[#allocation5 + $0x8] sm:$0xf]
    %v1266 = vld [vmem:[#allocation5 + $0xc] sm:$0xf]
    %v1268 = vlaneseq
    %v1269 = vshrl.u32 %v1268, 7
    %v1270 = vsub.s32 0, %v1269
    %v1271 = vrot.slane %v1160, %v1270
    %v1277 = vunpack.c.l.b16 %v1263
    %v1278 = vunpack.c.l.b16 %v1264
    %v1279 = vunpack.c.l.b16 %v1265
    %v1280 = vunpack.c.l.b16 %v1266
    %v1281 = vpack.c.b16 %v1278, %v1277
    %v1282 = vpack.c.b16 %v1280, %v1279
    %v1286 = vsel %vm81, %v1262, 0
    %1288 = vmatprep.subr.bf16.mxu0 0
    %1289 = vmatpush1.bf16.msra.mxu0 %v1281
    %1290 = vmatprep.subr.bf16.mxu0 0
    %1291 = vmatpush1.bf16.msra.mxu0 %v1282
    %1292 = vmatprep.subr.bf16.mxu0 0
    %1293 = vmatpush1.bf16.msra.mxu0 0
    %1294 = vmatprep.subr.bf16.mxu0 0
    %1295 = vmatpush1.bf16.msra.mxu0 0
    %1296 = vmatprep.subr.bf16.mxu0 0
    %1297 = vmatpush1.bf16.msra.mxu0 0
    %1298 = vmatprep.subr.bf16.mxu0 0
    %1299 = vmatpush1.bf16.msra.mxu0 0
    %1300 = vmatprep.subr.bf16.mxu0 0
    %1301 = vmatpush1.bf16.msra.mxu0 0
    %1302 = vmatprep.subr.bf16.mxu0 0
    %1303 = vmatpush1.bf16.msra.mxu0 0
    %1304 = vmatprep.subr.bf16.mxu0 0
    %1305 = vmatpush1.bf16.msra.mxu0 0
    %1306 = vmatprep.subr.bf16.mxu0 0
    %1307 = vmatpush1.bf16.msra.mxu0 0
    %1308 = vmatprep.subr.bf16.mxu0 0
    %1309 = vmatpush1.bf16.msra.mxu0 0
    %1310 = vmatprep.subr.bf16.mxu0 0
    %1311 = vmatpush1.bf16.msra.mxu0 0
    %1312 = vmatprep.subr.bf16.mxu0 0
    %1313 = vmatpush1.bf16.msra.mxu0 0
    %1314 = vmatprep.subr.bf16.mxu0 0
    %1315 = vmatpush1.bf16.msra.mxu0 0
    %1316 = vmatprep.subr.bf16.mxu0 0
    %1317 = vmatpush1.bf16.msra.mxu0 0
    %1318 = vmatprep.subr.bf16.mxu0 0
    %1319 = vmatpush1.bf16.msra.mxu0 0
    %1320 = vmatprep.mubr.bf16.mxu0 0
    %1321 = vmatmul.mubr.bf16.gmra.mrb[0].mxu0 %v1286
    %v1322 = vpop.f32.mrb[0].mxu0
    %v1323 = vadd.f32 %v1271, %v1322
    %v1324 = vpop.f32.mrb[0].mxu0
    %v1325 = vpop.f32.mrb[0].mxu0
    %v1326 = vadd.f32 %v1271, %v1325
    %v1327 = vpop.f32.mrb[0].mxu0
    %1328 = vdwg.mxu0
    %v1329 = vmax.f32 %v1323, 0.0
    %v1330 = vmax.f32 %v1326, 0.0
    %v1331 = vpack.c.bf16 %v1330, %v1329
    %v1332 = vld [vmem:[%s6] sm:$0xf]
    %v1333 = vld [vmem:[%s6 + $0x4] sm:$0xf]
    %v1334 = vld [vmem:[%s6 + $0x8] sm:$0xf]
    %v1335 = vld [vmem:[%s6 + $0xc] sm:$0xf]
    %v1336 = vld [vmem:[%s6 + $0x10] sm:$0xf]
    %v1337 = vld [vmem:[%s6 + $0x14] sm:$0xf]
    %v1338 = vld [vmem:[%s6 + $0x18] sm:$0xf]
    %v1339 = vld [vmem:[%s6 + $0x1c] sm:$0xf]
    %v1340 = vlaneseq
    %v1341 = vshrl.u32 %v1340, 7
    %v1342 = vsub.s32 5, %v1341
    %v1343 = vrot.slane %v1159, %v1342
    %v1352 = vunpack.c.l.b16 %v1332
    %v1353 = vunpack.c.l.b16 %v1333
    %v1354 = vunpack.c.l.b16 %v1334
    %v1355 = vunpack.c.l.b16 %v1335
    %v1356 = vunpack.c.l.b16 %v1336
    %v1357 = vunpack.c.l.b16 %v1337
    %v1358 = vunpack.c.l.b16 %v1338
    %v1359 = vunpack.c.l.b16 %v1339
    %v1360 = vpack.c.b16 %v1353, %v1352
    %v1361 = vpack.c.b16 %v1355, %v1354
    %v1362 = vpack.c.b16 %v1357, %v1356
    %v1363 = vpack.c.b16 %v1359, %v1358
    %vm1368 = vcmask 523264
    %v1370 = vsel %vm1368, %v1331, 0
    %1372 = vmatprep.subr.bf16.mxu0 0
    %1373 = vmatpush1.bf16.msra.mxu0 %v1360
    %1374 = vmatprep.subr.bf16.mxu0 0
    %1375 = vmatpush1.bf16.msra.mxu0 %v1361
    %1376 = vmatprep.subr.bf16.mxu0 0
    %1377 = vmatpush1.bf16.msra.mxu0 %v1362
    %1378 = vmatprep.subr.bf16.mxu0 0
    %1379 = vmatpush1.bf16.msra.mxu0 %v1363
    %1380 = vmatprep.subr.bf16.mxu0 0
    %1381 = vmatpush1.bf16.msra.mxu0 0
    %1382 = vmatprep.subr.bf16.mxu0 0
    %1383 = vmatpush1.bf16.msra.mxu0 0
    %1384 = vmatprep.subr.bf16.mxu0 0
    %1385 = vmatpush1.bf16.msra.mxu0 0
    %1386 = vmatprep.subr.bf16.mxu0 0
    %1387 = vmatpush1.bf16.msra.mxu0 0
    %1388 = vmatprep.subr.bf16.mxu0 0
    %1389 = vmatpush1.bf16.msra.mxu0 0
    %1390 = vmatprep.subr.bf16.mxu0 0
    %1391 = vmatpush1.bf16.msra.mxu0 0
    %1392 = vmatprep.subr.bf16.mxu0 0
    %1393 = vmatpush1.bf16.msra.mxu0 0
    %1394 = vmatprep.subr.bf16.mxu0 0
    %1395 = vmatpush1.bf16.msra.mxu0 0
    %1396 = vmatprep.subr.bf16.mxu0 0
    %1397 = vmatpush1.bf16.msra.mxu0 0
    %1398 = vmatprep.subr.bf16.mxu0 0
    %1399 = vmatpush1.bf16.msra.mxu0 0
    %1400 = vmatprep.subr.bf16.mxu0 0
    %1401 = vmatpush1.bf16.msra.mxu0 0
    %1402 = vmatprep.subr.bf16.mxu0 0
    %1403 = vmatpush1.bf16.msra.mxu0 0
    %1404 = vmatprep.mubr.bf16.mxu0 0
    %1405 = vmatmul.mubr.bf16.gmra.mrb[0].mxu0 %v1370
    %v1406 = vpop.f32.mrb[0].mxu0
    %v1407 = vadd.f32 %v1343, %v1406
    %v1408 = vpop.f32.mrb[0].mxu0
    %v1409 = vpop.f32.mrb[0].mxu0
    %v1410 = vadd.f32 %v1343, %v1409
    %v1411 = vpop.f32.mrb[0].mxu0
    %1412 = vdwg.mxu0
    %v1413 = vadd.f32 %v1407, %v1260
    %v1414 = vadd.f32 %v1410, %v1261
    %v1415 = vsel %vm81, %v1413, 0.0
    %1416 = vadd.xlane.f32.xlu0 %v1415
    %v1417 = vpop.xlane.xlu0 %1416
    %v1418 = vsel %vm81, %v1414, 0.0
    %1419 = vadd.xlane.f32.xlu0 %v1418
    %v1420 = vpop.xlane.xlu0 %1419
    %v1421 = vmul.f32 %v1417, %v1229
    %v1422 = vmul.f32 %v1420, %v1229
    %v1423 = vsub.f32 %v1413, %v1421
    %v1424 = vsub.f32 %v1414, %v1422
    %v1425 = vmul.f32 %v1423, %v1423
    %v1426 = vmul.f32 %v1424, %v1424
    %v1427 = vsel %vm81, %v1425, 0.0
    %1428 = vadd.xlane.f32.xlu0 %v1427
    %v1429 = vpop.xlane.xlu0 %1428
    %v1430 = vsel %vm81, %v1426, 0.0
    %1431 = vadd.xlane.f32.xlu0 %v1430
    %v1432 = vpop.xlane.xlu0 %1431
    %v1433 = vmul.f32 %v1429, %v1229
    %v1434 = vmul.f32 %v1432, %v1229
    %v1435 = vadd.f32 %v1433, 1e-05
    %v1436 = vadd.f32 %v1434, 1e-05
    %v1437 = vrsqrt.pop %v1435
    %v1438 = vrsqrt.pop %v1436
    %v1439 = vmul.f32 %v1423, %v1437
    %v1440 = vmul.f32 %v1424, %v1438
    %v1441 = vlaneseq
    %v1442 = vshrl.u32 %v1441, 7
    %v1443 = vsub.s32 3, %v1442
    %v1444 = vrot.slane %v1159, %v1443
    %v1445 = vmul.f32 %v1439, %v1444
    %v1446 = vmul.f32 %v1440, %v1444
    %v1447 = vlaneseq
    %v1448 = vshrl.u32 %v1447, 7
    %v1449 = vsub.s32 4, %v1448
    %v1450 = vrot.slane %v1159, %v1449
    %v1451 = vadd.f32 %v1445, %v1450
    %v1452 = vadd.f32 %v1446, %v1450
    %v1453 = vpack.c.bf16 %v1452, %v1451
    %s1454 = scalar_lea.vmem %s1, 16
    %v1455 = vld [vmem:[%s1454] sm:$0xf]
    %v1456 = vld [vmem:[%s1454 + $0x4] sm:$0xf]
    %v1457 = vld [vmem:[%s1454 + $0x8] sm:$0xf]
    %v1458 = vld [vmem:[%s1454 + $0xc] sm:$0xf]
    %v1463 = vunpack.c.l.b16 %v1455
    %v1464 = vunpack.c.l.b16 %v1456
    %v1465 = vunpack.c.l.b16 %v1457
    %v1466 = vunpack.c.l.b16 %v1458
    %v1467 = vpack.c.b16 %v1464, %v1463
    %v1468 = vpack.c.b16 %v1466, %v1465
    %v1472 = vsel %vm81, %v1453, 0
    %1474 = vmatprep.subr.bf16.mxu0 0
    %1475 = vmatpush1.bf16.msra.mxu0 %v1467
    %1476 = vmatprep.subr.bf16.mxu0 0
    %1477 = vmatpush1.bf16.msra.mxu0 %v1468
    %1478 = vmatprep.subr.bf16.mxu0 0
    %1479 = vmatpush1.bf16.msra.mxu0 0
    %1480 = vmatprep.subr.bf16.mxu0 0
    %1481 = vmatpush1.bf16.msra.mxu0 0
    %1482 = vmatprep.subr.bf16.mxu0 0
    %1483 = vmatpush1.bf16.msra.mxu0 0
    %1484 = vmatprep.subr.bf16.mxu0 0
    %1485 = vmatpush1.bf16.msra.mxu0 0
    %1486 = vmatprep.subr.bf16.mxu0 0
    %1487 = vmatpush1.bf16.msra.mxu0 0
    %1488 = vmatprep.subr.bf16.mxu0 0
    %1489 = vmatpush1.bf16.msra.mxu0 0
    %1490 = vmatprep.subr.bf16.mxu0 0
    %1491 = vmatpush1.bf16.msra.mxu0 0
    %1492 = vmatprep.subr.bf16.mxu0 0
    %1493 = vmatpush1.bf16.msra.mxu0 0
    %1494 = vmatprep.subr.bf16.mxu0 0
    %1495 = vmatpush1.bf16.msra.mxu0 0
    %1496 = vmatprep.subr.bf16.mxu0 0
    %1497 = vmatpush1.bf16.msra.mxu0 0
    %1498 = vmatprep.subr.bf16.mxu0 0
    %1499 = vmatpush1.bf16.msra.mxu0 0
    %1500 = vmatprep.subr.bf16.mxu0 0
    %1501 = vmatpush1.bf16.msra.mxu0 0
    %1502 = vmatprep.subr.bf16.mxu0 0
    %1503 = vmatpush1.bf16.msra.mxu0 0
    %1504 = vmatprep.subr.bf16.mxu0 0
    %1505 = vmatpush1.bf16.msra.mxu0 0
    %1506 = vmatprep.mubr.bf16.mxu0 0
    %1507 = vmatmul.mubr.bf16.gmra.mrb[0].mxu0 %v1472
    %v1508 = vpop.f32.mrb[0].mxu0
    %v1509 = vadd.f32 0.0, %v1508
    %v1510 = vpop.f32.mrb[0].mxu0
    %v1511 = vpop.f32.mrb[0].mxu0
    %v1512 = vadd.f32 0.0, %v1511
    %v1513 = vpop.f32.mrb[0].mxu0
    %1514 = vdwg.mxu0
    %s1515 = scalar_lea.vmem %s2, 16
    %v1516 = vld [vmem:[%s1515] sm:$0xf]
    %v1517 = vld [vmem:[%s1515 + $0x4] sm:$0xf]
    %v1518 = vld [vmem:[%s1515 + $0x8] sm:$0xf]
    %v1519 = vld [vmem:[%s1515 + $0xc] sm:$0xf]
    %v1524 = vunpack.c.l.b16 %v1516
    %v1525 = vunpack.c.l.b16 %v1517
    %v1526 = vunpack.c.l.b16 %v1518
    %v1527 = vunpack.c.l.b16 %v1519
    %v1528 = vpack.c.b16 %v1525, %v1524
    %v1529 = vpack.c.b16 %v1527, %v1526
    %1532 = vmatprep.subr.bf16.mxu0 0
    %1533 = vmatpush1.bf16.msra.mxu0 %v1528
    %1534 = vmatprep.subr.bf16.mxu0 0
    %1535 = vmatpush1.bf16.msra.mxu0 %v1529
    %1536 = vmatprep.subr.bf16.mxu0 0
    %1537 = vmatpush1.bf16.msra.mxu0 0
    %1538 = vmatprep.subr.bf16.mxu0 0
    %1539 = vmatpush1.bf16.msra.mxu0 0
    %1540 = vmatprep.subr.bf16.mxu0 0
    %1541 = vmatpush1.bf16.msra.mxu0 0
    %1542 = vmatprep.subr.bf16.mxu0 0
    %1543 = vmatpush1.bf16.msra.mxu0 0
    %1544 = vmatprep.subr.bf16.mxu0 0
    %1545 = vmatpush1.bf16.msra.mxu0 0
    %1546 = vmatprep.subr.bf16.mxu0 0
    %1547 = vmatpush1.bf16.msra.mxu0 0
    %1548 = vmatprep.subr.bf16.mxu0 0
    %1549 = vmatpush1.bf16.msra.mxu0 0
    %1550 = vmatprep.subr.bf16.mxu0 0
    %1551 = vmatpush1.bf16.msra.mxu0 0
    %1552 = vmatprep.subr.bf16.mxu0 0
    %1553 = vmatpush1.bf16.msra.mxu0 0
    %1554 = vmatprep.subr.bf16.mxu0 0
    %1555 = vmatpush1.bf16.msra.mxu0 0
    %1556 = vmatprep.subr.bf16.mxu0 0
    %1557 = vmatpush1.bf16.msra.mxu0 0
    %1558 = vmatprep.subr.bf16.mxu0 0
    %1559 = vmatpush1.bf16.msra.mxu0 0
    %1560 = vmatprep.subr.bf16.mxu0 0
    %1561 = vmatpush1.bf16.msra.mxu0 0
    %1562 = vmatprep.subr.bf16.mxu0 0
    %1563 = vmatpush1.bf16.msra.mxu0 0
    %1564 = vmatprep.mubr.bf16.mxu0 0
    %1565 = vmatmul.mubr.bf16.gmra.mrb[0].mxu0 %v1472
    %v1566 = vpop.f32.mrb[0].mxu0
    %v1567 = vadd.f32 0.0, %v1566
    %v1568 = vpop.f32.mrb[0].mxu0
    %v1569 = vpop.f32.mrb[0].mxu0
    %v1570 = vadd.f32 0.0, %v1569
    %v1571 = vpop.f32.mrb[0].mxu0
    %1572 = vdwg.mxu0
    %s1573 = scalar_lea.vmem %s3, 16
    %v1574 = vld [vmem:[%s1573] sm:$0xf]
    %v1575 = vld [vmem:[%s1573 + $0x4] sm:$0xf]
    %v1576 = vld [vmem:[%s1573 + $0x8] sm:$0xf]
    %v1577 = vld [vmem:[%s1573 + $0xc] sm:$0xf]
    %v1582 = vunpack.c.l.b16 %v1574
    %v1583 = vunpack.c.l.b16 %v1575
    %v1584 = vunpack.c.l.b16 %v1576
    %v1585 = vunpack.c.l.b16 %v1577
    %v1586 = vpack.c.b16 %v1583, %v1582
    %v1587 = vpack.c.b16 %v1585, %v1584
    %1590 = vmatprep.subr.bf16.mxu0 0
    %1591 = vmatpush1.bf16.msra.mxu0 %v1586
    %1592 = vmatprep.subr.bf16.mxu0 0
    %1593 = vmatpush1.bf16.msra.mxu0 %v1587
    %1594 = vmatprep.subr.bf16.mxu0 0
    %1595 = vmatpush1.bf16.msra.mxu0 0
    %1596 = vmatprep.subr.bf16.mxu0 0
    %1597 = vmatpush1.bf16.msra.mxu0 0
    %1598 = vmatprep.subr.bf16.mxu0 0
    %1599 = vmatpush1.bf16.msra.mxu0 0
    %1600 = vmatprep.subr.bf16.mxu0 0
    %1601 = vmatpush1.bf16.msra.mxu0 0
    %1602 = vmatprep.subr.bf16.mxu0 0
    %1603 = vmatpush1.bf16.msra.mxu0 0
    %1604 = vmatprep.subr.bf16.mxu0 0
    %1605 = vmatpush1.bf16.msra.mxu0 0
    %1606 = vmatprep.subr.bf16.mxu0 0
    %1607 = vmatpush1.bf16.msra.mxu0 0
    %1608 = vmatprep.subr.bf16.mxu0 0
    %1609 = vmatpush1.bf16.msra.mxu0 0
    %1610 = vmatprep.subr.bf16.mxu0 0
    %1611 = vmatpush1.bf16.msra.mxu0 0
    %1612 = vmatprep.subr.bf16.mxu0 0
    %1613 = vmatpush1.bf16.msra.mxu0 0
    %1614 = vmatprep.subr.bf16.mxu0 0
    %1615 = vmatpush1.bf16.msra.mxu0 0
    %1616 = vmatprep.subr.bf16.mxu0 0
    %1617 = vmatpush1.bf16.msra.mxu0 0
    %1618 = vmatprep.subr.bf16.mxu0 0
    %1619 = vmatpush1.bf16.msra.mxu0 0
    %1620 = vmatprep.subr.bf16.mxu0 0
    %1621 = vmatpush1.bf16.msra.mxu0 0
    %1622 = vmatprep.mubr.bf16.mxu0 0
    %1623 = vmatmul.mubr.bf16.gmra.mrb[0].mxu0 %v1472
    %v1624 = vpop.f32.mrb[0].mxu0
    %v1625 = vadd.f32 0.0, %v1624
    %v1626 = vpop.f32.mrb[0].mxu0
    %v1627 = vpop.f32.mrb[0].mxu0
    %v1628 = vadd.f32 0.0, %v1627
    %v1629 = vpop.f32.mrb[0].mxu0
    %1630 = vdwg.mxu0
    %v1631 = vpack.c.bf16 %v1509, %v1509
    %v1632 = vpack.c.bf16 %v1512, %v1512
    %v1633 = vpack.c.bf16 %v1567, %v1567
    %v1634 = vpack.c.bf16 %v1570, %v1570
    %v1635 = vpack.c.bf16 %v1625, %v1625
    %v1636 = vpack.c.bf16 %v1628, %v1628
    %v1638 = vsel %vm246, %v1631, 0
    %v1641 = vsel %vm246, %v1633, 0
    %1643 = vmatprep.subr.bf16.mxu0 0
    %1644 = vmatpush1.bf16.xpose.msra.mxu0 %v1641
    %1645 = vmatprep.subr.bf16.mxu0 0
    %1646 = vmatpush1.bf16.xpose.msra.mxu0 0
    %1647 = vmatprep.subr.bf16.mxu0 0
    %1648 = vmatpush1.bf16.xpose.msra.mxu0 0
    %1649 = vmatprep.subr.bf16.mxu0 0
    %1650 = vmatpush1.bf16.xpose.msra.mxu0 0
    %1651 = vmatprep.subr.bf16.mxu0 0
    %1652 = vmatpush1.bf16.xpose.msra.mxu0 0
    %1653 = vmatprep.subr.bf16.mxu0 0
    %1654 = vmatpush1.bf16.xpose.msra.mxu0 0
    %1655 = vmatprep.subr.bf16.mxu0 0
    %1656 = vmatpush1.bf16.xpose.msra.mxu0 0
    %1657 = vmatprep.subr.bf16.mxu0 0
    %1658 = vmatpush1.bf16.xpose.msra.mxu0 0
    %1659 = vmatprep.subr.bf16.mxu0 0
    %1660 = vmatpush1.bf16.xpose.msra.mxu0 0
    %1661 = vmatprep.subr.bf16.mxu0 0
    %1662 = vmatpush1.bf16.xpose.msra.mxu0 0
    %1663 = vmatprep.subr.bf16.mxu0 0
    %1664 = vmatpush1.bf16.xpose.msra.mxu0 0
    %1665 = vmatprep.subr.bf16.mxu0 0
    %1666 = vmatpush1.bf16.xpose.msra.mxu0 0
    %1667 = vmatprep.subr.bf16.mxu0 0
    %1668 = vmatpush1.bf16.xpose.msra.mxu0 0
    %1669 = vmatprep.subr.bf16.mxu0 0
    %1670 = vmatpush1.bf16.xpose.msra.mxu0 0
    %1671 = vmatprep.subr.bf16.mxu0 0
    %1672 = vmatpush1.bf16.xpose.msra.mxu0 0
    %1673 = vmatprep.subr.bf16.mxu0 0
    %1674 = vmatpush1.bf16.xpose.msra.mxu0 0
    %1675 = vmatprep.mubr.bf16.mxu0 0
    %1676 = vmatmul.mubr.bf16.gmra.mrb[0].mxu0 %v1638
    %v1677 = vpop.f32.mrb[0].mxu0
    %v1678 = vadd.f32 0.0, %v1677
    %v1679 = vpop.f32.mrb[0].mxu0
    %v1680 = vpop.f32.mrb[0].mxu0
    %v1681 = vpop.f32.mrb[0].mxu0
    %1682 = vdwg.mxu0
    %v1684 = vsel %vm246, %v1632, 0
    %v1687 = vsel %vm246, %v1634, 0
    %1689 = vmatprep.subr.bf16.mxu0 0
    %1690 = vmatpush1.bf16.xpose.msra.mxu0 %v1687
    %1691 = vmatprep.subr.bf16.mxu0 0
    %1692 = vmatpush1.bf16.xpose.msra.mxu0 0
    %1693 = vmatprep.subr.bf16.mxu0 0
    %1694 = vmatpush1.bf16.xpose.msra.mxu0 0
    %1695 = vmatprep.subr.bf16.mxu0 0
    %1696 = vmatpush1.bf16.xpose.msra.mxu0 0
    %1697 = vmatprep.subr.bf16.mxu0 0
    %1698 = vmatpush1.bf16.xpose.msra.mxu0 0
    %1699 = vmatprep.subr.bf16.mxu0 0
    %1700 = vmatpush1.bf16.xpose.msra.mxu0 0
    %1701 = vmatprep.subr.bf16.mxu0 0
    %1702 = vmatpush1.bf16.xpose.msra.mxu0 0
    %1703 = vmatprep.subr.bf16.mxu0 0
    %1704 = vmatpush1.bf16.xpose.msra.mxu0 0
    %1705 = vmatprep.subr.bf16.mxu0 0
    %1706 = vmatpush1.bf16.xpose.msra.mxu0 0
    %1707 = vmatprep.subr.bf16.mxu0 0
    %1708 = vmatpush1.bf16.xpose.msra.mxu0 0
    %1709 = vmatprep.subr.bf16.mxu0 0
    %1710 = vmatpush1.bf16.xpose.msra.mxu0 0
    %1711 = vmatprep.subr.bf16.mxu0 0
    %1712 = vmatpush1.bf16.xpose.msra.mxu0 0
    %1713 = vmatprep.subr.bf16.mxu0 0
    %1714 = vmatpush1.bf16.xpose.msra.mxu0 0
    %1715 = vmatprep.subr.bf16.mxu0 0
    %1716 = vmatpush1.bf16.xpose.msra.mxu0 0
    %1717 = vmatprep.subr.bf16.mxu0 0
    %1718 = vmatpush1.bf16.xpose.msra.mxu0 0
    %1719 = vmatprep.subr.bf16.mxu0 0
    %1720 = vmatpush1.bf16.xpose.msra.mxu0 0
    %1721 = vmatprep.mubr.bf16.mxu0 0
    %1722 = vmatmul.mubr.bf16.gmra.mrb[0].mxu0 %v1684
    %v1723 = vpop.f32.mrb[0].mxu0
    %v1724 = vadd.f32 0.0, %v1723
    %v1725 = vpop.f32.mrb[0].mxu0
    %v1726 = vpop.f32.mrb[0].mxu0
    %v1727 = vpop.f32.mrb[0].mxu0
    %1728 = vdwg.mxu0
    %v1729 = vsel %vm246, %v1678, -inf
    %1730 = vmax.xlane.f32.xlu0 %v1729
    %v1731 = vpop.xlane.xlu0 %1730
    %v1732 = vsel %vm246, %v1724, -inf
    %1733 = vmax.xlane.f32.xlu0 %v1732
    %v1734 = vpop.xlane.xlu0 %1733
    %v1735 = vsub.f32 %v1678, %v1731
    %v1736 = vsub.f32 %v1724, %v1734
    %v1737 = vmul.f32 %v1735, 1.442695
    %v1738 = vpow.pop %v1737
    %v1739 = vmul.f32 %v1736, 1.442695
    %v1740 = vpow.pop %v1739
    %v1741 = vsel %vm246, %v1738, 0.0
    %1742 = vadd.xlane.f32.xlu0 %v1741
    %v1743 = vpop.xlane.xlu0 %1742
    %v1744 = vsel %vm246, %v1740, 0.0
    %1745 = vadd.xlane.f32.xlu0 %v1744
    %v1746 = vpop.xlane.xlu0 %1745
    %v1747 = vrcp.pop %v1743
    %v1748 = vrcp.pop %v1746
    %v1749 = vmul.f32 %v1738, %v1747
    %v1750 = vmul.f32 %v1740, %v1748
    %v1751 = vpack.c.bf16 %v1749, %v1749
    %v1752 = vpack.c.bf16 %v1750, %v1750
    %v1754 = vsel %vm246, %v1751, 0
    %v1757 = vsel %vm366, %v1635, 0
    %1759 = vmatprep.subr.bf16.mxu0 0
    %1760 = vmatpush1.bf16.msra.mxu0 %v1757
    %1761 = vmatprep.subr.bf16.mxu0 0
    %1762 = vmatpush1.bf16.msra.mxu0 0
    %1763 = vmatprep.subr.bf16.mxu0 0
    %1764 = vmatpush1.bf16.msra.mxu0 0
    %1765 = vmatprep.subr.bf16.mxu0 0
    %1766 = vmatpush1.bf16.msra.mxu0 0
    %1767 = vmatprep.subr.bf16.mxu0 0
    %1768 = vmatpush1.bf16.msra.mxu0 0
    %1769 = vmatprep.subr.bf16.mxu0 0
    %1770 = vmatpush1.bf16.msra.mxu0 0
    %1771 = vmatprep.subr.bf16.mxu0 0
    %1772 = vmatpush1.bf16.msra.mxu0 0
    %1773 = vmatprep.subr.bf16.mxu0 0
    %1774 = vmatpush1.bf16.msra.mxu0 0
    %1775 = vmatprep.subr.bf16.mxu0 0
    %1776 = vmatpush1.bf16.msra.mxu0 0
    %1777 = vmatprep.subr.bf16.mxu0 0
    %1778 = vmatpush1.bf16.msra.mxu0 0
    %1779 = vmatprep.subr.bf16.mxu0 0
    %1780 = vmatpush1.bf16.msra.mxu0 0
    %1781 = vmatprep.subr.bf16.mxu0 0
    %1782 = vmatpush1.bf16.msra.mxu0 0
    %1783 = vmatprep.subr.bf16.mxu0 0
    %1784 = vmatpush1.bf16.msra.mxu0 0
    %1785 = vmatprep.subr.bf16.mxu0 0
    %1786 = vmatpush1.bf16.msra.mxu0 0
    %1787 = vmatprep.subr.bf16.mxu0 0
    %1788 = vmatpush1.bf16.msra.mxu0 0
    %1789 = vmatprep.subr.bf16.mxu0 0
    %1790 = vmatpush1.bf16.msra.mxu0 0
    %1791 = vmatprep.mubr.bf16.mxu0 0
    %1792 = vmatmul.mubr.bf16.gmra.mrb[0].mxu0 %v1754
    %v1793 = vpop.f32.mrb[0].mxu0
    %v1794 = vadd.f32 0.0, %v1793
    %v1795 = vpop.f32.mrb[0].mxu0
    %v1796 = vpop.f32.mrb[0].mxu0
    %v1797 = vpop.f32.mrb[0].mxu0
    %1798 = vdwg.mxu0
    %v1800 = vsel %vm246, %v1752, 0
    %v1803 = vsel %vm366, %v1636, 0
    %1805 = vmatprep.subr.bf16.mxu0 0
    %1806 = vmatpush1.bf16.msra.mxu0 %v1803
    %1807 = vmatprep.subr.bf16.mxu0 0
    %1808 = vmatpush1.bf16.msra.mxu0 0
    %1809 = vmatprep.subr.bf16.mxu0 0
    %1810 = vmatpush1.bf16.msra.mxu0 0
    %1811 = vmatprep.subr.bf16.mxu0 0
    %1812 = vmatpush1.bf16.msra.mxu0 0
    %1813 = vmatprep.subr.bf16.mxu0 0
    %1814 = vmatpush1.bf16.msra.mxu0 0
    %1815 = vmatprep.subr.bf16.mxu0 0
    %1816 = vmatpush1.bf16.msra.mxu0 0
    %1817 = vmatprep.subr.bf16.mxu0 0
    %1818 = vmatpush1.bf16.msra.mxu0 0
    %1819 = vmatprep.subr.bf16.mxu0 0
    %1820 = vmatpush1.bf16.msra.mxu0 0
    %1821 = vmatprep.subr.bf16.mxu0 0
    %1822 = vmatpush1.bf16.msra.mxu0 0
    %1823 = vmatprep.subr.bf16.mxu0 0
    %1824 = vmatpush1.bf16.msra.mxu0 0
    %1825 = vmatprep.subr.bf16.mxu0 0
    %1826 = vmatpush1.bf16.msra.mxu0 0
    %1827 = vmatprep.subr.bf16.mxu0 0
    %1828 = vmatpush1.bf16.msra.mxu0 0
    %1829 = vmatprep.subr.bf16.mxu0 0
    %1830 = vmatpush1.bf16.msra.mxu0 0
    %1831 = vmatprep.subr.bf16.mxu0 0
    %1832 = vmatpush1.bf16.msra.mxu0 0
    %1833 = vmatprep.subr.bf16.mxu0 0
    %1834 = vmatpush1.bf16.msra.mxu0 0
    %1835 = vmatprep.subr.bf16.mxu0 0
    %1836 = vmatpush1.bf16.msra.mxu0 0
    %1837 = vmatprep.mubr.bf16.mxu0 0
    %1838 = vmatmul.mubr.bf16.gmra.mrb[0].mxu0 %v1800
    %v1839 = vpop.f32.mrb[0].mxu0
    %v1840 = vadd.f32 0.0, %v1839
    %v1841 = vpop.f32.mrb[0].mxu0
    %v1842 = vpop.f32.mrb[0].mxu0
    %v1843 = vpop.f32.mrb[0].mxu0
    %1844 = vdwg.mxu0
    %1846 = vrot.lane.b32.xlu0 %v1631, 120
    %v1847 = vpop.permute.xlu0 %1846
    %1849 = vrot.lane.b32.xlu0 %v1633, 120
    %v1850 = vpop.permute.xlu0 %1849
    %v1852 = vsel %vm246, %v1847, 0
    %v1855 = vsel %vm246, %v1850, 0
    %1857 = vmatprep.subr.bf16.mxu0 0
    %1858 = vmatpush1.bf16.xpose.msra.mxu0 %v1855
    %1859 = vmatprep.subr.bf16.mxu0 0
    %1860 = vmatpush1.bf16.xpose.msra.mxu0 0
    %1861 = vmatprep.subr.bf16.mxu0 0
    %1862 = vmatpush1.bf16.xpose.msra.mxu0 0
    %1863 = vmatprep.subr.bf16.mxu0 0
    %1864 = vmatpush1.bf16.xpose.msra.mxu0 0
    %1865 = vmatprep.subr.bf16.mxu0 0
    %1866 = vmatpush1.bf16.xpose.msra.mxu0 0
    %1867 = vmatprep.subr.bf16.mxu0 0
    %1868 = vmatpush1.bf16.xpose.msra.mxu0 0
    %1869 = vmatprep.subr.bf16.mxu0 0
    %1870 = vmatpush1.bf16.xpose.msra.mxu0 0
    %1871 = vmatprep.subr.bf16.mxu0 0
    %1872 = vmatpush1.bf16.xpose.msra.mxu0 0
    %1873 = vmatprep.subr.bf16.mxu0 0
    %1874 = vmatpush1.bf16.xpose.msra.mxu0 0
    %1875 = vmatprep.subr.bf16.mxu0 0
    %1876 = vmatpush1.bf16.xpose.msra.mxu0 0
    %1877 = vmatprep.subr.bf16.mxu0 0
    %1878 = vmatpush1.bf16.xpose.msra.mxu0 0
    %1879 = vmatprep.subr.bf16.mxu0 0
    %1880 = vmatpush1.bf16.xpose.msra.mxu0 0
    %1881 = vmatprep.subr.bf16.mxu0 0
    %1882 = vmatpush1.bf16.xpose.msra.mxu0 0
    %1883 = vmatprep.subr.bf16.mxu0 0
    %1884 = vmatpush1.bf16.xpose.msra.mxu0 0
    %1885 = vmatprep.subr.bf16.mxu0 0
    %1886 = vmatpush1.bf16.xpose.msra.mxu0 0
    %1887 = vmatprep.subr.bf16.mxu0 0
    %1888 = vmatpush1.bf16.xpose.msra.mxu0 0
    %1889 = vmatprep.mubr.bf16.mxu0 0
    %1890 = vmatmul.mubr.bf16.gmra.mrb[0].mxu0 %v1852
    %v1891 = vpop.f32.mrb[0].mxu0
    %v1892 = vadd.f32 0.0, %v1891
    %v1893 = vpop.f32.mrb[0].mxu0
    %v1894 = vpop.f32.mrb[0].mxu0
    %v1895 = vpop.f32.mrb[0].mxu0
    %1896 = vdwg.mxu0
    %1898 = vrot.lane.b32.xlu0 %v1632, 120
    %v1899 = vpop.permute.xlu0 %1898
    %1901 = vrot.lane.b32.xlu0 %v1634, 120
    %v1902 = vpop.permute.xlu0 %1901
    %v1904 = vsel %vm246, %v1899, 0
    %v1907 = vsel %vm246, %v1902, 0
    %1909 = vmatprep.subr.bf16.mxu0 0
    %1910 = vmatpush1.bf16.xpose.msra.mxu0 %v1907
    %1911 = vmatprep.subr.bf16.mxu0 0
    %1912 = vmatpush1.bf16.xpose.msra.mxu0 0
    %1913 = vmatprep.subr.bf16.mxu0 0
    %1914 = vmatpush1.bf16.xpose.msra.mxu0 0
    %1915 = vmatprep.subr.bf16.mxu0 0
    %1916 = vmatpush1.bf16.xpose.msra.mxu0 0
    %1917 = vmatprep.subr.bf16.mxu0 0
    %1918 = vmatpush1.bf16.xpose.msra.mxu0 0
    %1919 = vmatprep.subr.bf16.mxu0 0
    %1920 = vmatpush1.bf16.xpose.msra.mxu0 0
    %1921 = vmatprep.subr.bf16.mxu0 0
    %1922 = vmatpush1.bf16.xpose.msra.mxu0 0
    %1923 = vmatprep.subr.bf16.mxu0 0
    %1924 = vmatpush1.bf16.xpose.msra.mxu0 0
    %1925 = vmatprep.subr.bf16.mxu0 0
    %1926 = vmatpush1.bf16.xpose.msra.mxu0 0
    %1927 = vmatprep.subr.bf16.mxu0 0
    %1928 = vmatpush1.bf16.xpose.msra.mxu0 0
    %1929 = vmatprep.subr.bf16.mxu0 0
    %1930 = vmatpush1.bf16.xpose.msra.mxu0 0
    %1931 = vmatprep.subr.bf16.mxu0 0
    %1932 = vmatpush1.bf16.xpose.msra.mxu0 0
    %1933 = vmatprep.subr.bf16.mxu0 0
    %1934 = vmatpush1.bf16.xpose.msra.mxu0 0
    %1935 = vmatprep.subr.bf16.mxu0 0
    %1936 = vmatpush1.bf16.xpose.msra.mxu0 0
    %1937 = vmatprep.subr.bf16.mxu0 0
    %1938 = vmatpush1.bf16.xpose.msra.mxu0 0
    %1939 = vmatprep.subr.bf16.mxu0 0
    %1940 = vmatpush1.bf16.xpose.msra.mxu0 0
    %1941 = vmatprep.mubr.bf16.mxu0 0
    %1942 = vmatmul.mubr.bf16.gmra.mrb[0].mxu0 %v1904
    %v1943 = vpop.f32.mrb[0].mxu0
    %v1944 = vadd.f32 0.0, %v1943
    %v1945 = vpop.f32.mrb[0].mxu0
    %v1946 = vpop.f32.mrb[0].mxu0
    %v1947 = vpop.f32.mrb[0].mxu0
    %1948 = vdwg.mxu0
    %v1949 = vsel %vm246, %v1892, -inf
    %1950 = vmax.xlane.f32.xlu0 %v1949
    %v1951 = vpop.xlane.xlu0 %1950
    %v1952 = vsel %vm246, %v1944, -inf
    %1953 = vmax.xlane.f32.xlu0 %v1952
    %v1954 = vpop.xlane.xlu0 %1953
    %v1955 = vsub.f32 %v1892, %v1951
    %v1956 = vsub.f32 %v1944, %v1954
    %v1957 = vmul.f32 %v1955, 1.442695
    %v1958 = vpow.pop %v1957
    %v1959 = vmul.f32 %v1956, 1.442695
    %v1960 = vpow.pop %v1959
    %v1961 = vsel %vm246, %v1958, 0.0
    %1962 = vadd.xlane.f32.xlu0 %v1961
    %v1963 = vpop.xlane.xlu0 %1962
    %v1964 = vsel %vm246, %v1960, 0.0
    %1965 = vadd.xlane.f32.xlu0 %v1964
    %v1966 = vpop.xlane.xlu0 %1965
    %v1967 = vrcp.pop %v1963
    %v1968 = vrcp.pop %v1966
    %v1969 = vmul.f32 %v1958, %v1967
    %v1970 = vmul.f32 %v1960, %v1968
    %v1971 = vpack.c.bf16 %v1969, %v1969
    %v1972 = vpack.c.bf16 %v1970, %v1970
    %1974 = vrot.lane.b32.xlu0 %v1635, 120
    %v1975 = vpop.permute.xlu0 %1974
    %v1977 = vsel %vm246, %v1971, 0
    %v1980 = vsel %vm366, %v1975, 0
    %1982 = vmatprep.subr.bf16.mxu0 0
    %1983 = vmatpush1.bf16.msra.mxu0 %v1980
    %1984 = vmatprep.subr.bf16.mxu0 0
    %1985 = vmatpush1.bf16.msra.mxu0 0
    %1986 = vmatprep.subr.bf16.mxu0 0
    %1987 = vmatpush1.bf16.msra.mxu0 0
    %1988 = vmatprep.subr.bf16.mxu0 0
    %1989 = vmatpush1.bf16.msra.mxu0 0
    %1990 = vmatprep.subr.bf16.mxu0 0
    %1991 = vmatpush1.bf16.msra.mxu0 0
    %1992 = vmatprep.subr.bf16.mxu0 0
    %1993 = vmatpush1.bf16.msra.mxu0 0
    %1994 = vmatprep.subr.bf16.mxu0 0
    %1995 = vmatpush1.bf16.msra.mxu0 0
    %1996 = vmatprep.subr.bf16.mxu0 0
    %1997 = vmatpush1.bf16.msra.mxu0 0
    %1998 = vmatprep.subr.bf16.mxu0 0
    %1999 = vmatpush1.bf16.msra.mxu0 0
    %2000 = vmatprep.subr.bf16.mxu0 0
    %2001 = vmatpush1.bf16.msra.mxu0 0
    %2002 = vmatprep.subr.bf16.mxu0 0
    %2003 = vmatpush1.bf16.msra.mxu0 0
    %2004 = vmatprep.subr.bf16.mxu0 0
    %2005 = vmatpush1.bf16.msra.mxu0 0
    %2006 = vmatprep.subr.bf16.mxu0 0
    %2007 = vmatpush1.bf16.msra.mxu0 0
    %2008 = vmatprep.subr.bf16.mxu0 0
    %2009 = vmatpush1.bf16.msra.mxu0 0
    %2010 = vmatprep.subr.bf16.mxu0 0
    %2011 = vmatpush1.bf16.msra.mxu0 0
    %2012 = vmatprep.subr.bf16.mxu0 0
    %2013 = vmatpush1.bf16.msra.mxu0 0
    %2014 = vmatprep.mubr.bf16.mxu0 0
    %2015 = vmatmul.mubr.bf16.gmra.mrb[0].mxu0 %v1977
    %v2016 = vpop.f32.mrb[0].mxu0
    %v2017 = vadd.f32 0.0, %v2016
    %v2018 = vpop.f32.mrb[0].mxu0
    %v2019 = vpop.f32.mrb[0].mxu0
    %v2020 = vpop.f32.mrb[0].mxu0
    %2021 = vdwg.mxu0
    %2023 = vrot.lane.b32.xlu0 %v1636, 120
    %v2024 = vpop.permute.xlu0 %2023
    %v2026 = vsel %vm246, %v1972, 0
    %v2029 = vsel %vm366, %v2024, 0
    %2031 = vmatprep.subr.bf16.mxu0 0
    %2032 = vmatpush1.bf16.msra.mxu0 %v2029
    %2033 = vmatprep.subr.bf16.mxu0 0
    %2034 = vmatpush1.bf16.msra.mxu0 0
    %2035 = vmatprep.subr.bf16.mxu0 0
    %2036 = vmatpush1.bf16.msra.mxu0 0
    %2037 = vmatprep.subr.bf16.mxu0 0
    %2038 = vmatpush1.bf16.msra.mxu0 0
    %2039 = vmatprep.subr.bf16.mxu0 0
    %2040 = vmatpush1.bf16.msra.mxu0 0
    %2041 = vmatprep.subr.bf16.mxu0 0
    %2042 = vmatpush1.bf16.msra.mxu0 0
    %2043 = vmatprep.subr.bf16.mxu0 0
    %2044 = vmatpush1.bf16.msra.mxu0 0
    %2045 = vmatprep.subr.bf16.mxu0 0
    %2046 = vmatpush1.bf16.msra.mxu0 0
    %2047 = vmatprep.subr.bf16.mxu0 0
    %2048 = vmatpush1.bf16.msra.mxu0 0
    %2049 = vmatprep.subr.bf16.mxu0 0
    %2050 = vmatpush1.bf16.msra.mxu0 0
    %2051 = vmatprep.subr.bf16.mxu0 0
    %2052 = vmatpush1.bf16.msra.mxu0 0
    %2053 = vmatprep.subr.bf16.mxu0 0
    %2054 = vmatpush1.bf16.msra.mxu0 0
    %2055 = vmatprep.subr.bf16.mxu0 0
    %2056 = vmatpush1.bf16.msra.mxu0 0
    %2057 = vmatprep.subr.bf16.mxu0 0
    %2058 = vmatpush1.bf16.msra.mxu0 0
    %2059 = vmatprep.subr.bf16.mxu0 0
    %2060 = vmatpush1.bf16.msra.mxu0 0
    %2061 = vmatprep.subr.bf16.mxu0 0
    %2062 = vmatpush1.bf16.msra.mxu0 0
    %2063 = vmatprep.mubr.bf16.mxu0 0
    %2064 = vmatmul.mubr.bf16.gmra.mrb[0].mxu0 %v2026
    %v2065 = vpop.f32.mrb[0].mxu0
    %v2066 = vadd.f32 0.0, %v2065
    %v2067 = vpop.f32.mrb[0].mxu0
    %v2068 = vpop.f32.mrb[0].mxu0
    %v2069 = vpop.f32.mrb[0].mxu0
    %2070 = vdwg.mxu0
    %2071 = vrot.lane.b32.xlu0 %v1631, 112
    %v2072 = vpop.permute.xlu0 %2071
    %2073 = vrot.lane.b32.xlu0 %v1633, 112
    %v2074 = vpop.permute.xlu0 %2073
    %v2076 = vsel %vm246, %v2072, 0
    %v2079 = vsel %vm246, %v2074, 0
    %2081 = vmatprep.subr.bf16.mxu0 0
    %2082 = vmatpush1.bf16.xpose.msra.mxu0 %v2079
    %2083 = vmatprep.subr.bf16.mxu0 0
    %2084 = vmatpush1.bf16.xpose.msra.mxu0 0
    %2085 = vmatprep.subr.bf16.mxu0 0
    %2086 = vmatpush1.bf16.xpose.msra.mxu0 0
    %2087 = vmatprep.subr.bf16.mxu0 0
    %2088 = vmatpush1.bf16.xpose.msra.mxu0 0
    %2089 = vmatprep.subr.bf16.mxu0 0
    %2090 = vmatpush1.bf16.xpose.msra.mxu0 0
    %2091 = vmatprep.subr.bf16.mxu0 0
    %2092 = vmatpush1.bf16.xpose.msra.mxu0 0
    %2093 = vmatprep.subr.bf16.mxu0 0
    %2094 = vmatpush1.bf16.xpose.msra.mxu0 0
    %2095 = vmatprep.subr.bf16.mxu0 0
    %2096 = vmatpush1.bf16.xpose.msra.mxu0 0
    %2097 = vmatprep.subr.bf16.mxu0 0
    %2098 = vmatpush1.bf16.xpose.msra.mxu0 0
    %2099 = vmatprep.subr.bf16.mxu0 0
    %2100 = vmatpush1.bf16.xpose.msra.mxu0 0
    %2101 = vmatprep.subr.bf16.mxu0 0
    %2102 = vmatpush1.bf16.xpose.msra.mxu0 0
    %2103 = vmatprep.subr.bf16.mxu0 0
    %2104 = vmatpush1.bf16.xpose.msra.mxu0 0
    %2105 = vmatprep.subr.bf16.mxu0 0
    %2106 = vmatpush1.bf16.xpose.msra.mxu0 0
    %2107 = vmatprep.subr.bf16.mxu0 0
    %2108 = vmatpush1.bf16.xpose.msra.mxu0 0
    %2109 = vmatprep.subr.bf16.mxu0 0
    %2110 = vmatpush1.bf16.xpose.msra.mxu0 0
    %2111 = vmatprep.subr.bf16.mxu0 0
    %2112 = vmatpush1.bf16.xpose.msra.mxu0 0
    %2113 = vmatprep.mubr.bf16.mxu0 0
    %2114 = vmatmul.mubr.bf16.gmra.mrb[0].mxu0 %v2076
    %v2115 = vpop.f32.mrb[0].mxu0
    %v2116 = vadd.f32 0.0, %v2115
    %v2117 = vpop.f32.mrb[0].mxu0
    %v2118 = vpop.f32.mrb[0].mxu0
    %v2119 = vpop.f32.mrb[0].mxu0
    %2120 = vdwg.mxu0
    %2121 = vrot.lane.b32.xlu0 %v1632, 112
    %v2122 = vpop.permute.xlu0 %2121
    %2123 = vrot.lane.b32.xlu0 %v1634, 112
    %v2124 = vpop.permute.xlu0 %2123
    %v2126 = vsel %vm246, %v2122, 0
    %v2129 = vsel %vm246, %v2124, 0
    %2131 = vmatprep.subr.bf16.mxu0 0
    %2132 = vmatpush1.bf16.xpose.msra.mxu0 %v2129
    %2133 = vmatprep.subr.bf16.mxu0 0
    %2134 = vmatpush1.bf16.xpose.msra.mxu0 0
    %2135 = vmatprep.subr.bf16.mxu0 0
    %2136 = vmatpush1.bf16.xpose.msra.mxu0 0
    %2137 = vmatprep.subr.bf16.mxu0 0
    %2138 = vmatpush1.bf16.xpose.msra.mxu0 0
    %2139 = vmatprep.subr.bf16.mxu0 0
    %2140 = vmatpush1.bf16.xpose.msra.mxu0 0
    %2141 = vmatprep.subr.bf16.mxu0 0
    %2142 = vmatpush1.bf16.xpose.msra.mxu0 0
    %2143 = vmatprep.subr.bf16.mxu0 0
    %2144 = vmatpush1.bf16.xpose.msra.mxu0 0
    %2145 = vmatprep.subr.bf16.mxu0 0
    %2146 = vmatpush1.bf16.xpose.msra.mxu0 0
    %2147 = vmatprep.subr.bf16.mxu0 0
    %2148 = vmatpush1.bf16.xpose.msra.mxu0 0
    %2149 = vmatprep.subr.bf16.mxu0 0
    %2150 = vmatpush1.bf16.xpose.msra.mxu0 0
    %2151 = vmatprep.subr.bf16.mxu0 0
    %2152 = vmatpush1.bf16.xpose.msra.mxu0 0
    %2153 = vmatprep.subr.bf16.mxu0 0
    %2154 = vmatpush1.bf16.xpose.msra.mxu0 0
    %2155 = vmatprep.subr.bf16.mxu0 0
    %2156 = vmatpush1.bf16.xpose.msra.mxu0 0
    %2157 = vmatprep.subr.bf16.mxu0 0
    %2158 = vmatpush1.bf16.xpose.msra.mxu0 0
    %2159 = vmatprep.subr.bf16.mxu0 0
    %2160 = vmatpush1.bf16.xpose.msra.mxu0 0
    %2161 = vmatprep.subr.bf16.mxu0 0
    %2162 = vmatpush1.bf16.xpose.msra.mxu0 0
    %2163 = vmatprep.mubr.bf16.mxu0 0
    %2164 = vmatmul.mubr.bf16.gmra.mrb[0].mxu0 %v2126
    %v2165 = vpop.f32.mrb[0].mxu0
    %v2166 = vadd.f32 0.0, %v2165
    %v2167 = vpop.f32.mrb[0].mxu0
    %v2168 = vpop.f32.mrb[0].mxu0
    %v2169 = vpop.f32.mrb[0].mxu0
    %2170 = vdwg.mxu0
    %v2171 = vsel %vm246, %v2116, -inf
    %2172 = vmax.xlane.f32.xlu0 %v2171
    %v2173 = vpop.xlane.xlu0 %2172
    %v2174 = vsel %vm246, %v2166, -inf
    %2175 = vmax.xlane.f32.xlu0 %v2174
    %v2176 = vpop.xlane.xlu0 %2175
    %v2177 = vsub.f32 %v2116, %v2173
    %v2178 = vsub.f32 %v2166, %v2176
    %v2179 = vmul.f32 %v2177, 1.442695
    %v2180 = vpow.pop %v2179
    %v2181 = vmul.f32 %v2178, 1.442695
    %v2182 = vpow.pop %v2181
    %v2183 = vsel %vm246, %v2180, 0.0
    %2184 = vadd.xlane.f32.xlu0 %v2183
    %v2185 = vpop.xlane.xlu0 %2184
    %v2186 = vsel %vm246, %v2182, 0.0
    %2187 = vadd.xlane.f32.xlu0 %v2186
    %v2188 = vpop.xlane.xlu0 %2187
    %v2189 = vrcp.pop %v2185
    %v2190 = vrcp.pop %v2188
    %v2191 = vmul.f32 %v2180, %v2189
    %v2192 = vmul.f32 %v2182, %v2190
    %v2193 = vpack.c.bf16 %v2191, %v2191
    %v2194 = vpack.c.bf16 %v2192, %v2192
    %2195 = vrot.lane.b32.xlu0 %v1635, 112
    %v2196 = vpop.permute.xlu0 %2195
    %v2198 = vsel %vm246, %v2193, 0
    %v2201 = vsel %vm366, %v2196, 0
    %2203 = vmatprep.subr.bf16.mxu0 0
    %2204 = vmatpush1.bf16.msra.mxu0 %v2201
    %2205 = vmatprep.subr.bf16.mxu0 0
    %2206 = vmatpush1.bf16.msra.mxu0 0
    %2207 = vmatprep.subr.bf16.mxu0 0
    %2208 = vmatpush1.bf16.msra.mxu0 0
    %2209 = vmatprep.subr.bf16.mxu0 0
    %2210 = vmatpush1.bf16.msra.mxu0 0
    %2211 = vmatprep.subr.bf16.mxu0 0
    %2212 = vmatpush1.bf16.msra.mxu0 0
    %2213 = vmatprep.subr.bf16.mxu0 0
    %2214 = vmatpush1.bf16.msra.mxu0 0
    %2215 = vmatprep.subr.bf16.mxu0 0
    %2216 = vmatpush1.bf16.msra.mxu0 0
    %2217 = vmatprep.subr.bf16.mxu0 0
    %2218 = vmatpush1.bf16.msra.mxu0 0
    %2219 = vmatprep.subr.bf16.mxu0 0
    %2220 = vmatpush1.bf16.msra.mxu0 0
    %2221 = vmatprep.subr.bf16.mxu0 0
    %2222 = vmatpush1.bf16.msra.mxu0 0
    %2223 = vmatprep.subr.bf16.mxu0 0
    %2224 = vmatpush1.bf16.msra.mxu0 0
    %2225 = vmatprep.subr.bf16.mxu0 0
    %2226 = vmatpush1.bf16.msra.mxu0 0
    %2227 = vmatprep.subr.bf16.mxu0 0
    %2228 = vmatpush1.bf16.msra.mxu0 0
    %2229 = vmatprep.subr.bf16.mxu0 0
    %2230 = vmatpush1.bf16.msra.mxu0 0
    %2231 = vmatprep.subr.bf16.mxu0 0
    %2232 = vmatpush1.bf16.msra.mxu0 0
    %2233 = vmatprep.subr.bf16.mxu0 0
    %2234 = vmatpush1.bf16.msra.mxu0 0
    %2235 = vmatprep.mubr.bf16.mxu0 0
    %2236 = vmatmul.mubr.bf16.gmra.mrb[0].mxu0 %v2198
    %v2237 = vpop.f32.mrb[0].mxu0
    %v2238 = vadd.f32 0.0, %v2237
    %v2239 = vpop.f32.mrb[0].mxu0
    %v2240 = vpop.f32.mrb[0].mxu0
    %v2241 = vpop.f32.mrb[0].mxu0
    %2242 = vdwg.mxu0
    %2243 = vrot.lane.b32.xlu0 %v1636, 112
    %v2244 = vpop.permute.xlu0 %2243
    %v2246 = vsel %vm246, %v2194, 0
    %v2249 = vsel %vm366, %v2244, 0
    %2251 = vmatprep.subr.bf16.mxu0 0
    %2252 = vmatpush1.bf16.msra.mxu0 %v2249
    %2253 = vmatprep.subr.bf16.mxu0 0
    %2254 = vmatpush1.bf16.msra.mxu0 0
    %2255 = vmatprep.subr.bf16.mxu0 0
    %2256 = vmatpush1.bf16.msra.mxu0 0
    %2257 = vmatprep.subr.bf16.mxu0 0
    %2258 = vmatpush1.bf16.msra.mxu0 0
    %2259 = vmatprep.subr.bf16.mxu0 0
    %2260 = vmatpush1.bf16.msra.mxu0 0
    %2261 = vmatprep.subr.bf16.mxu0 0
    %2262 = vmatpush1.bf16.msra.mxu0 0
    %2263 = vmatprep.subr.bf16.mxu0 0
    %2264 = vmatpush1.bf16.msra.mxu0 0
    %2265 = vmatprep.subr.bf16.mxu0 0
    %2266 = vmatpush1.bf16.msra.mxu0 0
    %2267 = vmatprep.subr.bf16.mxu0 0
    %2268 = vmatpush1.bf16.msra.mxu0 0
    %2269 = vmatprep.subr.bf16.mxu0 0
    %2270 = vmatpush1.bf16.msra.mxu0 0
    %2271 = vmatprep.subr.bf16.mxu0 0
    %2272 = vmatpush1.bf16.msra.mxu0 0
    %2273 = vmatprep.subr.bf16.mxu0 0
    %2274 = vmatpush1.bf16.msra.mxu0 0
    %2275 = vmatprep.subr.bf16.mxu0 0
    %2276 = vmatpush1.bf16.msra.mxu0 0
    %2277 = vmatprep.subr.bf16.mxu0 0
    %2278 = vmatpush1.bf16.msra.mxu0 0
    %2279 = vmatprep.subr.bf16.mxu0 0
    %2280 = vmatpush1.bf16.msra.mxu0 0
    %2281 = vmatprep.subr.bf16.mxu0 0
    %2282 = vmatpush1.bf16.msra.mxu0 0
    %2283 = vmatprep.mubr.bf16.mxu0 0
    %2284 = vmatmul.mubr.bf16.gmra.mrb[0].mxu0 %v2246
    %v2285 = vpop.f32.mrb[0].mxu0
    %v2286 = vadd.f32 0.0, %v2285
    %v2287 = vpop.f32.mrb[0].mxu0
    %v2288 = vpop.f32.mrb[0].mxu0
    %v2289 = vpop.f32.mrb[0].mxu0
    %2290 = vdwg.mxu0
    %2291 = vrot.lane.b32.xlu0 %v1631, 104
    %v2292 = vpop.permute.xlu0 %2291
    %2293 = vrot.lane.b32.xlu0 %v1633, 104
    %v2294 = vpop.permute.xlu0 %2293
    %v2296 = vsel %vm246, %v2292, 0
    %v2299 = vsel %vm246, %v2294, 0
    %2301 = vmatprep.subr.bf16.mxu0 0
    %2302 = vmatpush1.bf16.xpose.msra.mxu0 %v2299
    %2303 = vmatprep.subr.bf16.mxu0 0
    %2304 = vmatpush1.bf16.xpose.msra.mxu0 0
    %2305 = vmatprep.subr.bf16.mxu0 0
    %2306 = vmatpush1.bf16.xpose.msra.mxu0 0
    %2307 = vmatprep.subr.bf16.mxu0 0
    %2308 = vmatpush1.bf16.xpose.msra.mxu0 0
    %2309 = vmatprep.subr.bf16.mxu0 0
    %2310 = vmatpush1.bf16.xpose.msra.mxu0 0
    %2311 = vmatprep.subr.bf16.mxu0 0
    %2312 = vmatpush1.bf16.xpose.msra.mxu0 0
    %2313 = vmatprep.subr.bf16.mxu0 0
    %2314 = vmatpush1.bf16.xpose.msra.mxu0 0
    %2315 = vmatprep.subr.bf16.mxu0 0
    %2316 = vmatpush1.bf16.xpose.msra.mxu0 0
    %2317 = vmatprep.subr.bf16.mxu0 0
    %2318 = vmatpush1.bf16.xpose.msra.mxu0 0
    %2319 = vmatprep.subr.bf16.mxu0 0
    %2320 = vmatpush1.bf16.xpose.msra.mxu0 0
    %2321 = vmatprep.subr.bf16.mxu0 0
    %2322 = vmatpush1.bf16.xpose.msra.mxu0 0
    %2323 = vmatprep.subr.bf16.mxu0 0
    %2324 = vmatpush1.bf16.xpose.msra.mxu0 0
    %2325 = vmatprep.subr.bf16.mxu0 0
    %2326 = vmatpush1.bf16.xpose.msra.mxu0 0
    %2327 = vmatprep.subr.bf16.mxu0 0
    %2328 = vmatpush1.bf16.xpose.msra.mxu0 0
    %2329 = vmatprep.subr.bf16.mxu0 0
    %2330 = vmatpush1.bf16.xpose.msra.mxu0 0
    %2331 = vmatprep.subr.bf16.mxu0 0
    %2332 = vmatpush1.bf16.xpose.msra.mxu0 0
    %2333 = vmatprep.mubr.bf16.mxu0 0
    %2334 = vmatmul.mubr.bf16.gmra.mrb[0].mxu0 %v2296
    %v2335 = vpop.f32.mrb[0].mxu0
    %v2336 = vadd.f32 0.0, %v2335
    %v2337 = vpop.f32.mrb[0].mxu0
    %v2338 = vpop.f32.mrb[0].mxu0
    %v2339 = vpop.f32.mrb[0].mxu0
    %2340 = vdwg.mxu0
    %2341 = vrot.lane.b32.xlu0 %v1632, 104
    %v2342 = vpop.permute.xlu0 %2341
    %2343 = vrot.lane.b32.xlu0 %v1634, 104
    %v2344 = vpop.permute.xlu0 %2343
    %v2346 = vsel %vm246, %v2342, 0
    %v2349 = vsel %vm246, %v2344, 0
    %2351 = vmatprep.subr.bf16.mxu0 0
    %2352 = vmatpush1.bf16.xpose.msra.mxu0 %v2349
    %2353 = vmatprep.subr.bf16.mxu0 0
    %2354 = vmatpush1.bf16.xpose.msra.mxu0 0
    %2355 = vmatprep.subr.bf16.mxu0 0
    %2356 = vmatpush1.bf16.xpose.msra.mxu0 0
    %2357 = vmatprep.subr.bf16.mxu0 0
    %2358 = vmatpush1.bf16.xpose.msra.mxu0 0
    %2359 = vmatprep.subr.bf16.mxu0 0
    %2360 = vmatpush1.bf16.xpose.msra.mxu0 0
    %2361 = vmatprep.subr.bf16.mxu0 0
    %2362 = vmatpush1.bf16.xpose.msra.mxu0 0
    %2363 = vmatprep.subr.bf16.mxu0 0
    %2364 = vmatpush1.bf16.xpose.msra.mxu0 0
    %2365 = vmatprep.subr.bf16.mxu0 0
    %2366 = vmatpush1.bf16.xpose.msra.mxu0 0
    %2367 = vmatprep.subr.bf16.mxu0 0
    %2368 = vmatpush1.bf16.xpose.msra.mxu0 0
    %2369 = vmatprep.subr.bf16.mxu0 0
    %2370 = vmatpush1.bf16.xpose.msra.mxu0 0
    %2371 = vmatprep.subr.bf16.mxu0 0
    %2372 = vmatpush1.bf16.xpose.msra.mxu0 0
    %2373 = vmatprep.subr.bf16.mxu0 0
    %2374 = vmatpush1.bf16.xpose.msra.mxu0 0
    %2375 = vmatprep.subr.bf16.mxu0 0
    %2376 = vmatpush1.bf16.xpose.msra.mxu0 0
    %2377 = vmatprep.subr.bf16.mxu0 0
    %2378 = vmatpush1.bf16.xpose.msra.mxu0 0
    %2379 = vmatprep.subr.bf16.mxu0 0
    %2380 = vmatpush1.bf16.xpose.msra.mxu0 0
    %2381 = vmatprep.subr.bf16.mxu0 0
    %2382 = vmatpush1.bf16.xpose.msra.mxu0 0
    %2383 = vmatprep.mubr.bf16.mxu0 0
    %2384 = vmatmul.mubr.bf16.gmra.mrb[0].mxu0 %v2346
    %v2385 = vpop.f32.mrb[0].mxu0
    %v2386 = vadd.f32 0.0, %v2385
    %v2387 = vpop.f32.mrb[0].mxu0
    %v2388 = vpop.f32.mrb[0].mxu0
    %v2389 = vpop.f32.mrb[0].mxu0
    %2390 = vdwg.mxu0
    %v2391 = vsel %vm246, %v2336, -inf
    %2392 = vmax.xlane.f32.xlu0 %v2391
    %v2393 = vpop.xlane.xlu0 %2392
    %v2394 = vsel %vm246, %v2386, -inf
    %2395 = vmax.xlane.f32.xlu0 %v2394
    %v2396 = vpop.xlane.xlu0 %2395
    %v2397 = vsub.f32 %v2336, %v2393
    %v2398 = vsub.f32 %v2386, %v2396
    %v2399 = vmul.f32 %v2397, 1.442695
    %v2400 = vpow.pop %v2399
    %v2401 = vmul.f32 %v2398, 1.442695
    %v2402 = vpow.pop %v2401
    %v2403 = vsel %vm246, %v2400, 0.0
    %2404 = vadd.xlane.f32.xlu0 %v2403
    %v2405 = vpop.xlane.xlu0 %2404
    %v2406 = vsel %vm246, %v2402, 0.0
    %2407 = vadd.xlane.f32.xlu0 %v2406
    %v2408 = vpop.xlane.xlu0 %2407
    %v2409 = vrcp.pop %v2405
    %v2410 = vrcp.pop %v2408
    %v2411 = vmul.f32 %v2400, %v2409
    %v2412 = vmul.f32 %v2402, %v2410
    %v2413 = vpack.c.bf16 %v2411, %v2411
    %v2414 = vpack.c.bf16 %v2412, %v2412
    %2415 = vrot.lane.b32.xlu0 %v1635, 104
    %v2416 = vpop.permute.xlu0 %2415
    %v2418 = vsel %vm246, %v2413, 0
    %v2421 = vsel %vm366, %v2416, 0
    %2423 = vmatprep.subr.bf16.mxu0 0
    %2424 = vmatpush1.bf16.msra.mxu0 %v2421
    %2425 = vmatprep.subr.bf16.mxu0 0
    %2426 = vmatpush1.bf16.msra.mxu0 0
    %2427 = vmatprep.subr.bf16.mxu0 0
    %2428 = vmatpush1.bf16.msra.mxu0 0
    %2429 = vmatprep.subr.bf16.mxu0 0
    %2430 = vmatpush1.bf16.msra.mxu0 0
    %2431 = vmatprep.subr.bf16.mxu0 0
    %2432 = vmatpush1.bf16.msra.mxu0 0
    %2433 = vmatprep.subr.bf16.mxu0 0
    %2434 = vmatpush1.bf16.msra.mxu0 0
    %2435 = vmatprep.subr.bf16.mxu0 0
    %2436 = vmatpush1.bf16.msra.mxu0 0
    %2437 = vmatprep.subr.bf16.mxu0 0
    %2438 = vmatpush1.bf16.msra.mxu0 0
    %2439 = vmatprep.subr.bf16.mxu0 0
    %2440 = vmatpush1.bf16.msra.mxu0 0
    %2441 = vmatprep.subr.bf16.mxu0 0
    %2442 = vmatpush1.bf16.msra.mxu0 0
    %2443 = vmatprep.subr.bf16.mxu0 0
    %2444 = vmatpush1.bf16.msra.mxu0 0
    %2445 = vmatprep.subr.bf16.mxu0 0
    %2446 = vmatpush1.bf16.msra.mxu0 0
    %2447 = vmatprep.subr.bf16.mxu0 0
    %2448 = vmatpush1.bf16.msra.mxu0 0
    %2449 = vmatprep.subr.bf16.mxu0 0
    %2450 = vmatpush1.bf16.msra.mxu0 0
    %2451 = vmatprep.subr.bf16.mxu0 0
    %2452 = vmatpush1.bf16.msra.mxu0 0
    %2453 = vmatprep.subr.bf16.mxu0 0
    %2454 = vmatpush1.bf16.msra.mxu0 0
    %2455 = vmatprep.mubr.bf16.mxu0 0
    %2456 = vmatmul.mubr.bf16.gmra.mrb[0].mxu0 %v2418
    %v2457 = vpop.f32.mrb[0].mxu0
    %v2458 = vadd.f32 0.0, %v2457
    %v2459 = vpop.f32.mrb[0].mxu0
    %v2460 = vpop.f32.mrb[0].mxu0
    %v2461 = vpop.f32.mrb[0].mxu0
    %2462 = vdwg.mxu0
    %2463 = vrot.lane.b32.xlu0 %v1636, 104
    %v2464 = vpop.permute.xlu0 %2463
    %v2466 = vsel %vm246, %v2414, 0
    %v2469 = vsel %vm366, %v2464, 0
    %2471 = vmatprep.subr.bf16.mxu0 0
    %2472 = vmatpush1.bf16.msra.mxu0 %v2469
    %2473 = vmatprep.subr.bf16.mxu0 0
    %2474 = vmatpush1.bf16.msra.mxu0 0
    %2475 = vmatprep.subr.bf16.mxu0 0
    %2476 = vmatpush1.bf16.msra.mxu0 0
    %2477 = vmatprep.subr.bf16.mxu0 0
    %2478 = vmatpush1.bf16.msra.mxu0 0
    %2479 = vmatprep.subr.bf16.mxu0 0
    %2480 = vmatpush1.bf16.msra.mxu0 0
    %2481 = vmatprep.subr.bf16.mxu0 0
    %2482 = vmatpush1.bf16.msra.mxu0 0
    %2483 = vmatprep.subr.bf16.mxu0 0
    %2484 = vmatpush1.bf16.msra.mxu0 0
    %2485 = vmatprep.subr.bf16.mxu0 0
    %2486 = vmatpush1.bf16.msra.mxu0 0
    %2487 = vmatprep.subr.bf16.mxu0 0
    %2488 = vmatpush1.bf16.msra.mxu0 0
    %2489 = vmatprep.subr.bf16.mxu0 0
    %2490 = vmatpush1.bf16.msra.mxu0 0
    %2491 = vmatprep.subr.bf16.mxu0 0
    %2492 = vmatpush1.bf16.msra.mxu0 0
    %2493 = vmatprep.subr.bf16.mxu0 0
    %2494 = vmatpush1.bf16.msra.mxu0 0
    %2495 = vmatprep.subr.bf16.mxu0 0
    %2496 = vmatpush1.bf16.msra.mxu0 0
    %2497 = vmatprep.subr.bf16.mxu0 0
    %2498 = vmatpush1.bf16.msra.mxu0 0
    %2499 = vmatprep.subr.bf16.mxu0 0
    %2500 = vmatpush1.bf16.msra.mxu0 0
    %2501 = vmatprep.subr.bf16.mxu0 0
    %2502 = vmatpush1.bf16.msra.mxu0 0
    %2503 = vmatprep.mubr.bf16.mxu0 0
    %2504 = vmatmul.mubr.bf16.gmra.mrb[0].mxu0 %v2466
    %v2505 = vpop.f32.mrb[0].mxu0
    %v2506 = vadd.f32 0.0, %v2505
    %v2507 = vpop.f32.mrb[0].mxu0
    %v2508 = vpop.f32.mrb[0].mxu0
    %v2509 = vpop.f32.mrb[0].mxu0
    %2510 = vdwg.mxu0
    %2513 = vrot.lane.b32.xlu0 %v2017, 8
    %v2514 = vpop.permute.xlu0 %2513
    %2515 = vrot.lane.b32.xlu0 %v2066, 8
    %v2516 = vpop.permute.xlu0 %2515
    %2521 = vrot.lane.b32.xlu0 %v2238, 16
    %v2522 = vpop.permute.xlu0 %2521
    %2523 = vrot.lane.b32.xlu0 %v2286, 16
    %v2524 = vpop.permute.xlu0 %2523
    %2529 = vrot.lane.b32.xlu0 %v2458, 24
    %v2530 = vpop.permute.xlu0 %2529
    %2531 = vrot.lane.b32.xlu0 %v2506, 24
    %v2532 = vpop.permute.xlu0 %2531
    %v2535 = vsel %vm246, %v1794, %v2514
    %v2536 = vsel %vm246, %v1840, %v2516
    %v2537 = vsel %vm1148, %v2535, %v2522
    %v2538 = vsel %vm1148, %v2536, %v2524
    %v2539 = vsel %vm1151, %v2537, %v2530
    %v2540 = vsel %vm1151, %v2538, %v2532
    %v2541 = vpack.c.bf16 %v2540, %v2539
    %s2542 = scalar_lea.vmem [#allocation2], 16
    %v2543 = vld [vmem:[%s2542] sm:$0xf]
    %v2544 = vld [vmem:[%s2542 + $0x4] sm:$0xf]
    %v2545 = vld [vmem:[%s2542 + $0x8] sm:$0xf]
    %v2546 = vld [vmem:[%s2542 + $0xc] sm:$0xf]
    %s2547 = scalar_lea.vmem %s7, 8
    %v2548 = vld [vmem:[%s2547] sm:$0x3f]
    %s2549 = scalar_lea.vmem %s8, 1
    %v2550 = vld [vmem:[%s2549] sm:$0x1]
    %v2551 = vlaneseq
    %v2552 = vshrl.u32 %v2551, 7
    %v2553 = vsub.s32 0, %v2552
    %v2554 = vrot.slane %v2548, %v2553
    %v2559 = vunpack.c.l.b16 %v2543
    %v2560 = vunpack.c.l.b16 %v2544
    %v2561 = vunpack.c.l.b16 %v2545
    %v2562 = vunpack.c.l.b16 %v2546
    %v2563 = vpack.c.b16 %v2560, %v2559
    %v2564 = vpack.c.b16 %v2562, %v2561
    %v2568 = vsel %vm81, %v2541, 0
    %2570 = vmatprep.subr.bf16.mxu0 0
    %2571 = vmatpush1.bf16.msra.mxu0 %v2563
    %2572 = vmatprep.subr.bf16.mxu0 0
    %2573 = vmatpush1.bf16.msra.mxu0 %v2564
    %2574 = vmatprep.subr.bf16.mxu0 0
    %2575 = vmatpush1.bf16.msra.mxu0 0
    %2576 = vmatprep.subr.bf16.mxu0 0
    %2577 = vmatpush1.bf16.msra.mxu0 0
    %2578 = vmatprep.subr.bf16.mxu0 0
    %2579 = vmatpush1.bf16.msra.mxu0 0
    %2580 = vmatprep.subr.bf16.mxu0 0
    %2581 = vmatpush1.bf16.msra.mxu0 0
    %2582 = vmatprep.subr.bf16.mxu0 0
    %2583 = vmatpush1.bf16.msra.mxu0 0
    %2584 = vmatprep.subr.bf16.mxu0 0
    %2585 = vmatpush1.bf16.msra.mxu0 0
    %2586 = vmatprep.subr.bf16.mxu0 0
    %2587 = vmatpush1.bf16.msra.mxu0 0
    %2588 = vmatprep.subr.bf16.mxu0 0
    %2589 = vmatpush1.bf16.msra.mxu0 0
    %2590 = vmatprep.subr.bf16.mxu0 0
    %2591 = vmatpush1.bf16.msra.mxu0 0
    %2592 = vmatprep.subr.bf16.mxu0 0
    %2593 = vmatpush1.bf16.msra.mxu0 0
    %2594 = vmatprep.subr.bf16.mxu0 0
    %2595 = vmatpush1.bf16.msra.mxu0 0
    %2596 = vmatprep.subr.bf16.mxu0 0
    %2597 = vmatpush1.bf16.msra.mxu0 0
    %2598 = vmatprep.subr.bf16.mxu0 0
    %2599 = vmatpush1.bf16.msra.mxu0 0
    %2600 = vmatprep.subr.bf16.mxu0 0
    %2601 = vmatpush1.bf16.msra.mxu0 0
    %2602 = vmatprep.mubr.bf16.mxu0 0
    %2603 = vmatmul.mubr.bf16.gmra.mrb[0].mxu0 %v2568
    %v2604 = vpop.f32.mrb[0].mxu0
    %v2605 = vadd.f32 %v2554, %v2604
    %v2606 = vpop.f32.mrb[0].mxu0
    %v2607 = vpop.f32.mrb[0].mxu0
    %v2608 = vadd.f32 %v2554, %v2607
    %v2609 = vpop.f32.mrb[0].mxu0
    %2610 = vdwg.mxu0
    %v2611 = vadd.f32 %v2605, %v1451
    %v2612 = vadd.f32 %v2608, %v1452
    %v2613 = vsel %vm81, %v2611, 0.0
    %2614 = vadd.xlane.f32.xlu0 %v2613
    %v2615 = vpop.xlane.xlu0 %2614
    %v2616 = vsel %vm81, %v2612, 0.0
    %2617 = vadd.xlane.f32.xlu0 %v2616
    %v2618 = vpop.xlane.xlu0 %2617
    %v2619 = vmul.f32 %v2615, %v1229
    %v2620 = vmul.f32 %v2618, %v1229
    %v2621 = vsub.f32 %v2611, %v2619
    %v2622 = vsub.f32 %v2612, %v2620
    %v2623 = vmul.f32 %v2621, %v2621
    %v2624 = vmul.f32 %v2622, %v2622
    %v2625 = vsel %vm81, %v2623, 0.0
    %2626 = vadd.xlane.f32.xlu0 %v2625
    %v2627 = vpop.xlane.xlu0 %2626
    %v2628 = vsel %vm81, %v2624, 0.0
    %2629 = vadd.xlane.f32.xlu0 %v2628
    %v2630 = vpop.xlane.xlu0 %2629
    %v2631 = vmul.f32 %v2627, %v1229
    %v2632 = vmul.f32 %v2630, %v1229
    %v2633 = vadd.f32 %v2631, 1e-05
    %v2634 = vadd.f32 %v2632, 1e-05
    %v2635 = vrsqrt.pop %v2633
    %v2636 = vrsqrt.pop %v2634
    %v2637 = vmul.f32 %v2621, %v2635
    %v2638 = vmul.f32 %v2622, %v2636
    %v2639 = vlaneseq
    %v2640 = vshrl.u32 %v2639, 7
    %v2641 = vsub.s32 1, %v2640
    %v2642 = vrot.slane %v2548, %v2641
    %v2643 = vmul.f32 %v2637, %v2642
    %v2644 = vmul.f32 %v2638, %v2642
    %v2645 = vlaneseq
    %v2646 = vshrl.u32 %v2645, 7
    %v2647 = vsub.s32 2, %v2646
    %v2648 = vrot.slane %v2548, %v2647
    %v2649 = vadd.f32 %v2643, %v2648
    %v2650 = vadd.f32 %v2644, %v2648
    %v2651 = vpack.c.bf16 %v2650, %v2649
    %s2652 = scalar_lea.vmem [#allocation5], 16
    %v2653 = vld [vmem:[%s2652] sm:$0xf]
    %v2654 = vld [vmem:[%s2652 + $0x4] sm:$0xf]
    %v2655 = vld [vmem:[%s2652 + $0x8] sm:$0xf]
    %v2656 = vld [vmem:[%s2652 + $0xc] sm:$0xf]
    %v2658 = vlaneseq
    %v2659 = vshrl.u32 %v2658, 7
    %v2660 = vsub.s32 0, %v2659
    %v2661 = vrot.slane %v2550, %v2660
    %v2667 = vunpack.c.l.b16 %v2653
    %v2668 = vunpack.c.l.b16 %v2654
    %v2669 = vunpack.c.l.b16 %v2655
    %v2670 = vunpack.c.l.b16 %v2656
    %v2671 = vpack.c.b16 %v2668, %v2667
    %v2672 = vpack.c.b16 %v2670, %v2669
    %v2676 = vsel %vm81, %v2651, 0
    %2678 = vmatprep.subr.bf16.mxu0 0
    %2679 = vmatpush1.bf16.msra.mxu0 %v2671
    %2680 = vmatprep.subr.bf16.mxu0 0
    %2681 = vmatpush1.bf16.msra.mxu0 %v2672
    %2682 = vmatprep.subr.bf16.mxu0 0
    %2683 = vmatpush1.bf16.msra.mxu0 0
    %2684 = vmatprep.subr.bf16.mxu0 0
    %2685 = vmatpush1.bf16.msra.mxu0 0
    %2686 = vmatprep.subr.bf16.mxu0 0
    %2687 = vmatpush1.bf16.msra.mxu0 0
    %2688 = vmatprep.subr.bf16.mxu0 0
    %2689 = vmatpush1.bf16.msra.mxu0 0
    %2690 = vmatprep.subr.bf16.mxu0 0
    %2691 = vmatpush1.bf16.msra.mxu0 0
    %2692 = vmatprep.subr.bf16.mxu0 0
    %2693 = vmatpush1.bf16.msra.mxu0 0
    %2694 = vmatprep.subr.bf16.mxu0 0
    %2695 = vmatpush1.bf16.msra.mxu0 0
    %2696 = vmatprep.subr.bf16.mxu0 0
    %2697 = vmatpush1.bf16.msra.mxu0 0
    %2698 = vmatprep.subr.bf16.mxu0 0
    %2699 = vmatpush1.bf16.msra.mxu0 0
    %2700 = vmatprep.subr.bf16.mxu0 0
    %2701 = vmatpush1.bf16.msra.mxu0 0
    %2702 = vmatprep.subr.bf16.mxu0 0
    %2703 = vmatpush1.bf16.msra.mxu0 0
    %2704 = vmatprep.subr.bf16.mxu0 0
    %2705 = vmatpush1.bf16.msra.mxu0 0
    %2706 = vmatprep.subr.bf16.mxu0 0
    %2707 = vmatpush1.bf16.msra.mxu0 0
    %2708 = vmatprep.subr.bf16.mxu0 0
    %2709 = vmatpush1.bf16.msra.mxu0 0
    %2710 = vmatprep.mubr.bf16.mxu0 0
    %2711 = vmatmul.mubr.bf16.gmra.mrb[0].mxu0 %v2676
    %v2712 = vpop.f32.mrb[0].mxu0
    %v2713 = vadd.f32 %v2661, %v2712
    %v2714 = vpop.f32.mrb[0].mxu0
    %v2715 = vpop.f32.mrb[0].mxu0
    %v2716 = vadd.f32 %v2661, %v2715
    %v2717 = vpop.f32.mrb[0].mxu0
    %2718 = vdwg.mxu0
    %v2719 = vmax.f32 %v2713, 0.0
    %v2720 = vmax.f32 %v2716, 0.0
    %v2721 = vpack.c.bf16 %v2720, %v2719
    %s2722 = scalar_lea.vmem %s6, 32
    %v2723 = vld [vmem:[%s2722] sm:$0xf]
    %v2724 = vld [vmem:[%s2722 + $0x4] sm:$0xf]
    %v2725 = vld [vmem:[%s2722 + $0x8] sm:$0xf]
    %v2726 = vld [vmem:[%s2722 + $0xc] sm:$0xf]
    %v2727 = vld [vmem:[%s2722 + $0x10] sm:$0xf]
    %v2728 = vld [vmem:[%s2722 + $0x14] sm:$0xf]
    %v2729 = vld [vmem:[%s2722 + $0x18] sm:$0xf]
    %v2730 = vld [vmem:[%s2722 + $0x1c] sm:$0xf]
    %v2731 = vlaneseq
    %v2732 = vshrl.u32 %v2731, 7
    %v2733 = vsub.s32 5, %v2732
    %v2734 = vrot.slane %v2548, %v2733
    %v2743 = vunpack.c.l.b16 %v2723
    %v2744 = vunpack.c.l.b16 %v2724
    %v2745 = vunpack.c.l.b16 %v2725
    %v2746 = vunpack.c.l.b16 %v2726
    %v2747 = vunpack.c.l.b16 %v2727
    %v2748 = vunpack.c.l.b16 %v2728
    %v2749 = vunpack.c.l.b16 %v2729
    %v2750 = vunpack.c.l.b16 %v2730
    %v2751 = vpack.c.b16 %v2744, %v2743
    %v2752 = vpack.c.b16 %v2746, %v2745
    %v2753 = vpack.c.b16 %v2748, %v2747
    %v2754 = vpack.c.b16 %v2750, %v2749
    %v2760 = vsel %vm1368, %v2721, 0
    %2762 = vmatprep.subr.bf16.mxu0 0
    %2763 = vmatpush1.bf16.msra.mxu0 %v2751
    %2764 = vmatprep.subr.bf16.mxu0 0
    %2765 = vmatpush1.bf16.msra.mxu0 %v2752
    %2766 = vmatprep.subr.bf16.mxu0 0
    %2767 = vmatpush1.bf16.msra.mxu0 %v2753
    %2768 = vmatprep.subr.bf16.mxu0 0
    %2769 = vmatpush1.bf16.msra.mxu0 %v2754
    %2770 = vmatprep.subr.bf16.mxu0 0
    %2771 = vmatpush1.bf16.msra.mxu0 0
    %2772 = vmatprep.subr.bf16.mxu0 0
    %2773 = vmatpush1.bf16.msra.mxu0 0
    %2774 = vmatprep.subr.bf16.mxu0 0
    %2775 = vmatpush1.bf16.msra.mxu0 0
    %2776 = vmatprep.subr.bf16.mxu0 0
    %2777 = vmatpush1.bf16.msra.mxu0 0
    %2778 = vmatprep.subr.bf16.mxu0 0
    %2779 = vmatpush1.bf16.msra.mxu0 0
    %2780 = vmatprep.subr.bf16.mxu0 0
    %2781 = vmatpush1.bf16.msra.mxu0 0
    %2782 = vmatprep.subr.bf16.mxu0 0
    %2783 = vmatpush1.bf16.msra.mxu0 0
    %2784 = vmatprep.subr.bf16.mxu0 0
    %2785 = vmatpush1.bf16.msra.mxu0 0
    %2786 = vmatprep.subr.bf16.mxu0 0
    %2787 = vmatpush1.bf16.msra.mxu0 0
    %2788 = vmatprep.subr.bf16.mxu0 0
    %2789 = vmatpush1.bf16.msra.mxu0 0
    %2790 = vmatprep.subr.bf16.mxu0 0
    %2791 = vmatpush1.bf16.msra.mxu0 0
    %2792 = vmatprep.subr.bf16.mxu0 0
    %2793 = vmatpush1.bf16.msra.mxu0 0
    %2794 = vmatprep.mubr.bf16.mxu0 0
    %2795 = vmatmul.mubr.bf16.gmra.mrb[0].mxu0 %v2760
    %v2796 = vpop.f32.mrb[0].mxu0
    %v2797 = vadd.f32 %v2734, %v2796
    %v2798 = vpop.f32.mrb[0].mxu0
    %v2799 = vpop.f32.mrb[0].mxu0
    %v2800 = vadd.f32 %v2734, %v2799
    %v2801 = vpop.f32.mrb[0].mxu0
    %2802 = vdwg.mxu0
    %v2803 = vadd.f32 %v2797, %v2649
    %v2804 = vadd.f32 %v2800, %v2650
    %v2805 = vsel %vm81, %v2803, 0.0
    %2806 = vadd.xlane.f32.xlu0 %v2805
    %v2807 = vpop.xlane.xlu0 %2806
    %v2808 = vsel %vm81, %v2804, 0.0
    %2809 = vadd.xlane.f32.xlu0 %v2808
    %v2810 = vpop.xlane.xlu0 %2809
    %v2811 = vmul.f32 %v2807, %v1229
    %v2812 = vmul.f32 %v2810, %v1229
    %v2813 = vsub.f32 %v2803, %v2811
    %v2814 = vsub.f32 %v2804, %v2812
    %v2815 = vmul.f32 %v2813, %v2813
    %v2816 = vmul.f32 %v2814, %v2814
    %v2817 = vsel %vm81, %v2815, 0.0
    %2818 = vadd.xlane.f32.xlu0 %v2817
    %v2819 = vpop.xlane.xlu0 %2818
    %v2820 = vsel %vm81, %v2816, 0.0
    %2821 = vadd.xlane.f32.xlu0 %v2820
    %v2822 = vpop.xlane.xlu0 %2821
    %v2823 = vmul.f32 %v2819, %v1229
    %v2824 = vmul.f32 %v2822, %v1229
    %v2825 = vadd.f32 %v2823, 1e-05
    %v2826 = vadd.f32 %v2824, 1e-05
    %v2827 = vrsqrt.pop %v2825
    %v2828 = vrsqrt.pop %v2826
    %v2829 = vmul.f32 %v2813, %v2827
    %v2830 = vmul.f32 %v2814, %v2828
    %v2831 = vlaneseq
    %v2832 = vshrl.u32 %v2831, 7
    %v2833 = vsub.s32 3, %v2832
    %v2834 = vrot.slane %v2548, %v2833
    %v2835 = vmul.f32 %v2829, %v2834
    %v2836 = vmul.f32 %v2830, %v2834
    %v2837 = vlaneseq
    %v2838 = vshrl.u32 %v2837, 7
    %v2839 = vsub.s32 4, %v2838
    %v2840 = vrot.slane %v2548, %v2839
    %v2841 = vadd.f32 %v2835, %v2840
    %v2842 = vadd.f32 %v2836, %v2840
    %2843 = vst.msk [vmem:[#allocation7] sm:$0xff] %vm81, %v2841
    %2844 = vst.msk [vmem:[#allocation7 + $0x8] sm:$0xff] %vm81, %v2842
    // Predicated region
    $region46: #{tpu_custom_call.1} parent=1 // pred_check
      _
    $region47: #{tpu_custom_call.1} parent=1 // pred_check_branch
      %2846 = sbr.rel (0) target = $region49
    $region48: #{tpu_custom_call.1} parent=1 // pred_region
      %s2848 = ssub.s32 256, 256
      %2849 = vsyncadd [#allocation4], %s2848
      %s2850 = sshll.u32 [#allocation7], 4
      %s2851 = int_to_ptr.vmem [resolvable:$true] %s2850
      %2856 = dma.vmem_to_hbm [thread:$0]  %s2851, 256, %s9, [#allocation4], 128, 128, 8
    $region49: #{tpu_custom_call.1} parent=1 // pred_fallthru
      _
    // Predicated region
    $region50: #{tpu_custom_call.1} parent=1 // pred_check
      _
    $region51: #{tpu_custom_call.1} parent=1 // pred_check_branch
      %2858 = sbr.rel (0) target = $region53
    $region52: #{tpu_custom_call.1} parent=1 // pred_region
      %2859 = dma.done [#allocation4], 256
    $region53: #{tpu_custom_call.1} parent=1 // pred_fallthru
      _
    %2860 = vsyncpa [#allocation3], 1
    %2861 = vsyncpa [#allocation6], 1
    %2862 = vsyncpa [#allocation4], 1

</llo_original>
